<compile_context>
chip_gen: v7x
topology: tpu7x:2x2x1
jax: 0.10.0
libtpu: 0.0.40
codegen_flags: <defaults>
</compile_context>

<pallas_src>
import jax
import jax.numpy as jnp
from jax import lax
from jax.experimental import pallas as pl
from jax.experimental.pallas import tpu as pltpu


def _round_up(x, m):
    return ((x + m - 1) // m) * m


def _lstm_kernel(x_ref, len_ref, wih_ref, whh_ref, b_ref,
                 out_ref, hT_ref, cT_ref,
                 px_scr, h_scr, c_scr):
    T, B, Hp = out_ref.shape

    # ---- Phase 0: hoisted, batched input projection (time-independent). ----
    # One (T*B, D_in) @ (D_in, 4*Hp) matmul; bias folded in exactly once.
    px_scr[...] = (
        jnp.dot(x_ref[...], wih_ref[...], preferred_element_type=jnp.float32)
        + b_ref[...]
    )

    h_scr[...] = jnp.zeros_like(h_scr)
    c_scr[...] = jnp.zeros_like(c_scr)

    lens = len_ref[...]                                   # (B, 1) int32

    # ---- Phase 1: serial recurrence over time, fully unrolled in-kernel. ----
    def step(t, carry):
        row0 = pl.multiple_of(t * B, B)
        px_t = px_scr[pl.ds(row0, B), :]                  # (B, 4*Hp)
        pre = px_t + jnp.dot(h_scr[...].astype(whh_ref.dtype), whh_ref[...],
                             preferred_element_type=jnp.float32)

        # Lane-dense (Hp = multiple of 128) gate slices -> full-width EUP ops.
        i = jax.nn.sigmoid(pre[:, 0 * Hp:1 * Hp])
        f = jax.nn.sigmoid(pre[:, 1 * Hp:2 * Hp])
        o = jax.nn.sigmoid(pre[:, 2 * Hp:3 * Hp])
        g = jnp.tanh(pre[:, 3 * Hp:4 * Hp])

        c_new = c_scr[...] * f + i * g
        h_new = o * jnp.tanh(c_new)

        mask = t < lens                                   # (B, 1) -> broadcasts over Hp
        h_scr[...] = jnp.where(mask, h_new, h_scr[...])
        c_scr[...] = jnp.where(mask, c_new, c_scr[...])
        out_ref[t] = jnp.where(mask, h_new, 0.0).astype(out_ref.dtype)
        return carry

    lax.fori_loop(0, T, step, 0, unroll=True)

    hT_ref[...] = h_scr[...].astype(hT_ref.dtype)
    cT_ref[...] = c_scr[...].astype(cT_ref.dtype)


def lstm_pallas(x_btd, seq_lengths, w_ih, w_hh, b_ih, b_hh,
                *, matmul_dtype=jnp.float32):
    """x_btd: [B, T, D_in] float32, seq_lengths: [B] int32 (sorted descending).
    w_ih: [D_in, 4H], w_hh: [H, 4H], b_ih/b_hh: [4H]  (gate order i|f|o|g).
    Returns (outputs [B, T, H], final_h [B, H], final_c [B, H])."""
    B, T, D_in = x_btd.shape
    H = w_hh.shape[0]
    Hp = _round_up(H, 128)        # lane-dense gate/hidden width

    # Time-major and flattened so the input projection is one batched matmul.
    x_flat = (jnp.transpose(x_btd, (1, 0, 2))
              .reshape(T * B, D_in)
              .astype(matmul_dtype))

    def pad_gate_cols(w):
        # (..., 4H) -> (..., 4*Hp) with zeros in the padded part of each gate.
        lead = w.shape[:-1]
        wg = w.reshape(*lead, 4, H)
        out = jnp.zeros((*lead, 4, Hp), jnp.float32).at[..., :H].set(wg)
        return out.reshape(*lead, 4 * Hp)

    w_ih_p = pad_gate_cols(w_ih.astype(jnp.float32))                  # (D_in, 4Hp)
    w_hh_p = jnp.zeros((Hp, 4 * Hp), jnp.float32).at[:H, :].set(
        pad_gate_cols(w_hh.astype(jnp.float32)))                      # (Hp, 4Hp)
    bias_p = pad_gate_cols((b_ih + b_hh).astype(jnp.float32)).reshape(1, 4 * Hp)

    lens = seq_lengths.astype(jnp.int32).reshape(B, 1)

    out_tbh, h_final, c_final = pl.pallas_call(
        _lstm_kernel,
        out_shape=(
            jax.ShapeDtypeStruct((T, B, Hp), jnp.float32),
            jax.ShapeDtypeStruct((B, Hp), jnp.float32),
            jax.ShapeDtypeStruct((B, Hp), jnp.float32),
        ),
        grid_spec=pltpu.PrefetchScalarGridSpec(
            num_scalar_prefetch=0,
            grid=(1,),                                     # whole recurrence in one invocation
            in_specs=[
                pl.BlockSpec((T * B, D_in), lambda i: (0, 0)),   # x (flattened, resident)
                pl.BlockSpec((B, 1), lambda i: (0, 0)),          # lengths
                pl.BlockSpec((D_in, 4 * Hp), lambda i: (0, 0)),  # W_ih
                pl.BlockSpec((Hp, 4 * Hp), lambda i: (0, 0)),    # W_hh
                pl.BlockSpec((1, 4 * Hp), lambda i: (0, 0)),     # folded bias
            ],
            out_specs=[
                pl.BlockSpec((T, B, Hp), lambda i: (0, 0, 0)),   # padded outputs
                pl.BlockSpec((B, Hp), lambda i: (0, 0)),         # final h
                pl.BlockSpec((B, Hp), lambda i: (0, 0)),         # final c
            ],
            scratch_shapes=[
                pltpu.VMEM((T * B, 4 * Hp), jnp.float32),        # hoisted x-projection
                pltpu.VMEM((B, Hp), jnp.float32),                # h carry
                pltpu.VMEM((B, Hp), jnp.float32),                # c carry
            ],
        ),
        compiler_params=pltpu.CompilerParams(
            # Single serial grid step; at production B, add a leading
            # "parallel" batch-tile axis (v7x: shards across 2 TensorCores) and
            # size T-chunks / weight residency against 64 MiB VMEM there.
            dimension_semantics=("arbitrary",),
        ),
    )(x_flat, lens,
      w_ih_p.astype(matmul_dtype), w_hh_p.astype(matmul_dtype), bias_p)

    out_bth = jnp.transpose(out_tbh, (1, 0, 2))[:, :, :H]
    return out_bth, h_final[:, :H], c_final[:, :H]


def lstm_ref(x_btd, seq_lengths, w_ih, w_hh, b_ih, b_hh):
    """Pure-JAX reference mirroring the PyTorch loop (lengths sorted desc)."""
    B, T, _ = x_btd.shape
    H = w_hh.shape[0]
    b = (b_ih + b_hh)[None, :]
    h = jnp.zeros((B, H), jnp.float32)
    c = jnp.zeros((B, H), jnp.float32)
    outs = []
    for t in range(T):
        pre = x_btd[:, t] @ w_ih + h @ w_hh + b
        i, f, o, g = jnp.split(pre, 4, axis=-1)
        c_new = c * jax.nn.sigmoid(f) + jax.nn.sigmoid(i) * jnp.tanh(g)
        h_new = jax.nn.sigmoid(o) * jnp.tanh(c_new)
        m = (t < seq_lengths)[:, None]
        h = jnp.where(m, h_new, h)
        c = jnp.where(m, c_new, c)
        outs.append(jnp.where(m, h_new, 0.0))
    return jnp.stack(outs, axis=1), h, c


if __name__ == "__main__":
    # Small shapes implied by the module: batch=8, seq=8, input_size=16, hidden=32.
    B, T, D_IN, H = 8, 8, 16, 32

    key = jax.random.PRNGKey(0)
    kx, k1, k2, k3, k4 = jax.random.split(key, 5)

    x = jax.random.normal(kx, (B, T, D_IN), dtype=jnp.float32)
    # Descending lengths, as required by pack_padded_sequence(enforce_sorted=True).
    seq_lengths = jnp.array([8, 8, 7, 6, 5, 4, 3, 2], dtype=jnp.int32)

    # Deterministic uniform(-0.08, 0.08) init, matching reset_parameters().
    # (Weights stored pre-transposed: [in, 4H] instead of torch's [4H, in].)
    w_ih = jax.random.uniform(k1, (D_IN, 4 * H), minval=-0.08, maxval=0.08)
    w_hh = jax.random.uniform(k2, (H, 4 * H), minval=-0.08, maxval=0.08)
    b_ih = jax.random.uniform(k3, (4 * H,), minval=-0.08, maxval=0.08)
    b_hh = jax.random.uniform(k4, (4 * H,), minval=-0.08, maxval=0.08)

    out, h_T, c_T = jax.block_until_ready(
        lstm_pallas(x, seq_lengths, w_ih, w_hh, b_ih, b_hh))

    out_r, h_r, c_r = lstm_ref(x, seq_lengths, w_ih, w_hh, b_ih, b_hh)
    assert jnp.allclose(out, out_r, atol=1e-5), "outputs mismatch"
    assert jnp.allclose(h_T, h_r, atol=1e-5), "final h mismatch"
    assert jnp.allclose(c_T, c_r, atol=1e-5), "final c mismatch"

    print("KERNEL_OK")
</pallas_src>

<mosaic_0001>
module attributes {stable_mosaic.version = 11 : i64} {
  func.func @_lstm_kernel(%arg0: i32, %arg1: memref<64x16xf32, #tpu.memory_space<vmem>>, %arg2: memref<8x1xi32, #tpu.memory_space<vmem>>, %arg3: memref<16x512xf32, #tpu.memory_space<vmem>>, %arg4: memref<128x512xf32, #tpu.memory_space<vmem>>, %arg5: memref<1x512xf32, #tpu.memory_space<vmem>>, %arg6: memref<8x8x128xf32, #tpu.memory_space<vmem>>, %arg7: memref<8x128xf32, #tpu.memory_space<vmem>>, %arg8: memref<8x128xf32, #tpu.memory_space<vmem>>, %arg9: memref<64x512xf32, #tpu.memory_space<vmem>>, %arg10: memref<8x128xf32, #tpu.memory_space<vmem>>, %arg11: memref<8x128xf32, #tpu.memory_space<vmem>>) attributes {dimension_semantics = [#tpu.dimension_semantics<arbitrary>], iteration_bounds = array<i64: 1>, scalar_prefetch = 0 : i64, scratch_operands = 3 : i64, tpu.core_type = #tpu.core_type<tc>, window_params = [{pipeline_mode = #tpu.pipeline_mode<synchronous>, transform_indices = @transform_0, window_bounds = array<i64: 64, 16>}, {pipeline_mode = #tpu.pipeline_mode<synchronous>, transform_indices = @transform_1, window_bounds = array<i64: 8, 1>}, {pipeline_mode = #tpu.pipeline_mode<synchronous>, transform_indices = @transform_2, window_bounds = array<i64: 16, 512>}, {pipeline_mode = #tpu.pipeline_mode<synchronous>, transform_indices = @transform_3, window_bounds = array<i64: 128, 512>}, {pipeline_mode = #tpu.pipeline_mode<synchronous>, transform_indices = @transform_4, window_bounds = array<i64: 1, 512>}, {pipeline_mode = #tpu.pipeline_mode<synchronous>, transform_indices = @transform_5, window_bounds = array<i64: 8, 8, 128>}, {pipeline_mode = #tpu.pipeline_mode<synchronous>, transform_indices = @transform_6, window_bounds = array<i64: 8, 128>}, {pipeline_mode = #tpu.pipeline_mode<synchronous>, transform_indices = @transform_7, window_bounds = array<i64: 8, 128>}]} {
    %c0 = arith.constant 0 : index
    %c0_0 = arith.constant 0 : index
    %0 = vector.load %arg1[%c0, %c0_0] : memref<64x16xf32, #tpu.memory_space<vmem>>, vector<64x16xf32>
    %c0_1 = arith.constant 0 : index
    %c0_2 = arith.constant 0 : index
    %1 = vector.load %arg3[%c0_1, %c0_2] : memref<16x512xf32, #tpu.memory_space<vmem>>, vector<16x512xf32>
    %cst = arith.constant dense<0.000000e+00> : vector<64x512xf32>
    %2 = tpu.matmul %0, %1, %cst {dimension_numbers = #tpu.dot_dimension_numbers<[1], [0], [0], [1], [0, 0, 1, 1], [], []>} : vector<64x16xf32>, vector<16x512xf32>, vector<64x512xf32> -> vector<64x512xf32>
    %c0_3 = arith.constant 0 : index
    %c0_4 = arith.constant 0 : index
    %3 = vector.load %arg5[%c0_3, %c0_4] : memref<1x512xf32, #tpu.memory_space<vmem>>, vector<1x512xf32>
    %4 = vector.broadcast %3 : vector<1x512xf32> to vector<64x512xf32>
    %5 = arith.addf %2, %4 : vector<64x512xf32>
    %c0_5 = arith.constant 0 : index
    %c0_6 = arith.constant 0 : index
    %6 = vector.load %arg9[%c0_5, %c0_6] : memref<64x512xf32, #tpu.memory_space<vmem>>, vector<64x512xf32>
    tpu.vector_store %arg9[%c0_5, %c0_6], %5 {strides = array<i32>} : memref<64x512xf32, #tpu.memory_space<vmem>>, vector<64x512xf32>,
    %cst_7 = arith.constant 0.000000e+00 : f32
    %7 = vector.broadcast %cst_7 : f32 to vector<8x128xf32>
    %c0_8 = arith.constant 0 : index
    %c0_9 = arith.constant 0 : index
    %8 = vector.load %arg10[%c0_8, %c0_9] : memref<8x128xf32, #tpu.memory_space<vmem>>, vector<8x128xf32>
    tpu.vector_store %arg10[%c0_8, %c0_9], %7 {strides = array<i32>} : memref<8x128xf32, #tpu.memory_space<vmem>>, vector<8x128xf32>,
    %cst_10 = arith.constant 0.000000e+00 : f32
    %9 = vector.broadcast %cst_10 : f32 to vector<8x128xf32>
    %c0_11 = arith.constant 0 : index
    %c0_12 = arith.constant 0 : index
    %10 = vector.load %arg11[%c0_11, %c0_12] : memref<8x128xf32, #tpu.memory_space<vmem>>, vector<8x128xf32>
    tpu.vector_store %arg11[%c0_11, %c0_12], %9 {strides = array<i32>} : memref<8x128xf32, #tpu.memory_space<vmem>>, vector<8x128xf32>,
    %c0_13 = arith.constant 0 : index
    %c0_14 = arith.constant 0 : index
    %11 = vector.load %arg2[%c0_13, %c0_14] : memref<8x1xi32, #tpu.memory_space<vmem>>, vector<8x1xi32>
    %c0_i32 = arith.constant 0 : i32
    %c8_i32 = arith.constant 8 : i32
    %12 = arith.muli %c0_i32, %c8_i32 : i32
    %13 = tpu.assume_multiple %12, 8 : i32
    %14 = arith.index_cast %13 : i32 to index
    %c0_15 = arith.constant 0 : index
    %15 = vector.load %arg9[%14, %c0_15] : memref<64x512xf32, #tpu.memory_space<vmem>>, vector<8x512xf32>
    %c0_16 = arith.constant 0 : index
    %c0_17 = arith.constant 0 : index
    %16 = vector.load %arg10[%c0_16, %c0_17] : memref<8x128xf32, #tpu.memory_space<vmem>>, vector<8x128xf32>
    %c0_18 = arith.constant 0 : index
    %c0_19 = arith.constant 0 : index
    %17 = vector.load %arg4[%c0_18, %c0_19] : memref<128x512xf32, #tpu.memory_space<vmem>>, vector<128x512xf32>
    %cst_20 = arith.constant dense<0.000000e+00> : vector<8x512xf32>
    %18 = tpu.matmul %16, %17, %cst_20 {dimension_numbers = #tpu.dot_dimension_numbers<[1], [0], [0], [1], [0, 0, 1, 1], [], []>} : vector<8x128xf32>, vector<128x512xf32>, vector<8x512xf32> -> vector<8x512xf32>
    %19 = arith.addf %15, %18 : vector<8x512xf32>
    %20 = vector.extract_strided_slice %19 {offsets = [0, 0], sizes = [8, 128], strides = [1, 1]} : vector<8x512xf32> to vector<8x128xf32>
    %21 = arith.negf %20 : vector<8x128xf32>
    %22 = math.exp %21 : vector<8x128xf32>
    %cst_21 = arith.constant 1.000000e+00 : f32
    %23 = vector.broadcast %cst_21 : f32 to vector<8x128xf32>
    %24 = arith.addf %23, %22 : vector<8x128xf32>
    %25 = arith.divf %23, %24 : vector<8x128xf32>
    %26 = vector.extract_strided_slice %19 {offsets = [0, 128], sizes = [8, 128], strides = [1, 1]} : vector<8x512xf32> to vector<8x128xf32>
    %27 = arith.negf %26 : vector<8x128xf32>
    %28 = math.exp %27 : vector<8x128xf32>
    %cst_22 = arith.constant 1.000000e+00 : f32
    %29 = vector.broadcast %cst_22 : f32 to vector<8x128xf32>
    %30 = arith.addf %29, %28 : vector<8x128xf32>
    %31 = arith.divf %29, %30 : vector<8x128xf32>
    %32 = vector.extract_strided_slice %19 {offsets = [0, 256], sizes = [8, 128], strides = [1, 1]} : vector<8x512xf32> to vector<8x128xf32>
    %33 = arith.negf %32 : vector<8x128xf32>
    %34 = math.exp %33 : vector<8x128xf32>
    %cst_23 = arith.constant 1.000000e+00 : f32
    %35 = vector.broadcast %cst_23 : f32 to vector<8x128xf32>
    %36 = arith.addf %35, %34 : vector<8x128xf32>
    %37 = arith.divf %35, %36 : vector<8x128xf32>
    %38 = vector.extract_strided_slice %19 {offsets = [0, 384], sizes = [8, 128], strides = [1, 1]} : vector<8x512xf32> to vector<8x128xf32>
    %39 = math.tanh %38 : vector<8x128xf32>
    %c0_24 = arith.constant 0 : index
    %c0_25 = arith.constant 0 : index
    %40 = vector.load %arg11[%c0_24, %c0_25] : memref<8x128xf32, #tpu.memory_space<vmem>>, vector<8x128xf32>
    %41 = arith.mulf %40, %31 : vector<8x128xf32>
    %42 = arith.mulf %25, %39 : vector<8x128xf32>
    %43 = arith.addf %41, %42 : vector<8x128xf32>
    %44 = math.tanh %43 : vector<8x128xf32>
    %45 = arith.mulf %37, %44 : vector<8x128xf32>
    %46 = vector.broadcast %c0_i32 : i32 to vector<8x1xi32>
    %47 = arith.cmpi slt, %46, %11 : vector<8x1xi32>
    %c0_26 = arith.constant 0 : index
    %c0_27 = arith.constant 0 : index
    %48 = vector.load %arg10[%c0_26, %c0_27] : memref<8x128xf32, #tpu.memory_space<vmem>>, vector<8x128xf32>
    %49 = vector.shape_cast %47 : vector<8x1xi1> to vector<8x1xi1>
    %50 = vector.broadcast %49 : vector<8x1xi1> to vector<8x128xi1>
    %51 = arith.select %50, %45, %48 : vector<8x128xi1>, vector<8x128xf32>
    %c0_28 = arith.constant 0 : index
    %c0_29 = arith.constant 0 : index
    %52 = vector.load %arg10[%c0_28, %c0_29] : memref<8x128xf32, #tpu.memory_space<vmem>>, vector<8x128xf32>
    tpu.vector_store %arg10[%c0_28, %c0_29], %51 {strides = array<i32>} : memref<8x128xf32, #tpu.memory_space<vmem>>, vector<8x128xf32>,
    %c0_30 = arith.constant 0 : index
    %c0_31 = arith.constant 0 : index
    %53 = vector.load %arg11[%c0_30, %c0_31] : memref<8x128xf32, #tpu.memory_space<vmem>>, vector<8x128xf32>
    %54 = vector.shape_cast %47 : vector<8x1xi1> to vector<8x1xi1>
    %55 = vector.broadcast %54 : vector<8x1xi1> to vector<8x128xi1>
    %56 = arith.select %55, %43, %53 : vector<8x128xi1>, vector<8x128xf32>
    %c0_32 = arith.constant 0 : index
    %c0_33 = arith.constant 0 : index
    %57 = vector.load %arg11[%c0_32, %c0_33] : memref<8x128xf32, #tpu.memory_space<vmem>>, vector<8x128xf32>
    tpu.vector_store %arg11[%c0_32, %c0_33], %56 {strides = array<i32>} : memref<8x128xf32, #tpu.memory_space<vmem>>, vector<8x128xf32>,
    %cst_34 = arith.constant 0.000000e+00 : f32
    %58 = vector.shape_cast %47 : vector<8x1xi1> to vector<8x1xi1>
    %59 = vector.broadcast %58 : vector<8x1xi1> to vector<8x128xi1>
    %60 = vector.broadcast %cst_34 : f32 to vector<8x128xf32>
    %61 = arith.select %59, %45, %60 : vector<8x128xi1>, vector<8x128xf32>
    %62 = arith.index_cast %c0_i32 : i32 to index
    %c0_35 = arith.constant 0 : index
    %c0_36 = arith.constant 0 : index
    %63 = vector.load %arg6[%62, %c0_35, %c0_36] : memref<8x8x128xf32, #tpu.memory_space<vmem>>, vector<1x8x128xf32>
    %64 = vector.shape_cast %63 : vector<1x8x128xf32> to vector<8x128xf32>
    %65 = vector.shape_cast %61 : vector<8x128xf32> to vector<1x8x128xf32>
    tpu.vector_store %arg6[%62, %c0_35, %c0_36], %65 {strides = array<i32>} : memref<8x8x128xf32, #tpu.memory_space<vmem>>, vector<1x8x128xf32>,
    %c1_i32 = arith.constant 1 : i32
    %c8_i32_37 = arith.constant 8 : i32
    %66 = arith.muli %c1_i32, %c8_i32_37 : i32
    %67 = tpu.assume_multiple %66, 8 : i32
    %68 = arith.index_cast %67 : i32 to index
    %c0_38 = arith.constant 0 : index
    %69 = vector.load %arg9[%68, %c0_38] : memref<64x512xf32, #tpu.memory_space<vmem>>, vector<8x512xf32>
    %c0_39 = arith.constant 0 : index
    %c0_40 = arith.constant 0 : index
    %70 = vector.load %arg10[%c0_39, %c0_40] : memref<8x128xf32, #tpu.memory_space<vmem>>, vector<8x128xf32>
    %c0_41 = arith.constant 0 : index
    %c0_42 = arith.constant 0 : index
    %71 = vector.load %arg4[%c0_41, %c0_42] : memref<128x512xf32, #tpu.memory_space<vmem>>, vector<128x512xf32>
    %cst_43 = arith.constant dense<0.000000e+00> : vector<8x512xf32>
    %72 = tpu.matmul %70, %71, %cst_43 {dimension_numbers = #tpu.dot_dimension_numbers<[1], [0], [0], [1], [0, 0, 1, 1], [], []>} : vector<8x128xf32>, vector<128x512xf32>, vector<8x512xf32> -> vector<8x512xf32>
    %73 = arith.addf %69, %72 : vector<8x512xf32>
    %74 = vector.extract_strided_slice %73 {offsets = [0, 0], sizes = [8, 128], strides = [1, 1]} : vector<8x512xf32> to vector<8x128xf32>
    %75 = arith.negf %74 : vector<8x128xf32>
    %76 = math.exp %75 : vector<8x128xf32>
    %cst_44 = arith.constant 1.000000e+00 : f32
    %77 = vector.broadcast %cst_44 : f32 to vector<8x128xf32>
    %78 = arith.addf %77, %76 : vector<8x128xf32>
    %79 = arith.divf %77, %78 : vector<8x128xf32>
    %80 = vector.extract_strided_slice %73 {offsets = [0, 128], sizes = [8, 128], strides = [1, 1]} : vector<8x512xf32> to vector<8x128xf32>
    %81 = arith.negf %80 : vector<8x128xf32>
    %82 = math.exp %81 : vector<8x128xf32>
    %cst_45 = arith.constant 1.000000e+00 : f32
    %83 = vector.broadcast %cst_45 : f32 to vector<8x128xf32>
    %84 = arith.addf %83, %82 : vector<8x128xf32>
    %85 = arith.divf %83, %84 : vector<8x128xf32>
    %86 = vector.extract_strided_slice %73 {offsets = [0, 256], sizes = [8, 128], strides = [1, 1]} : vector<8x512xf32> to vector<8x128xf32>
    %87 = arith.negf %86 : vector<8x128xf32>
    %88 = math.exp %87 : vector<8x128xf32>
    %cst_46 = arith.constant 1.000000e+00 : f32
    %89 = vector.broadcast %cst_46 : f32 to vector<8x128xf32>
    %90 = arith.addf %89, %88 : vector<8x128xf32>
    %91 = arith.divf %89, %90 : vector<8x128xf32>
    %92 = vector.extract_strided_slice %73 {offsets = [0, 384], sizes = [8, 128], strides = [1, 1]} : vector<8x512xf32> to vector<8x128xf32>
    %93 = math.tanh %92 : vector<8x128xf32>
    %c0_47 = arith.constant 0 : index
    %c0_48 = arith.constant 0 : index
    %94 = vector.load %arg11[%c0_47, %c0_48] : memref<8x128xf32, #tpu.memory_space<vmem>>, vector<8x128xf32>
    %95 = arith.mulf %94, %85 : vector<8x128xf32>
    %96 = arith.mulf %79, %93 : vector<8x128xf32>
    %97 = arith.addf %95, %96 : vector<8x128xf32>
    %98 = math.tanh %97 : vector<8x128xf32>
    %99 = arith.mulf %91, %98 : vector<8x128xf32>
    %100 = vector.broadcast %c1_i32 : i32 to vector<8x1xi32>
    %101 = arith.cmpi slt, %100, %11 : vector<8x1xi32>
    %c0_49 = arith.constant 0 : index
    %c0_50 = arith.constant 0 : index
    %102 = vector.load %arg10[%c0_49, %c0_50] : memref<8x128xf32, #tpu.memory_space<vmem>>, vector<8x128xf32>
    %103 = vector.shape_cast %101 : vector<8x1xi1> to vector<8x1xi1>
    %104 = vector.broadcast %103 : vector<8x1xi1> to vector<8x128xi1>
    %105 = arith.select %104, %99, %102 : vector<8x128xi1>, vector<8x128xf32>
    %c0_51 = arith.constant 0 : index
    %c0_52 = arith.constant 0 : index
    %106 = vector.load %arg10[%c0_51, %c0_52] : memref<8x128xf32, #tpu.memory_space<vmem>>, vector<8x128xf32>
    tpu.vector_store %arg10[%c0_51, %c0_52], %105 {strides = array<i32>} : memref<8x128xf32, #tpu.memory_space<vmem>>, vector<8x128xf32>,
    %c0_53 = arith.constant 0 : index
    %c0_54 = arith.constant 0 : index
    %107 = vector.load %arg11[%c0_53, %c0_54] : memref<8x128xf32, #tpu.memory_space<vmem>>, vector<8x128xf32>
    %108 = vector.shape_cast %101 : vector<8x1xi1> to vector<8x1xi1>
    %109 = vector.broadcast %108 : vector<8x1xi1> to vector<8x128xi1>
    %110 = arith.select %109, %97, %107 : vector<8x128xi1>, vector<8x128xf32>
    %c0_55 = arith.constant 0 : index
    %c0_56 = arith.constant 0 : index
    %111 = vector.load %arg11[%c0_55, %c0_56] : memref<8x128xf32, #tpu.memory_space<vmem>>, vector<8x128xf32>
    tpu.vector_store %arg11[%c0_55, %c0_56], %110 {strides = array<i32>} : memref<8x128xf32, #tpu.memory_space<vmem>>, vector<8x128xf32>,
    %cst_57 = arith.constant 0.000000e+00 : f32
    %112 = vector.shape_cast %101 : vector<8x1xi1> to vector<8x1xi1>
    %113 = vector.broadcast %112 : vector<8x1xi1> to vector<8x128xi1>
    %114 = vector.broadcast %cst_57 : f32 to vector<8x128xf32>
    %115 = arith.select %113, %99, %114 : vector<8x128xi1>, vector<8x128xf32>
    %116 = arith.index_cast %c1_i32 : i32 to index
    %c0_58 = arith.constant 0 : index
    %c0_59 = arith.constant 0 : index
    %117 = vector.load %arg6[%116, %c0_58, %c0_59] : memref<8x8x128xf32, #tpu.memory_space<vmem>>, vector<1x8x128xf32>
    %118 = vector.shape_cast %117 : vector<1x8x128xf32> to vector<8x128xf32>
    %119 = vector.shape_cast %115 : vector<8x128xf32> to vector<1x8x128xf32>
    tpu.vector_store %arg6[%116, %c0_58, %c0_59], %119 {strides = array<i32>} : memref<8x8x128xf32, #tpu.memory_space<vmem>>, vector<1x8x128xf32>,
    %c2_i32 = arith.constant 2 : i32
    %c8_i32_60 = arith.constant 8 : i32
    %120 = arith.muli %c2_i32, %c8_i32_60 : i32
    %121 = tpu.assume_multiple %120, 8 : i32
    %122 = arith.index_cast %121 : i32 to index
    %c0_61 = arith.constant 0 : index
    %123 = vector.load %arg9[%122, %c0_61] : memref<64x512xf32, #tpu.memory_space<vmem>>, vector<8x512xf32>
    %c0_62 = arith.constant 0 : index
    %c0_63 = arith.constant 0 : index
    %124 = vector.load %arg10[%c0_62, %c0_63] : memref<8x128xf32, #tpu.memory_space<vmem>>, vector<8x128xf32>
    %c0_64 = arith.constant 0 : index
    %c0_65 = arith.constant 0 : index
    %125 = vector.load %arg4[%c0_64, %c0_65] : memref<128x512xf32, #tpu.memory_space<vmem>>, vector<128x512xf32>
    %cst_66 = arith.constant dense<0.000000e+00> : vector<8x512xf32>
    %126 = tpu.matmul %124, %125, %cst_66 {dimension_numbers = #tpu.dot_dimension_numbers<[1], [0], [0], [1], [0, 0, 1, 1], [], []>} : vector<8x128xf32>, vector<128x512xf32>, vector<8x512xf32> -> vector<8x512xf32>
    %127 = arith.addf %123, %126 : vector<8x512xf32>
    %128 = vector.extract_strided_slice %127 {offsets = [0, 0], sizes = [8, 128], strides = [1, 1]} : vector<8x512xf32> to vector<8x128xf32>
    %129 = arith.negf %128 : vector<8x128xf32>
    %130 = math.exp %129 : vector<8x128xf32>
    %cst_67 = arith.constant 1.000000e+00 : f32
    %131 = vector.broadcast %cst_67 : f32 to vector<8x128xf32>
    %132 = arith.addf %131, %130 : vector<8x128xf32>
    %133 = arith.divf %131, %132 : vector<8x128xf32>
    %134 = vector.extract_strided_slice %127 {offsets = [0, 128], sizes = [8, 128], strides = [1, 1]} : vector<8x512xf32> to vector<8x128xf32>
    %135 = arith.negf %134 : vector<8x128xf32>
    %136 = math.exp %135 : vector<8x128xf32>
    %cst_68 = arith.constant 1.000000e+00 : f32
    %137 = vector.broadcast %cst_68 : f32 to vector<8x128xf32>
    %138 = arith.addf %137, %136 : vector<8x128xf32>
    %139 = arith.divf %137, %138 : vector<8x128xf32>
    %140 = vector.extract_strided_slice %127 {offsets = [0, 256], sizes = [8, 128], strides = [1, 1]} : vector<8x512xf32> to vector<8x128xf32>
    %141 = arith.negf %140 : vector<8x128xf32>
    %142 = math.exp %141 : vector<8x128xf32>
    %cst_69 = arith.constant 1.000000e+00 : f32
    %143 = vector.broadcast %cst_69 : f32 to vector<8x128xf32>
    %144 = arith.addf %143, %142 : vector<8x128xf32>
    %145 = arith.divf %143, %144 : vector<8x128xf32>
    %146 = vector.extract_strided_slice %127 {offsets = [0, 384], sizes = [8, 128], strides = [1, 1]} : vector<8x512xf32> to vector<8x128xf32>
    %147 = math.tanh %146 : vector<8x128xf32>
    %c0_70 = arith.constant 0 : index
    %c0_71 = arith.constant 0 : index
    %148 = vector.load %arg11[%c0_70, %c0_71] : memref<8x128xf32, #tpu.memory_space<vmem>>, vector<8x128xf32>
    %149 = arith.mulf %148, %139 : vector<8x128xf32>
    %150 = arith.mulf %133, %147 : vector<8x128xf32>
    %151 = arith.addf %149, %150 : vector<8x128xf32>
    %152 = math.tanh %151 : vector<8x128xf32>
    %153 = arith.mulf %145, %152 : vector<8x128xf32>
    %154 = vector.broadcast %c2_i32 : i32 to vector<8x1xi32>
    %155 = arith.cmpi slt, %154, %11 : vector<8x1xi32>
    %c0_72 = arith.constant 0 : index
    %c0_73 = arith.constant 0 : index
    %156 = vector.load %arg10[%c0_72, %c0_73] : memref<8x128xf32, #tpu.memory_space<vmem>>, vector<8x128xf32>
    %157 = vector.shape_cast %155 : vector<8x1xi1> to vector<8x1xi1>
    %158 = vector.broadcast %157 : vector<8x1xi1> to vector<8x128xi1>
    %159 = arith.select %158, %153, %156 : vector<8x128xi1>, vector<8x128xf32>
    %c0_74 = arith.constant 0 : index
    %c0_75 = arith.constant 0 : index
    %160 = vector.load %arg10[%c0_74, %c0_75] : memref<8x128xf32, #tpu.memory_space<vmem>>, vector<8x128xf32>
    tpu.vector_store %arg10[%c0_74, %c0_75], %159 {strides = array<i32>} : memref<8x128xf32, #tpu.memory_space<vmem>>, vector<8x128xf32>,
    %c0_76 = arith.constant 0 : index
    %c0_77 = arith.constant 0 : index
    %161 = vector.load %arg11[%c0_76, %c0_77] : memref<8x128xf32, #tpu.memory_space<vmem>>, vector<8x128xf32>
    %162 = vector.shape_cast %155 : vector<8x1xi1> to vector<8x1xi1>
    %163 = vector.broadcast %162 : vector<8x1xi1> to vector<8x128xi1>
    %164 = arith.select %163, %151, %161 : vector<8x128xi1>, vector<8x128xf32>
    %c0_78 = arith.constant 0 : index
    %c0_79 = arith.constant 0 : index
    %165 = vector.load %arg11[%c0_78, %c0_79] : memref<8x128xf32, #tpu.memory_space<vmem>>, vector<8x128xf32>
    tpu.vector_store %arg11[%c0_78, %c0_79], %164 {strides = array<i32>} : memref<8x128xf32, #tpu.memory_space<vmem>>, vector<8x128xf32>,
    %cst_80 = arith.constant 0.000000e+00 : f32
    %166 = vector.shape_cast %155 : vector<8x1xi1> to vector<8x1xi1>
    %167 = vector.broadcast %166 : vector<8x1xi1> to vector<8x128xi1>
    %168 = vector.broadcast %cst_80 : f32 to vector<8x128xf32>
    %169 = arith.select %167, %153, %168 : vector<8x128xi1>, vector<8x128xf32>
    %170 = arith.index_cast %c2_i32 : i32 to index
    %c0_81 = arith.constant 0 : index
    %c0_82 = arith.constant 0 : index
    %171 = vector.load %arg6[%170, %c0_81, %c0_82] : memref<8x8x128xf32, #tpu.memory_space<vmem>>, vector<1x8x128xf32>
    %172 = vector.shape_cast %171 : vector<1x8x128xf32> to vector<8x128xf32>
    %173 = vector.shape_cast %169 : vector<8x128xf32> to vector<1x8x128xf32>
    tpu.vector_store %arg6[%170, %c0_81, %c0_82], %173 {strides = array<i32>} : memref<8x8x128xf32, #tpu.memory_space<vmem>>, vector<1x8x128xf32>,
    %c3_i32 = arith.constant 3 : i32
    %c8_i32_83 = arith.constant 8 : i32
    %174 = arith.muli %c3_i32, %c8_i32_83 : i32
    %175 = tpu.assume_multiple %174, 8 : i32
    %176 = arith.index_cast %175 : i32 to index
    %c0_84 = arith.constant 0 : index
    %177 = vector.load %arg9[%176, %c0_84] : memref<64x512xf32, #tpu.memory_space<vmem>>, vector<8x512xf32>
    %c0_85 = arith.constant 0 : index
    %c0_86 = arith.constant 0 : index
    %178 = vector.load %arg10[%c0_85, %c0_86] : memref<8x128xf32, #tpu.memory_space<vmem>>, vector<8x128xf32>
    %c0_87 = arith.constant 0 : index
    %c0_88 = arith.constant 0 : index
    %179 = vector.load %arg4[%c0_87, %c0_88] : memref<128x512xf32, #tpu.memory_space<vmem>>, vector<128x512xf32>
    %cst_89 = arith.constant dense<0.000000e+00> : vector<8x512xf32>
    %180 = tpu.matmul %178, %179, %cst_89 {dimension_numbers = #tpu.dot_dimension_numbers<[1], [0], [0], [1], [0, 0, 1, 1], [], []>} : vector<8x128xf32>, vector<128x512xf32>, vector<8x512xf32> -> vector<8x512xf32>
    %181 = arith.addf %177, %180 : vector<8x512xf32>
    %182 = vector.extract_strided_slice %181 {offsets = [0, 0], sizes = [8, 128], strides = [1, 1]} : vector<8x512xf32> to vector<8x128xf32>
    %183 = arith.negf %182 : vector<8x128xf32>
    %184 = math.exp %183 : vector<8x128xf32>
    %cst_90 = arith.constant 1.000000e+00 : f32
    %185 = vector.broadcast %cst_90 : f32 to vector<8x128xf32>
    %186 = arith.addf %185, %184 : vector<8x128xf32>
    %187 = arith.divf %185, %186 : vector<8x128xf32>
    %188 = vector.extract_strided_slice %181 {offsets = [0, 128], sizes = [8, 128], strides = [1, 1]} : vector<8x512xf32> to vector<8x128xf32>
    %189 = arith.negf %188 : vector<8x128xf32>
    %190 = math.exp %189 : vector<8x128xf32>
    %cst_91 = arith.constant 1.000000e+00 : f32
    %191 = vector.broadcast %cst_91 : f32 to vector<8x128xf32>
    %192 = arith.addf %191, %190 : vector<8x128xf32>
    %193 = arith.divf %191, %192 : vector<8x128xf32>
    %194 = vector.extract_strided_slice %181 {offsets = [0, 256], sizes = [8, 128], strides = [1, 1]} : vector<8x512xf32> to vector<8x128xf32>
    %195 = arith.negf %194 : vector<8x128xf32>
    %196 = math.exp %195 : vector<8x128xf32>
    %cst_92 = arith.constant 1.000000e+00 : f32
    %197 = vector.broadcast %cst_92 : f32 to vector<8x128xf32>
    %198 = arith.addf %197, %196 : vector<8x128xf32>
    %199 = arith.divf %197, %198 : vector<8x128xf32>
    %200 = vector.extract_strided_slice %181 {offsets = [0, 384], sizes = [8, 128], strides = [1, 1]} : vector<8x512xf32> to vector<8x128xf32>
    %201 = math.tanh %200 : vector<8x128xf32>
    %c0_93 = arith.constant 0 : index
    %c0_94 = arith.constant 0 : index
    %202 = vector.load %arg11[%c0_93, %c0_94] : memref<8x128xf32, #tpu.memory_space<vmem>>, vector<8x128xf32>
    %203 = arith.mulf %202, %193 : vector<8x128xf32>
    %204 = arith.mulf %187, %201 : vector<8x128xf32>
    %205 = arith.addf %203, %204 : vector<8x128xf32>
    %206 = math.tanh %205 : vector<8x128xf32>
    %207 = arith.mulf %199, %206 : vector<8x128xf32>
    %208 = vector.broadcast %c3_i32 : i32 to vector<8x1xi32>
    %209 = arith.cmpi slt, %208, %11 : vector<8x1xi32>
    %c0_95 = arith.constant 0 : index
    %c0_96 = arith.constant 0 : index
    %210 = vector.load %arg10[%c0_95, %c0_96] : memref<8x128xf32, #tpu.memory_space<vmem>>, vector<8x128xf32>
    %211 = vector.shape_cast %209 : vector<8x1xi1> to vector<8x1xi1>
    %212 = vector.broadcast %211 : vector<8x1xi1> to vector<8x128xi1>
    %213 = arith.select %212, %207, %210 : vector<8x128xi1>, vector<8x128xf32>
    %c0_97 = arith.constant 0 : index
    %c0_98 = arith.constant 0 : index
    %214 = vector.load %arg10[%c0_97, %c0_98] : memref<8x128xf32, #tpu.memory_space<vmem>>, vector<8x128xf32>
    tpu.vector_store %arg10[%c0_97, %c0_98], %213 {strides = array<i32>} : memref<8x128xf32, #tpu.memory_space<vmem>>, vector<8x128xf32>,
    %c0_99 = arith.constant 0 : index
    %c0_100 = arith.constant 0 : index
    %215 = vector.load %arg11[%c0_99, %c0_100] : memref<8x128xf32, #tpu.memory_space<vmem>>, vector<8x128xf32>
    %216 = vector.shape_cast %209 : vector<8x1xi1> to vector<8x1xi1>
    %217 = vector.broadcast %216 : vector<8x1xi1> to vector<8x128xi1>
    %218 = arith.select %217, %205, %215 : vector<8x128xi1>, vector<8x128xf32>
    %c0_101 = arith.constant 0 : index
    %c0_102 = arith.constant 0 : index
    %219 = vector.load %arg11[%c0_101, %c0_102] : memref<8x128xf32, #tpu.memory_space<vmem>>, vector<8x128xf32>
    tpu.vector_store %arg11[%c0_101, %c0_102], %218 {strides = array<i32>} : memref<8x128xf32, #tpu.memory_space<vmem>>, vector<8x128xf32>,
    %cst_103 = arith.constant 0.000000e+00 : f32
    %220 = vector.shape_cast %209 : vector<8x1xi1> to vector<8x1xi1>
    %221 = vector.broadcast %220 : vector<8x1xi1> to vector<8x128xi1>
    %222 = vector.broadcast %cst_103 : f32 to vector<8x128xf32>
    %223 = arith.select %221, %207, %222 : vector<8x128xi1>, vector<8x128xf32>
    %224 = arith.index_cast %c3_i32 : i32 to index
    %c0_104 = arith.constant 0 : index
    %c0_105 = arith.constant 0 : index
    %225 = vector.load %arg6[%224, %c0_104, %c0_105] : memref<8x8x128xf32, #tpu.memory_space<vmem>>, vector<1x8x128xf32>
    %226 = vector.shape_cast %225 : vector<1x8x128xf32> to vector<8x128xf32>
    %227 = vector.shape_cast %223 : vector<8x128xf32> to vector<1x8x128xf32>
    tpu.vector_store %arg6[%224, %c0_104, %c0_105], %227 {strides = array<i32>} : memref<8x8x128xf32, #tpu.memory_space<vmem>>, vector<1x8x128xf32>,
    %c4_i32 = arith.constant 4 : i32
    %c8_i32_106 = arith.constant 8 : i32
    %228 = arith.muli %c4_i32, %c8_i32_106 : i32
    %229 = tpu.assume_multiple %228, 8 : i32
    %230 = arith.index_cast %229 : i32 to index
    %c0_107 = arith.constant 0 : index
    %231 = vector.load %arg9[%230, %c0_107] : memref<64x512xf32, #tpu.memory_space<vmem>>, vector<8x512xf32>
    %c0_108 = arith.constant 0 : index
    %c0_109 = arith.constant 0 : index
    %232 = vector.load %arg10[%c0_108, %c0_109] : memref<8x128xf32, #tpu.memory_space<vmem>>, vector<8x128xf32>
    %c0_110 = arith.constant 0 : index
    %c0_111 = arith.constant 0 : index
    %233 = vector.load %arg4[%c0_110, %c0_111] : memref<128x512xf32, #tpu.memory_space<vmem>>, vector<128x512xf32>
    %cst_112 = arith.constant dense<0.000000e+00> : vector<8x512xf32>
    %234 = tpu.matmul %232, %233, %cst_112 {dimension_numbers = #tpu.dot_dimension_numbers<[1], [0], [0], [1], [0, 0, 1, 1], [], []>} : vector<8x128xf32>, vector<128x512xf32>, vector<8x512xf32> -> vector<8x512xf32>
    %235 = arith.addf %231, %234 : vector<8x512xf32>
    %236 = vector.extract_strided_slice %235 {offsets = [0, 0], sizes = [8, 128], strides = [1, 1]} : vector<8x512xf32> to vector<8x128xf32>
    %237 = arith.negf %236 : vector<8x128xf32>
    %238 = math.exp %237 : vector<8x128xf32>
    %cst_113 = arith.constant 1.000000e+00 : f32
    %239 = vector.broadcast %cst_113 : f32 to vector<8x128xf32>
    %240 = arith.addf %239, %238 : vector<8x128xf32>
    %241 = arith.divf %239, %240 : vector<8x128xf32>
    %242 = vector.extract_strided_slice %235 {offsets = [0, 128], sizes = [8, 128], strides = [1, 1]} : vector<8x512xf32> to vector<8x128xf32>
    %243 = arith.negf %242 : vector<8x128xf32>
    %244 = math.exp %243 : vector<8x128xf32>
    %cst_114 = arith.constant 1.000000e+00 : f32
    %245 = vector.broadcast %cst_114 : f32 to vector<8x128xf32>
    %246 = arith.addf %245, %244 : vector<8x128xf32>
    %247 = arith.divf %245, %246 : vector<8x128xf32>
    %248 = vector.extract_strided_slice %235 {offsets = [0, 256], sizes = [8, 128], strides = [1, 1]} : vector<8x512xf32> to vector<8x128xf32>
    %249 = arith.negf %248 : vector<8x128xf32>
    %250 = math.exp %249 : vector<8x128xf32>
    %cst_115 = arith.constant 1.000000e+00 : f32
    %251 = vector.broadcast %cst_115 : f32 to vector<8x128xf32>
    %252 = arith.addf %251, %250 : vector<8x128xf32>
    %253 = arith.divf %251, %252 : vector<8x128xf32>
    %254 = vector.extract_strided_slice %235 {offsets = [0, 384], sizes = [8, 128], strides = [1, 1]} : vector<8x512xf32> to vector<8x128xf32>
    %255 = math.tanh %254 : vector<8x128xf32>
    %c0_116 = arith.constant 0 : index
    %c0_117 = arith.constant 0 : index
    %256 = vector.load %arg11[%c0_116, %c0_117] : memref<8x128xf32, #tpu.memory_space<vmem>>, vector<8x128xf32>
    %257 = arith.mulf %256, %247 : vector<8x128xf32>
    %258 = arith.mulf %241, %255 : vector<8x128xf32>
    %259 = arith.addf %257, %258 : vector<8x128xf32>
    %260 = math.tanh %259 : vector<8x128xf32>
    %261 = arith.mulf %253, %260 : vector<8x128xf32>
    %262 = vector.broadcast %c4_i32 : i32 to vector<8x1xi32>
    %263 = arith.cmpi slt, %262, %11 : vector<8x1xi32>
    %c0_118 = arith.constant 0 : index
    %c0_119 = arith.constant 0 : index
    %264 = vector.load %arg10[%c0_118, %c0_119] : memref<8x128xf32, #tpu.memory_space<vmem>>, vector<8x128xf32>
    %265 = vector.shape_cast %263 : vector<8x1xi1> to vector<8x1xi1>
    %266 = vector.broadcast %265 : vector<8x1xi1> to vector<8x128xi1>
    %267 = arith.select %266, %261, %264 : vector<8x128xi1>, vector<8x128xf32>
    %c0_120 = arith.constant 0 : index
    %c0_121 = arith.constant 0 : index
    %268 = vector.load %arg10[%c0_120, %c0_121] : memref<8x128xf32, #tpu.memory_space<vmem>>, vector<8x128xf32>
    tpu.vector_store %arg10[%c0_120, %c0_121], %267 {strides = array<i32>} : memref<8x128xf32, #tpu.memory_space<vmem>>, vector<8x128xf32>,
    %c0_122 = arith.constant 0 : index
    %c0_123 = arith.constant 0 : index
    %269 = vector.load %arg11[%c0_122, %c0_123] : memref<8x128xf32, #tpu.memory_space<vmem>>, vector<8x128xf32>
    %270 = vector.shape_cast %263 : vector<8x1xi1> to vector<8x1xi1>
    %271 = vector.broadcast %270 : vector<8x1xi1> to vector<8x128xi1>
    %272 = arith.select %271, %259, %269 : vector<8x128xi1>, vector<8x128xf32>
    %c0_124 = arith.constant 0 : index
    %c0_125 = arith.constant 0 : index
    %273 = vector.load %arg11[%c0_124, %c0_125] : memref<8x128xf32, #tpu.memory_space<vmem>>, vector<8x128xf32>
    tpu.vector_store %arg11[%c0_124, %c0_125], %272 {strides = array<i32>} : memref<8x128xf32, #tpu.memory_space<vmem>>, vector<8x128xf32>,
    %cst_126 = arith.constant 0.000000e+00 : f32
    %274 = vector.shape_cast %263 : vector<8x1xi1> to vector<8x1xi1>
    %275 = vector.broadcast %274 : vector<8x1xi1> to vector<8x128xi1>
    %276 = vector.broadcast %cst_126 : f32 to vector<8x128xf32>
    %277 = arith.select %275, %261, %276 : vector<8x128xi1>, vector<8x128xf32>
    %278 = arith.index_cast %c4_i32 : i32 to index
    %c0_127 = arith.constant 0 : index
    %c0_128 = arith.constant 0 : index
    %279 = vector.load %arg6[%278, %c0_127, %c0_128] : memref<8x8x128xf32, #tpu.memory_space<vmem>>, vector<1x8x128xf32>
    %280 = vector.shape_cast %279 : vector<1x8x128xf32> to vector<8x128xf32>
    %281 = vector.shape_cast %277 : vector<8x128xf32> to vector<1x8x128xf32>
    tpu.vector_store %arg6[%278, %c0_127, %c0_128], %281 {strides = array<i32>} : memref<8x8x128xf32, #tpu.memory_space<vmem>>, vector<1x8x128xf32>,
    %c5_i32 = arith.constant 5 : i32
    %c8_i32_129 = arith.constant 8 : i32
    %282 = arith.muli %c5_i32, %c8_i32_129 : i32
    %283 = tpu.assume_multiple %282, 8 : i32
    %284 = arith.index_cast %283 : i32 to index
    %c0_130 = arith.constant 0 : index
    %285 = vector.load %arg9[%284, %c0_130] : memref<64x512xf32, #tpu.memory_space<vmem>>, vector<8x512xf32>
    %c0_131 = arith.constant 0 : index
    %c0_132 = arith.constant 0 : index
    %286 = vector.load %arg10[%c0_131, %c0_132] : memref<8x128xf32, #tpu.memory_space<vmem>>, vector<8x128xf32>
    %c0_133 = arith.constant 0 : index
    %c0_134 = arith.constant 0 : index
    %287 = vector.load %arg4[%c0_133, %c0_134] : memref<128x512xf32, #tpu.memory_space<vmem>>, vector<128x512xf32>
    %cst_135 = arith.constant dense<0.000000e+00> : vector<8x512xf32>
    %288 = tpu.matmul %286, %287, %cst_135 {dimension_numbers = #tpu.dot_dimension_numbers<[1], [0], [0], [1], [0, 0, 1, 1], [], []>} : vector<8x128xf32>, vector<128x512xf32>, vector<8x512xf32> -> vector<8x512xf32>
    %289 = arith.addf %285, %288 : vector<8x512xf32>
    %290 = vector.extract_strided_slice %289 {offsets = [0, 0], sizes = [8, 128], strides = [1, 1]} : vector<8x512xf32> to vector<8x128xf32>
    %291 = arith.negf %290 : vector<8x128xf32>
    %292 = math.exp %291 : vector<8x128xf32>
    %cst_136 = arith.constant 1.000000e+00 : f32
    %293 = vector.broadcast %cst_136 : f32 to vector<8x128xf32>
    %294 = arith.addf %293, %292 : vector<8x128xf32>
    %295 = arith.divf %293, %294 : vector<8x128xf32>
    %296 = vector.extract_strided_slice %289 {offsets = [0, 128], sizes = [8, 128], strides = [1, 1]} : vector<8x512xf32> to vector<8x128xf32>
    %297 = arith.negf %296 : vector<8x128xf32>
    %298 = math.exp %297 : vector<8x128xf32>
    %cst_137 = arith.constant 1.000000e+00 : f32
    %299 = vector.broadcast %cst_137 : f32 to vector<8x128xf32>
    %300 = arith.addf %299, %298 : vector<8x128xf32>
    %301 = arith.divf %299, %300 : vector<8x128xf32>
    %302 = vector.extract_strided_slice %289 {offsets = [0, 256], sizes = [8, 128], strides = [1, 1]} : vector<8x512xf32> to vector<8x128xf32>
    %303 = arith.negf %302 : vector<8x128xf32>
    %304 = math.exp %303 : vector<8x128xf32>
    %cst_138 = arith.constant 1.000000e+00 : f32
    %305 = vector.broadcast %cst_138 : f32 to vector<8x128xf32>
    %306 = arith.addf %305, %304 : vector<8x128xf32>
    %307 = arith.divf %305, %306 : vector<8x128xf32>
    %308 = vector.extract_strided_slice %289 {offsets = [0, 384], sizes = [8, 128], strides = [1, 1]} : vector<8x512xf32> to vector<8x128xf32>
    %309 = math.tanh %308 : vector<8x128xf32>
    %c0_139 = arith.constant 0 : index
    %c0_140 = arith.constant 0 : index
    %310 = vector.load %arg11[%c0_139, %c0_140] : memref<8x128xf32, #tpu.memory_space<vmem>>, vector<8x128xf32>
    %311 = arith.mulf %310, %301 : vector<8x128xf32>
    %312 = arith.mulf %295, %309 : vector<8x128xf32>
    %313 = arith.addf %311, %312 : vector<8x128xf32>
    %314 = math.tanh %313 : vector<8x128xf32>
    %315 = arith.mulf %307, %314 : vector<8x128xf32>
    %316 = vector.broadcast %c5_i32 : i32 to vector<8x1xi32>
    %317 = arith.cmpi slt, %316, %11 : vector<8x1xi32>
    %c0_141 = arith.constant 0 : index
    %c0_142 = arith.constant 0 : index
    %318 = vector.load %arg10[%c0_141, %c0_142] : memref<8x128xf32, #tpu.memory_space<vmem>>, vector<8x128xf32>
    %319 = vector.shape_cast %317 : vector<8x1xi1> to vector<8x1xi1>
    %320 = vector.broadcast %319 : vector<8x1xi1> to vector<8x128xi1>
    %321 = arith.select %320, %315, %318 : vector<8x128xi1>, vector<8x128xf32>
    %c0_143 = arith.constant 0 : index
    %c0_144 = arith.constant 0 : index
    %322 = vector.load %arg10[%c0_143, %c0_144] : memref<8x128xf32, #tpu.memory_space<vmem>>, vector<8x128xf32>
    tpu.vector_store %arg10[%c0_143, %c0_144], %321 {strides = array<i32>} : memref<8x128xf32, #tpu.memory_space<vmem>>, vector<8x128xf32>,
    %c0_145 = arith.constant 0 : index
    %c0_146 = arith.constant 0 : index
    %323 = vector.load %arg11[%c0_145, %c0_146] : memref<8x128xf32, #tpu.memory_space<vmem>>, vector<8x128xf32>
    %324 = vector.shape_cast %317 : vector<8x1xi1> to vector<8x1xi1>
    %325 = vector.broadcast %324 : vector<8x1xi1> to vector<8x128xi1>
    %326 = arith.select %325, %313, %323 : vector<8x128xi1>, vector<8x128xf32>
    %c0_147 = arith.constant 0 : index
    %c0_148 = arith.constant 0 : index
    %327 = vector.load %arg11[%c0_147, %c0_148] : memref<8x128xf32, #tpu.memory_space<vmem>>, vector<8x128xf32>
    tpu.vector_store %arg11[%c0_147, %c0_148], %326 {strides = array<i32>} : memref<8x128xf32, #tpu.memory_space<vmem>>, vector<8x128xf32>,
    %cst_149 = arith.constant 0.000000e+00 : f32
    %328 = vector.shape_cast %317 : vector<8x1xi1> to vector<8x1xi1>
    %329 = vector.broadcast %328 : vector<8x1xi1> to vector<8x128xi1>
    %330 = vector.broadcast %cst_149 : f32 to vector<8x128xf32>
    %331 = arith.select %329, %315, %330 : vector<8x128xi1>, vector<8x128xf32>
    %332 = arith.index_cast %c5_i32 : i32 to index
    %c0_150 = arith.constant 0 : index
    %c0_151 = arith.constant 0 : index
    %333 = vector.load %arg6[%332, %c0_150, %c0_151] : memref<8x8x128xf32, #tpu.memory_space<vmem>>, vector<1x8x128xf32>
    %334 = vector.shape_cast %333 : vector<1x8x128xf32> to vector<8x128xf32>
    %335 = vector.shape_cast %331 : vector<8x128xf32> to vector<1x8x128xf32>
    tpu.vector_store %arg6[%332, %c0_150, %c0_151], %335 {strides = array<i32>} : memref<8x8x128xf32, #tpu.memory_space<vmem>>, vector<1x8x128xf32>,
    %c6_i32 = arith.constant 6 : i32
    %c8_i32_152 = arith.constant 8 : i32
    %336 = arith.muli %c6_i32, %c8_i32_152 : i32
    %337 = tpu.assume_multiple %336, 8 : i32
    %338 = arith.index_cast %337 : i32 to index
    %c0_153 = arith.constant 0 : index
    %339 = vector.load %arg9[%338, %c0_153] : memref<64x512xf32, #tpu.memory_space<vmem>>, vector<8x512xf32>
    %c0_154 = arith.constant 0 : index
    %c0_155 = arith.constant 0 : index
    %340 = vector.load %arg10[%c0_154, %c0_155] : memref<8x128xf32, #tpu.memory_space<vmem>>, vector<8x128xf32>
    %c0_156 = arith.constant 0 : index
    %c0_157 = arith.constant 0 : index
    %341 = vector.load %arg4[%c0_156, %c0_157] : memref<128x512xf32, #tpu.memory_space<vmem>>, vector<128x512xf32>
    %cst_158 = arith.constant dense<0.000000e+00> : vector<8x512xf32>
    %342 = tpu.matmul %340, %341, %cst_158 {dimension_numbers = #tpu.dot_dimension_numbers<[1], [0], [0], [1], [0, 0, 1, 1], [], []>} : vector<8x128xf32>, vector<128x512xf32>, vector<8x512xf32> -> vector<8x512xf32>
    %343 = arith.addf %339, %342 : vector<8x512xf32>
    %344 = vector.extract_strided_slice %343 {offsets = [0, 0], sizes = [8, 128], strides = [1, 1]} : vector<8x512xf32> to vector<8x128xf32>
    %345 = arith.negf %344 : vector<8x128xf32>
    %346 = math.exp %345 : vector<8x128xf32>
    %cst_159 = arith.constant 1.000000e+00 : f32
    %347 = vector.broadcast %cst_159 : f32 to vector<8x128xf32>
    %348 = arith.addf %347, %346 : vector<8x128xf32>
    %349 = arith.divf %347, %348 : vector<8x128xf32>
    %350 = vector.extract_strided_slice %343 {offsets = [0, 128], sizes = [8, 128], strides = [1, 1]} : vector<8x512xf32> to vector<8x128xf32>
    %351 = arith.negf %350 : vector<8x128xf32>
    %352 = math.exp %351 : vector<8x128xf32>
    %cst_160 = arith.constant 1.000000e+00 : f32
    %353 = vector.broadcast %cst_160 : f32 to vector<8x128xf32>
    %354 = arith.addf %353, %352 : vector<8x128xf32>
    %355 = arith.divf %353, %354 : vector<8x128xf32>
    %356 = vector.extract_strided_slice %343 {offsets = [0, 256], sizes = [8, 128], strides = [1, 1]} : vector<8x512xf32> to vector<8x128xf32>
    %357 = arith.negf %356 : vector<8x128xf32>
    %358 = math.exp %357 : vector<8x128xf32>
    %cst_161 = arith.constant 1.000000e+00 : f32
    %359 = vector.broadcast %cst_161 : f32 to vector<8x128xf32>
    %360 = arith.addf %359, %358 : vector<8x128xf32>
    %361 = arith.divf %359, %360 : vector<8x128xf32>
    %362 = vector.extract_strided_slice %343 {offsets = [0, 384], sizes = [8, 128], strides = [1, 1]} : vector<8x512xf32> to vector<8x128xf32>
    %363 = math.tanh %362 : vector<8x128xf32>
    %c0_162 = arith.constant 0 : index
    %c0_163 = arith.constant 0 : index
    %364 = vector.load %arg11[%c0_162, %c0_163] : memref<8x128xf32, #tpu.memory_space<vmem>>, vector<8x128xf32>
    %365 = arith.mulf %364, %355 : vector<8x128xf32>
    %366 = arith.mulf %349, %363 : vector<8x128xf32>
    %367 = arith.addf %365, %366 : vector<8x128xf32>
    %368 = math.tanh %367 : vector<8x128xf32>
    %369 = arith.mulf %361, %368 : vector<8x128xf32>
    %370 = vector.broadcast %c6_i32 : i32 to vector<8x1xi32>
    %371 = arith.cmpi slt, %370, %11 : vector<8x1xi32>
    %c0_164 = arith.constant 0 : index
    %c0_165 = arith.constant 0 : index
    %372 = vector.load %arg10[%c0_164, %c0_165] : memref<8x128xf32, #tpu.memory_space<vmem>>, vector<8x128xf32>
    %373 = vector.shape_cast %371 : vector<8x1xi1> to vector<8x1xi1>
    %374 = vector.broadcast %373 : vector<8x1xi1> to vector<8x128xi1>
    %375 = arith.select %374, %369, %372 : vector<8x128xi1>, vector<8x128xf32>
    %c0_166 = arith.constant 0 : index
    %c0_167 = arith.constant 0 : index
    %376 = vector.load %arg10[%c0_166, %c0_167] : memref<8x128xf32, #tpu.memory_space<vmem>>, vector<8x128xf32>
    tpu.vector_store %arg10[%c0_166, %c0_167], %375 {strides = array<i32>} : memref<8x128xf32, #tpu.memory_space<vmem>>, vector<8x128xf32>,
    %c0_168 = arith.constant 0 : index
    %c0_169 = arith.constant 0 : index
    %377 = vector.load %arg11[%c0_168, %c0_169] : memref<8x128xf32, #tpu.memory_space<vmem>>, vector<8x128xf32>
    %378 = vector.shape_cast %371 : vector<8x1xi1> to vector<8x1xi1>
    %379 = vector.broadcast %378 : vector<8x1xi1> to vector<8x128xi1>
    %380 = arith.select %379, %367, %377 : vector<8x128xi1>, vector<8x128xf32>
    %c0_170 = arith.constant 0 : index
    %c0_171 = arith.constant 0 : index
    %381 = vector.load %arg11[%c0_170, %c0_171] : memref<8x128xf32, #tpu.memory_space<vmem>>, vector<8x128xf32>
    tpu.vector_store %arg11[%c0_170, %c0_171], %380 {strides = array<i32>} : memref<8x128xf32, #tpu.memory_space<vmem>>, vector<8x128xf32>,
    %cst_172 = arith.constant 0.000000e+00 : f32
    %382 = vector.shape_cast %371 : vector<8x1xi1> to vector<8x1xi1>
    %383 = vector.broadcast %382 : vector<8x1xi1> to vector<8x128xi1>
    %384 = vector.broadcast %cst_172 : f32 to vector<8x128xf32>
    %385 = arith.select %383, %369, %384 : vector<8x128xi1>, vector<8x128xf32>
    %386 = arith.index_cast %c6_i32 : i32 to index
    %c0_173 = arith.constant 0 : index
    %c0_174 = arith.constant 0 : index
    %387 = vector.load %arg6[%386, %c0_173, %c0_174] : memref<8x8x128xf32, #tpu.memory_space<vmem>>, vector<1x8x128xf32>
    %388 = vector.shape_cast %387 : vector<1x8x128xf32> to vector<8x128xf32>
    %389 = vector.shape_cast %385 : vector<8x128xf32> to vector<1x8x128xf32>
    tpu.vector_store %arg6[%386, %c0_173, %c0_174], %389 {strides = array<i32>} : memref<8x8x128xf32, #tpu.memory_space<vmem>>, vector<1x8x128xf32>,
    %c7_i32 = arith.constant 7 : i32
    %c8_i32_175 = arith.constant 8 : i32
    %390 = arith.muli %c7_i32, %c8_i32_175 : i32
    %391 = tpu.assume_multiple %390, 8 : i32
    %392 = arith.index_cast %391 : i32 to index
    %c0_176 = arith.constant 0 : index
    %393 = vector.load %arg9[%392, %c0_176] : memref<64x512xf32, #tpu.memory_space<vmem>>, vector<8x512xf32>
    %c0_177 = arith.constant 0 : index
    %c0_178 = arith.constant 0 : index
    %394 = vector.load %arg10[%c0_177, %c0_178] : memref<8x128xf32, #tpu.memory_space<vmem>>, vector<8x128xf32>
    %c0_179 = arith.constant 0 : index
    %c0_180 = arith.constant 0 : index
    %395 = vector.load %arg4[%c0_179, %c0_180] : memref<128x512xf32, #tpu.memory_space<vmem>>, vector<128x512xf32>
    %cst_181 = arith.constant dense<0.000000e+00> : vector<8x512xf32>
    %396 = tpu.matmul %394, %395, %cst_181 {dimension_numbers = #tpu.dot_dimension_numbers<[1], [0], [0], [1], [0, 0, 1, 1], [], []>} : vector<8x128xf32>, vector<128x512xf32>, vector<8x512xf32> -> vector<8x512xf32>
    %397 = arith.addf %393, %396 : vector<8x512xf32>
    %398 = vector.extract_strided_slice %397 {offsets = [0, 0], sizes = [8, 128], strides = [1, 1]} : vector<8x512xf32> to vector<8x128xf32>
    %399 = arith.negf %398 : vector<8x128xf32>
    %400 = math.exp %399 : vector<8x128xf32>
    %cst_182 = arith.constant 1.000000e+00 : f32
    %401 = vector.broadcast %cst_182 : f32 to vector<8x128xf32>
    %402 = arith.addf %401, %400 : vector<8x128xf32>
    %403 = arith.divf %401, %402 : vector<8x128xf32>
    %404 = vector.extract_strided_slice %397 {offsets = [0, 128], sizes = [8, 128], strides = [1, 1]} : vector<8x512xf32> to vector<8x128xf32>
    %405 = arith.negf %404 : vector<8x128xf32>
    %406 = math.exp %405 : vector<8x128xf32>
    %cst_183 = arith.constant 1.000000e+00 : f32
    %407 = vector.broadcast %cst_183 : f32 to vector<8x128xf32>
    %408 = arith.addf %407, %406 : vector<8x128xf32>
    %409 = arith.divf %407, %408 : vector<8x128xf32>
    %410 = vector.extract_strided_slice %397 {offsets = [0, 256], sizes = [8, 128], strides = [1, 1]} : vector<8x512xf32> to vector<8x128xf32>
    %411 = arith.negf %410 : vector<8x128xf32>
    %412 = math.exp %411 : vector<8x128xf32>
    %cst_184 = arith.constant 1.000000e+00 : f32
    %413 = vector.broadcast %cst_184 : f32 to vector<8x128xf32>
    %414 = arith.addf %413, %412 : vector<8x128xf32>
    %415 = arith.divf %413, %414 : vector<8x128xf32>
    %416 = vector.extract_strided_slice %397 {offsets = [0, 384], sizes = [8, 128], strides = [1, 1]} : vector<8x512xf32> to vector<8x128xf32>
    %417 = math.tanh %416 : vector<8x128xf32>
    %c0_185 = arith.constant 0 : index
    %c0_186 = arith.constant 0 : index
    %418 = vector.load %arg11[%c0_185, %c0_186] : memref<8x128xf32, #tpu.memory_space<vmem>>, vector<8x128xf32>
    %419 = arith.mulf %418, %409 : vector<8x128xf32>
    %420 = arith.mulf %403, %417 : vector<8x128xf32>
    %421 = arith.addf %419, %420 : vector<8x128xf32>
    %422 = math.tanh %421 : vector<8x128xf32>
    %423 = arith.mulf %415, %422 : vector<8x128xf32>
    %424 = vector.broadcast %c7_i32 : i32 to vector<8x1xi32>
    %425 = arith.cmpi slt, %424, %11 : vector<8x1xi32>
    %c0_187 = arith.constant 0 : index
    %c0_188 = arith.constant 0 : index
    %426 = vector.load %arg10[%c0_187, %c0_188] : memref<8x128xf32, #tpu.memory_space<vmem>>, vector<8x128xf32>
    %427 = vector.shape_cast %425 : vector<8x1xi1> to vector<8x1xi1>
    %428 = vector.broadcast %427 : vector<8x1xi1> to vector<8x128xi1>
    %429 = arith.select %428, %423, %426 : vector<8x128xi1>, vector<8x128xf32>
    %c0_189 = arith.constant 0 : index
    %c0_190 = arith.constant 0 : index
    %430 = vector.load %arg10[%c0_189, %c0_190] : memref<8x128xf32, #tpu.memory_space<vmem>>, vector<8x128xf32>
    tpu.vector_store %arg10[%c0_189, %c0_190], %429 {strides = array<i32>} : memref<8x128xf32, #tpu.memory_space<vmem>>, vector<8x128xf32>,
    %c0_191 = arith.constant 0 : index
    %c0_192 = arith.constant 0 : index
    %431 = vector.load %arg11[%c0_191, %c0_192] : memref<8x128xf32, #tpu.memory_space<vmem>>, vector<8x128xf32>
    %432 = vector.shape_cast %425 : vector<8x1xi1> to vector<8x1xi1>
    %433 = vector.broadcast %432 : vector<8x1xi1> to vector<8x128xi1>
    %434 = arith.select %433, %421, %431 : vector<8x128xi1>, vector<8x128xf32>
    %c0_193 = arith.constant 0 : index
    %c0_194 = arith.constant 0 : index
    %435 = vector.load %arg11[%c0_193, %c0_194] : memref<8x128xf32, #tpu.memory_space<vmem>>, vector<8x128xf32>
    tpu.vector_store %arg11[%c0_193, %c0_194], %434 {strides = array<i32>} : memref<8x128xf32, #tpu.memory_space<vmem>>, vector<8x128xf32>,
    %cst_195 = arith.constant 0.000000e+00 : f32
    %436 = vector.shape_cast %425 : vector<8x1xi1> to vector<8x1xi1>
    %437 = vector.broadcast %436 : vector<8x1xi1> to vector<8x128xi1>
    %438 = vector.broadcast %cst_195 : f32 to vector<8x128xf32>
    %439 = arith.select %437, %423, %438 : vector<8x128xi1>, vector<8x128xf32>
    %440 = arith.index_cast %c7_i32 : i32 to index
    %c0_196 = arith.constant 0 : index
    %c0_197 = arith.constant 0 : index
    %441 = vector.load %arg6[%440, %c0_196, %c0_197] : memref<8x8x128xf32, #tpu.memory_space<vmem>>, vector<1x8x128xf32>
    %442 = vector.shape_cast %441 : vector<1x8x128xf32> to vector<8x128xf32>
    %443 = vector.shape_cast %439 : vector<8x128xf32> to vector<1x8x128xf32>
    tpu.vector_store %arg6[%440, %c0_196, %c0_197], %443 {strides = array<i32>} : memref<8x8x128xf32, #tpu.memory_space<vmem>>, vector<1x8x128xf32>,
    %c8_i32_198 = arith.constant 8 : i32
    %c0_199 = arith.constant 0 : index
    %c0_200 = arith.constant 0 : index
    %444 = vector.load %arg10[%c0_199, %c0_200] : memref<8x128xf32, #tpu.memory_space<vmem>>, vector<8x128xf32>
    %c0_201 = arith.constant 0 : index
    %c0_202 = arith.constant 0 : index
    %445 = vector.load %arg7[%c0_201, %c0_202] : memref<8x128xf32, #tpu.memory_space<vmem>>, vector<8x128xf32>
    tpu.vector_store %arg7[%c0_201, %c0_202], %444 {strides = array<i32>} : memref<8x128xf32, #tpu.memory_space<vmem>>, vector<8x128xf32>,
    %c0_203 = arith.constant 0 : index
    %c0_204 = arith.constant 0 : index
    %446 = vector.load %arg11[%c0_203, %c0_204] : memref<8x128xf32, #tpu.memory_space<vmem>>, vector<8x128xf32>
    %c0_205 = arith.constant 0 : index
    %c0_206 = arith.constant 0 : index
    %447 = vector.load %arg8[%c0_205, %c0_206] : memref<8x128xf32, #tpu.memory_space<vmem>>, vector<8x128xf32>
    tpu.vector_store %arg8[%c0_205, %c0_206], %446 {strides = array<i32>} : memref<8x128xf32, #tpu.memory_space<vmem>>, vector<8x128xf32>,
    return
  }
  func.func @transform_0(%arg0: i32) -> (i32, i32) {
    %c0_i32 = arith.constant 0 : i32
    %c0_i32_0 = arith.constant 0 : i32
    %c0_i32_1 = arith.constant 0 : i32
    return %c0_i32, %c0_i32_0 : i32, i32
  }
  func.func @transform_1(%arg0: i32) -> (i32, i32) {
    %c0_i32 = arith.constant 0 : i32
    %c0_i32_0 = arith.constant 0 : i32
    %c0_i32_1 = arith.constant 0 : i32
    return %c0_i32, %c0_i32_0 : i32, i32
  }
  func.func @transform_2(%arg0: i32) -> (i32, i32) {
    %c0_i32 = arith.constant 0 : i32
    %c0_i32_0 = arith.constant 0 : i32
    %c0_i32_1 = arith.constant 0 : i32
    return %c0_i32, %c0_i32_0 : i32, i32
  }
  func.func @transform_3(%arg0: i32) -> (i32, i32) {
    %c0_i32 = arith.constant 0 : i32
    %c0_i32_0 = arith.constant 0 : i32
    %c0_i32_1 = arith.constant 0 : i32
    return %c0_i32, %c0_i32_0 : i32, i32
  }
  func.func @transform_4(%arg0: i32) -> (i32, i32) {
    %c0_i32 = arith.constant 0 : i32
    %c0_i32_0 = arith.constant 0 : i32
    %c0_i32_1 = arith.constant 0 : i32
    return %c0_i32, %c0_i32_0 : i32, i32
  }
  func.func @transform_5(%arg0: i32) -> (i32, i32, i32) {
    %c0_i32 = arith.constant 0 : i32
    %c0_i32_0 = arith.constant 0 : i32
    %c0_i32_1 = arith.constant 0 : i32
    %c0_i32_2 = arith.constant 0 : i32
    return %c0_i32, %c0_i32_0, %c0_i32_1 : i32, i32, i32
  }
  func.func @transform_6(%arg0: i32) -> (i32, i32) {
    %c0_i32 = arith.constant 0 : i32
    %c0_i32_0 = arith.constant 0 : i32
    %c0_i32_1 = arith.constant 0 : i32
    return %c0_i32, %c0_i32_0 : i32, i32
  }
  func.func @transform_7(%arg0: i32) -> (i32, i32) {
    %c0_i32 = arith.constant 0 : i32
    %c0_i32_0 = arith.constant 0 : i32
    %c0_i32_1 = arith.constant 0 : i32
    return %c0_i32, %c0_i32_0 : i32, i32
  }
}

</mosaic_0001>

<llo_original>
// kernel: tpu_custom_call.1
$region0: #{tpu_custom_call.1}
  #allocation0 [shape = 'u32[]', space=smem, size = 0x4, offset = 0x4, fixed_abs, tag = 'smem constant byte address 0x4 - core index']
  #allocation1 [shape = 'u32[144,128]{1,0:T(1,128)}', space=vmem, size = 0x12000, scoped, tag = 'internal scratch']
  #allocation2 [shape = 'f32[64,512]{1,0:T(8,128)}', space=vmem, size = 0x20000, scoped, tag = 'scratch operand']
  #allocation3 [shape = 'f32[8,128]{1,0:T(8,128)}', space=vmem, size = 0x1000, scoped, tag = 'scratch operand']
  #allocation4 [shape = 'f32[8,128]{1,0:T(8,128)}', space=vmem, size = 0x1000, scoped, tag = 'scratch operand']
  %s0 = inlined_call_operand.vmem [shape: f32[64,16], index: 0, kind: input, shape index: {}]
  %s1 = inlined_call_operand.vmem [shape: s32[8,1], index: 1, kind: input, shape index: {}]
  %s2 = inlined_call_operand.vmem [shape: f32[16,512], index: 2, kind: input, shape index: {}]
  %s3 = inlined_call_operand.hbm [shape: f32[128,512], index: 3, kind: input, shape index: {}]
  %s4 = inlined_call_operand.vmem [shape: f32[1,512], index: 4, kind: input, shape index: {}]
  %s5 = inlined_call_operand.hbm [shape: f32[8,8,128], index: 5, kind: output, shape index: {0}]
  %s6 = inlined_call_operand.hbm [shape: f32[8,128], index: 6, kind: output, shape index: {1}]
  %s7 = inlined_call_operand.hbm [shape: f32[8,128], index: 7, kind: output, shape index: {2}]
  %8 = xla_tuple %s5, %s6, %s7
  %s9 = sld [smem:[#allocation0]]
  $region50: #{tpu_custom_call.1} parent=0
    _
  %s11 = ssub.s32 1, %s9
  %s12 = scalar_select 0, %s11, %s9
  $region1: #{tpu_custom_call.1} parent=0
    #allocation5 [shape = 'u8[262144]{0}', space=vmem, size = 0x40000, scoped, tag = 'input window, operand 3, single buffered']
    #allocation6 [shape = 's32[1]{0}', space=sflag, size = 0x4, scoped, tag = 'scoped memory for tpu_custom_call.1']
    #allocation7 [shape = 's32[1]{0}', space=sflag, size = 0x4, scoped, tag = 'scoped memory for tpu_custom_call.1']
    #allocation8 [shape = 'u8[32768]{0}', space=vmem, size = 0x8000, scoped, tag = 'output window, operand 0, single buffered']
    #allocation9 [shape = 'u8[4096]{0}', space=vmem, size = 0x1000, scoped, tag = 'output window, operand 1, single buffered']
    #allocation10 [shape = 's32[1]{0}', space=sflag, size = 0x4, scoped, tag = 'scoped memory for tpu_custom_call.1']
    #allocation11 [shape = 'u8[4096]{0}', space=vmem, size = 0x1000, scoped, tag = 'output window, operand 2, single buffered']
    %13 = vsyncpa [#allocation6], 0
    %14 = vsyncpa [#allocation7], 0
    %15 = vsyncpa [#allocation10], 0
    // Predicated region
    $region2: #{tpu_custom_call.1} parent=1 // pred_check
      _
    $region3: #{tpu_custom_call.1} parent=1 // pred_check_branch
      %17 = sbr.rel (0) target = $region5
    $region4: #{tpu_custom_call.1} parent=1 // pred_region
      _
    $region5: #{tpu_custom_call.1} parent=1 // pred_fallthru
      _
    // Predicated region
    $region6: #{tpu_custom_call.1} parent=1 // pred_check
      _
    $region7: #{tpu_custom_call.1} parent=1 // pred_check_branch
      %19 = sbr.rel (0) target = $region9
    $region8: #{tpu_custom_call.1} parent=1 // pred_region
      _
    $region9: #{tpu_custom_call.1} parent=1 // pred_fallthru
      _
    // Predicated region
    $region10: #{tpu_custom_call.1} parent=1 // pred_check
      _
    $region11: #{tpu_custom_call.1} parent=1 // pred_check_branch
      %21 = sbr.rel (0) target = $region13
    $region12: #{tpu_custom_call.1} parent=1 // pred_region
      _
    $region13: #{tpu_custom_call.1} parent=1 // pred_fallthru
      _
    // Predicated region
    $region14: #{tpu_custom_call.1} parent=1 // pred_check
      _
    $region15: #{tpu_custom_call.1} parent=1 // pred_check_branch
      %23 = sbr.rel (0) target = $region17
    $region16: #{tpu_custom_call.1} parent=1 // pred_region
      %s25 = ssub.s32 8192, 8192
      %26 = vsyncadd [#allocation6], %s25
      %s27 = sshll.u32 [#allocation5], 4
      %s28 = int_to_ptr.vmem [resolvable:$true] %s27
      %33 = dma.hbm_to_vmem [thread:$0]  %s3, 8192, %s28, [#allocation6], 512, 512, 32
    $region17: #{tpu_custom_call.1} parent=1 // pred_fallthru
      _
    // Predicated region
    $region18: #{tpu_custom_call.1} parent=1 // pred_check
      _
    $region19: #{tpu_custom_call.1} parent=1 // pred_check_branch
      %35 = sbr.rel (0) target = $region21
    $region20: #{tpu_custom_call.1} parent=1 // pred_region
      _
    $region21: #{tpu_custom_call.1} parent=1 // pred_fallthru
      _
    // Predicated region
    $region22: #{tpu_custom_call.1} parent=1 // pred_check
      _
    $region23: #{tpu_custom_call.1} parent=1 // pred_check_branch
      %37 = sbr.rel (0) target = $region25
    $region24: #{tpu_custom_call.1} parent=1 // pred_region
      %38 = dma.done [#allocation6], 8192
    $region25: #{tpu_custom_call.1} parent=1 // pred_fallthru
      _
    %v39 = vld [vmem:[%s0] sm:$0xff]
    %v40 = vld [vmem:[%s0 + $0x8] sm:$0xff]
    %v41 = vld [vmem:[%s0 + $0x10] sm:$0xff]
    %v42 = vld [vmem:[%s0 + $0x18] sm:$0xff]
    %v43 = vld [vmem:[%s0 + $0x20] sm:$0xff]
    %v44 = vld [vmem:[%s0 + $0x28] sm:$0xff]
    %v45 = vld [vmem:[%s0 + $0x30] sm:$0xff]
    %v46 = vld [vmem:[%s0 + $0x38] sm:$0xff]
    %v47 = vld [vmem:[%s2] sm:$0xff]
    %v48 = vld [vmem:[%s2 + $0x8] sm:$0xff]
    %v49 = vld [vmem:[%s2 + $0x10] sm:$0xff]
    %v50 = vld [vmem:[%s2 + $0x18] sm:$0xff]
    %v51 = vld [vmem:[%s2 + $0x20] sm:$0xff]
    %v52 = vld [vmem:[%s2 + $0x28] sm:$0xff]
    %v53 = vld [vmem:[%s2 + $0x30] sm:$0xff]
    %v54 = vld [vmem:[%s2 + $0x38] sm:$0xff]
    %v55 = vld [vmem:[%s4] sm:$0xf]
    %v57 = vlaneseq
    %v58 = vshrl.u32 %v57, 7
    %v59 = vsub.s32 0, %v58
    %v60 = vrot.slane %v55, %v59
    %v61 = vlaneseq
    %v62 = vshrl.u32 %v61, 7
    %v63 = vsub.s32 1, %v62
    %v64 = vrot.slane %v55, %v63
    %v65 = vlaneseq
    %v66 = vshrl.u32 %v65, 7
    %v67 = vsub.s32 2, %v66
    %v68 = vrot.slane %v55, %v67
    %v69 = vlaneseq
    %v70 = vshrl.u32 %v69, 7
    %v71 = vsub.s32 3, %v70
    %v72 = vrot.slane %v55, %v71
    %vm77 = vcmask 130048
    %v79 = vsel %vm77, %v39, 0
    %v82 = vsel %vm77, %v40, 0
    %v85 = vsel %vm77, %v41, 0
    %v88 = vsel %vm77, %v42, 0
    %v91 = vsel %vm77, %v43, 0
    %v94 = vsel %vm77, %v44, 0
    %v97 = vsel %vm77, %v45, 0
    %v100 = vsel %vm77, %v46, 0
    %102 = vmatprep.subr.mxu0 %v48
    %103 = vmatpush1.msra.mxu0 %v47
    %104 = vmatprep.subr.mxu0 %v52
    %105 = vmatpush1.msra.mxu0 %v51
    %106 = vmatprep.subr.mxu0 0.0
    %107 = vmatpush1.msra.mxu0 0.0
    %108 = vmatprep.subr.mxu0 0.0
    %109 = vmatpush1.msra.mxu0 0.0
    %110 = vmatprep.subr.mxu0 0.0
    %111 = vmatpush1.msra.mxu0 0.0
    %112 = vmatprep.subr.mxu0 0.0
    %113 = vmatpush1.msra.mxu0 0.0
    %114 = vmatprep.subr.mxu0 0.0
    %115 = vmatpush1.msra.mxu0 0.0
    %116 = vmatprep.subr.mxu0 0.0
    %117 = vmatpush1.msra.mxu0 0.0
    %118 = vmatprep.subr.mxu0 0.0
    %119 = vmatpush1.msra.mxu0 0.0
    %120 = vmatprep.subr.mxu0 0.0
    %121 = vmatpush1.msra.mxu0 0.0
    %122 = vmatprep.subr.mxu0 0.0
    %123 = vmatpush1.msra.mxu0 0.0
    %124 = vmatprep.subr.mxu0 0.0
    %125 = vmatpush1.msra.mxu0 0.0
    %126 = vmatprep.subr.mxu0 0.0
    %127 = vmatpush1.msra.mxu0 0.0
    %128 = vmatprep.subr.mxu0 0.0
    %129 = vmatpush1.msra.mxu0 0.0
    %130 = vmatprep.subr.mxu0 0.0
    %131 = vmatpush1.msra.mxu0 0.0
    %132 = vmatprep.subr.mxu0 0.0
    %133 = vmatpush1.msra.mxu0 0.0
    %134 = vmatprep.subr.mxu0 0.0
    %135 = vmatpush1.msra.mxu0 0.0
    %136 = vmatprep.subr.mxu0 0.0
    %137 = vmatpush1.msra.mxu0 0.0
    %138 = vmatprep.subr.mxu0 0.0
    %139 = vmatpush1.msra.mxu0 0.0
    %140 = vmatprep.subr.mxu0 0.0
    %141 = vmatpush1.msra.mxu0 0.0
    %142 = vmatprep.subr.mxu0 0.0
    %143 = vmatpush1.msra.mxu0 0.0
    %144 = vmatprep.subr.mxu0 0.0
    %145 = vmatpush1.msra.mxu0 0.0
    %146 = vmatprep.subr.mxu0 0.0
    %147 = vmatpush1.msra.mxu0 0.0
    %148 = vmatprep.subr.mxu0 0.0
    %149 = vmatpush1.msra.mxu0 0.0
    %150 = vmatprep.subr.mxu0 0.0
    %151 = vmatpush1.msra.mxu0 0.0
    %152 = vmatprep.subr.mxu0 0.0
    %153 = vmatpush1.msra.mxu0 0.0
    %154 = vmatprep.subr.mxu0 0.0
    %155 = vmatpush1.msra.mxu0 0.0
    %156 = vmatprep.subr.mxu0 0.0
    %157 = vmatpush1.msra.mxu0 0.0
    %158 = vmatprep.subr.mxu0 0.0
    %159 = vmatpush1.msra.mxu0 0.0
    %160 = vmatprep.subr.mxu0 0.0
    %161 = vmatpush1.msra.mxu0 0.0
    %162 = vmatprep.subr.mxu0 0.0
    %163 = vmatpush1.msra.mxu0 0.0
    %164 = vmatprep.subr.mxu0 0.0
    %165 = vmatpush1.msra.mxu0 0.0
    %166 = vmatprep.mubr.f32.mxu0 0.0
    %167 = vmatmul.mubr.f32.gmra.mrb[0].mxu0 %v79
    %v168 = vpop.f32.mrb[0].mxu0
    %v169 = vadd.f32 %v60, %v168
    %v170 = vpop.f32.mrb[0].mxu0
    %v171 = vadd.f32 %v64, %v170
    %172 = vmatprep.mubr.f32.mxu0 0.0
    %173 = vmatmul.mubr.f32.gmra.mrb[0].mxu0 %v82
    %v174 = vpop.f32.mrb[0].mxu0
    %v175 = vadd.f32 %v60, %v174
    %v176 = vpop.f32.mrb[0].mxu0
    %v177 = vadd.f32 %v64, %v176
    %178 = vmatprep.mubr.f32.mxu0 0.0
    %179 = vmatmul.mubr.f32.gmra.mrb[0].mxu0 %v85
    %v180 = vpop.f32.mrb[0].mxu0
    %v181 = vadd.f32 %v60, %v180
    %v182 = vpop.f32.mrb[0].mxu0
    %v183 = vadd.f32 %v64, %v182
    %184 = vmatprep.mubr.f32.mxu0 0.0
    %185 = vmatmul.mubr.f32.gmra.mrb[0].mxu0 %v88
    %v186 = vpop.f32.mrb[0].mxu0
    %v187 = vadd.f32 %v60, %v186
    %v188 = vpop.f32.mrb[0].mxu0
    %v189 = vadd.f32 %v64, %v188
    %190 = vmatprep.mubr.f32.mxu0 0.0
    %191 = vmatmul.mubr.f32.gmra.mrb[0].mxu0 %v91
    %v192 = vpop.f32.mrb[0].mxu0
    %v193 = vadd.f32 %v60, %v192
    %v194 = vpop.f32.mrb[0].mxu0
    %v195 = vadd.f32 %v64, %v194
    %196 = vmatprep.mubr.f32.mxu0 0.0
    %197 = vmatmul.mubr.f32.gmra.mrb[0].mxu0 %v94
    %v198 = vpop.f32.mrb[0].mxu0
    %v199 = vadd.f32 %v60, %v198
    %v200 = vpop.f32.mrb[0].mxu0
    %v201 = vadd.f32 %v64, %v200
    %202 = vmatprep.mubr.f32.mxu0 0.0
    %203 = vmatmul.mubr.f32.gmra.mrb[0].mxu0 %v97
    %v204 = vpop.f32.mrb[0].mxu0
    %v205 = vadd.f32 %v60, %v204
    %v206 = vpop.f32.mrb[0].mxu0
    %v207 = vadd.f32 %v64, %v206
    %208 = vmatprep.mubr.f32.mxu0 0.0
    %209 = vmatmul.mubr.f32.gmra.mrb[0].mxu0 %v100
    %v210 = vpop.f32.mrb[0].mxu0
    %v211 = vadd.f32 %v60, %v210
    %v212 = vpop.f32.mrb[0].mxu0
    %v213 = vadd.f32 %v64, %v212
    %214 = vdwg.mxu0
    %215 = vmatprep.subr.mxu0 %v50
    %216 = vmatpush1.msra.mxu0 %v49
    %217 = vmatprep.subr.mxu0 %v54
    %218 = vmatpush1.msra.mxu0 %v53
    %219 = vmatprep.subr.mxu0 0.0
    %220 = vmatpush1.msra.mxu0 0.0
    %221 = vmatprep.subr.mxu0 0.0
    %222 = vmatpush1.msra.mxu0 0.0
    %223 = vmatprep.subr.mxu0 0.0
    %224 = vmatpush1.msra.mxu0 0.0
    %225 = vmatprep.subr.mxu0 0.0
    %226 = vmatpush1.msra.mxu0 0.0
    %227 = vmatprep.subr.mxu0 0.0
    %228 = vmatpush1.msra.mxu0 0.0
    %229 = vmatprep.subr.mxu0 0.0
    %230 = vmatpush1.msra.mxu0 0.0
    %231 = vmatprep.subr.mxu0 0.0
    %232 = vmatpush1.msra.mxu0 0.0
    %233 = vmatprep.subr.mxu0 0.0
    %234 = vmatpush1.msra.mxu0 0.0
    %235 = vmatprep.subr.mxu0 0.0
    %236 = vmatpush1.msra.mxu0 0.0
    %237 = vmatprep.subr.mxu0 0.0
    %238 = vmatpush1.msra.mxu0 0.0
    %239 = vmatprep.subr.mxu0 0.0
    %240 = vmatpush1.msra.mxu0 0.0
    %241 = vmatprep.subr.mxu0 0.0
    %242 = vmatpush1.msra.mxu0 0.0
    %243 = vmatprep.subr.mxu0 0.0
    %244 = vmatpush1.msra.mxu0 0.0
    %245 = vmatprep.subr.mxu0 0.0
    %246 = vmatpush1.msra.mxu0 0.0
    %247 = vmatprep.subr.mxu0 0.0
    %248 = vmatpush1.msra.mxu0 0.0
    %249 = vmatprep.subr.mxu0 0.0
    %250 = vmatpush1.msra.mxu0 0.0
    %251 = vmatprep.subr.mxu0 0.0
    %252 = vmatpush1.msra.mxu0 0.0
    %253 = vmatprep.subr.mxu0 0.0
    %254 = vmatpush1.msra.mxu0 0.0
    %255 = vmatprep.subr.mxu0 0.0
    %256 = vmatpush1.msra.mxu0 0.0
    %257 = vmatprep.subr.mxu0 0.0
    %258 = vmatpush1.msra.mxu0 0.0
    %259 = vmatprep.subr.mxu0 0.0
    %260 = vmatpush1.msra.mxu0 0.0
    %261 = vmatprep.subr.mxu0 0.0
    %262 = vmatpush1.msra.mxu0 0.0
    %263 = vmatprep.subr.mxu0 0.0
    %264 = vmatpush1.msra.mxu0 0.0
    %265 = vmatprep.subr.mxu0 0.0
    %266 = vmatpush1.msra.mxu0 0.0
    %267 = vmatprep.subr.mxu0 0.0
    %268 = vmatpush1.msra.mxu0 0.0
    %269 = vmatprep.subr.mxu0 0.0
    %270 = vmatpush1.msra.mxu0 0.0
    %271 = vmatprep.subr.mxu0 0.0
    %272 = vmatpush1.msra.mxu0 0.0
    %273 = vmatprep.subr.mxu0 0.0
    %274 = vmatpush1.msra.mxu0 0.0
    %275 = vmatprep.subr.mxu0 0.0
    %276 = vmatpush1.msra.mxu0 0.0
    %277 = vmatprep.subr.mxu0 0.0
    %278 = vmatpush1.msra.mxu0 0.0
    %279 = vmatprep.mubr.f32.mxu0 0.0
    %280 = vmatmul.mubr.f32.gmra.mrb[0].mxu0 %v79
    %v281 = vpop.f32.mrb[0].mxu0
    %v282 = vadd.f32 %v68, %v281
    %v283 = vpop.f32.mrb[0].mxu0
    %v284 = vadd.f32 %v72, %v283
    %285 = vmatprep.mubr.f32.mxu0 0.0
    %286 = vmatmul.mubr.f32.gmra.mrb[0].mxu0 %v82
    %v287 = vpop.f32.mrb[0].mxu0
    %v288 = vadd.f32 %v68, %v287
    %v289 = vpop.f32.mrb[0].mxu0
    %v290 = vadd.f32 %v72, %v289
    %291 = vmatprep.mubr.f32.mxu0 0.0
    %292 = vmatmul.mubr.f32.gmra.mrb[0].mxu0 %v85
    %v293 = vpop.f32.mrb[0].mxu0
    %v294 = vadd.f32 %v68, %v293
    %v295 = vpop.f32.mrb[0].mxu0
    %v296 = vadd.f32 %v72, %v295
    %297 = vmatprep.mubr.f32.mxu0 0.0
    %298 = vmatmul.mubr.f32.gmra.mrb[0].mxu0 %v88
    %v299 = vpop.f32.mrb[0].mxu0
    %v300 = vadd.f32 %v68, %v299
    %v301 = vpop.f32.mrb[0].mxu0
    %v302 = vadd.f32 %v72, %v301
    %303 = vmatprep.mubr.f32.mxu0 0.0
    %304 = vmatmul.mubr.f32.gmra.mrb[0].mxu0 %v91
    %v305 = vpop.f32.mrb[0].mxu0
    %v306 = vadd.f32 %v68, %v305
    %v307 = vpop.f32.mrb[0].mxu0
    %v308 = vadd.f32 %v72, %v307
    %309 = vmatprep.mubr.f32.mxu0 0.0
    %310 = vmatmul.mubr.f32.gmra.mrb[0].mxu0 %v94
    %v311 = vpop.f32.mrb[0].mxu0
    %v312 = vadd.f32 %v68, %v311
    %v313 = vpop.f32.mrb[0].mxu0
    %v314 = vadd.f32 %v72, %v313
    %315 = vmatprep.mubr.f32.mxu0 0.0
    %316 = vmatmul.mubr.f32.gmra.mrb[0].mxu0 %v97
    %v317 = vpop.f32.mrb[0].mxu0
    %v318 = vadd.f32 %v68, %v317
    %v319 = vpop.f32.mrb[0].mxu0
    %v320 = vadd.f32 %v72, %v319
    %321 = vmatprep.mubr.f32.mxu0 0.0
    %322 = vmatmul.mubr.f32.gmra.mrb[0].mxu0 %v100
    %v323 = vpop.f32.mrb[0].mxu0
    %v324 = vadd.f32 %v68, %v323
    %v325 = vpop.f32.mrb[0].mxu0
    %v326 = vadd.f32 %v72, %v325
    %327 = vdwg.mxu0
    %328 = vst [vmem:[#allocation2] sm:$0xff] %v169
    %329 = vst [vmem:[#allocation2 + $0x8] sm:$0xff] %v171
    %330 = vst [vmem:[#allocation2 + $0x10] sm:$0xff] %v282
    %331 = vst [vmem:[#allocation2 + $0x18] sm:$0xff] %v284
    %332 = vst [vmem:[#allocation2 + $0x20] sm:$0xff] %v175
    %333 = vst [vmem:[#allocation2 + $0x28] sm:$0xff] %v177
    %334 = vst [vmem:[#allocation2 + $0x30] sm:$0xff] %v288
    %335 = vst [vmem:[#allocation2 + $0x38] sm:$0xff] %v290
    %336 = vst [vmem:[#allocation2 + $0x40] sm:$0xff] %v181
    %337 = vst [vmem:[#allocation2 + $0x48] sm:$0xff] %v183
    %338 = vst [vmem:[#allocation2 + $0x50] sm:$0xff] %v294
    %339 = vst [vmem:[#allocation2 + $0x58] sm:$0xff] %v296
    %340 = vst [vmem:[#allocation2 + $0x60] sm:$0xff] %v187
    %341 = vst [vmem:[#allocation2 + $0x68] sm:$0xff] %v189
    %342 = vst [vmem:[#allocation2 + $0x70] sm:$0xff] %v300
    %343 = vst [vmem:[#allocation2 + $0x78] sm:$0xff] %v302
    %344 = vst [vmem:[#allocation2 + $0x80] sm:$0xff] %v193
    %345 = vst [vmem:[#allocation2 + $0x88] sm:$0xff] %v195
    %346 = vst [vmem:[#allocation2 + $0x90] sm:$0xff] %v306
    %347 = vst [vmem:[#allocation2 + $0x98] sm:$0xff] %v308
    %348 = vst [vmem:[#allocation2 + $0xa0] sm:$0xff] %v199
    %349 = vst [vmem:[#allocation2 + $0xa8] sm:$0xff] %v201
    %350 = vst [vmem:[#allocation2 + $0xb0] sm:$0xff] %v312
    %351 = vst [vmem:[#allocation2 + $0xb8] sm:$0xff] %v314
    %352 = vst [vmem:[#allocation2 + $0xc0] sm:$0xff] %v205
    %353 = vst [vmem:[#allocation2 + $0xc8] sm:$0xff] %v207
    %354 = vst [vmem:[#allocation2 + $0xd0] sm:$0xff] %v318
    %355 = vst [vmem:[#allocation2 + $0xd8] sm:$0xff] %v320
    %356 = vst [vmem:[#allocation2 + $0xe0] sm:$0xff] %v211
    %357 = vst [vmem:[#allocation2 + $0xe8] sm:$0xff] %v213
    %358 = vst [vmem:[#allocation2 + $0xf0] sm:$0xff] %v324
    %359 = vst [vmem:[#allocation2 + $0xf8] sm:$0xff] %v326
    %360 = vst [vmem:[#allocation3] sm:$0xff] 0.0
    %361 = vst [vmem:[#allocation4] sm:$0xff] 0.0
    %v362 = vld [vmem:[%s1] sm:$0xff]
    %s363 = smul.u32 0, 4
    %s364 = smul.addr %s363, 8
    %s365 = scalar_lea.vmem [#allocation2], %s364
    %v366 = vld [vmem:[%s365] sm:$0xff]
    %v367 = vld [vmem:[%s365 + $0x8] sm:$0xff]
    %v368 = vld [vmem:[%s365 + $0x10] sm:$0xff]
    %v369 = vld [vmem:[%s365 + $0x18] sm:$0xff]
    %v370 = vld [vmem:[#allocation3] sm:$0xff]
    %v371 = vld [vmem:[#allocation5] sm:$0xff]
    %v372 = vld [vmem:[#allocation5 + $0x8] sm:$0xff]
    %v373 = vld [vmem:[#allocation5 + $0x10] sm:$0xff]
    %v374 = vld [vmem:[#allocation5 + $0x18] sm:$0xff]
    %v375 = vld [vmem:[#allocation5 + $0x20] sm:$0xff]
    %v376 = vld [vmem:[#allocation5 + $0x28] sm:$0xff]
    %v377 = vld [vmem:[#allocation5 + $0x30] sm:$0xff]
    %v378 = vld [vmem:[#allocation5 + $0x38] sm:$0xff]
    %v379 = vld [vmem:[#allocation5 + $0x40] sm:$0xff]
    %v380 = vld [vmem:[#allocation5 + $0x48] sm:$0xff]
    %v381 = vld [vmem:[#allocation5 + $0x50] sm:$0xff]
    %v382 = vld [vmem:[#allocation5 + $0x58] sm:$0xff]
    %v383 = vld [vmem:[#allocation5 + $0x60] sm:$0xff]
    %v384 = vld [vmem:[#allocation5 + $0x68] sm:$0xff]
    %v385 = vld [vmem:[#allocation5 + $0x70] sm:$0xff]
    %v386 = vld [vmem:[#allocation5 + $0x78] sm:$0xff]
    %v387 = vld [vmem:[#allocation5 + $0x80] sm:$0xff]
    %v388 = vld [vmem:[#allocation5 + $0x88] sm:$0xff]
    %v389 = vld [vmem:[#allocation5 + $0x90] sm:$0xff]
    %v390 = vld [vmem:[#allocation5 + $0x98] sm:$0xff]
    %v391 = vld [vmem:[#allocation5 + $0xa0] sm:$0xff]
    %v392 = vld [vmem:[#allocation5 + $0xa8] sm:$0xff]
    %v393 = vld [vmem:[#allocation5 + $0xb0] sm:$0xff]
    %v394 = vld [vmem:[#allocation5 + $0xb8] sm:$0xff]
    %v395 = vld [vmem:[#allocation5 + $0xc0] sm:$0xff]
    %v396 = vld [vmem:[#allocation5 + $0xc8] sm:$0xff]
    %v397 = vld [vmem:[#allocation5 + $0xd0] sm:$0xff]
    %v398 = vld [vmem:[#allocation5 + $0xd8] sm:$0xff]
    %v399 = vld [vmem:[#allocation5 + $0xe0] sm:$0xff]
    %v400 = vld [vmem:[#allocation5 + $0xe8] sm:$0xff]
    %v401 = vld [vmem:[#allocation5 + $0xf0] sm:$0xff]
    %v402 = vld [vmem:[#allocation5 + $0xf8] sm:$0xff]
    %v403 = vld [vmem:[#allocation5 + $0x100] sm:$0xff]
    %v404 = vld [vmem:[#allocation5 + $0x108] sm:$0xff]
    %v405 = vld [vmem:[#allocation5 + $0x110] sm:$0xff]
    %v406 = vld [vmem:[#allocation5 + $0x118] sm:$0xff]
    %v407 = vld [vmem:[#allocation5 + $0x120] sm:$0xff]
    %v408 = vld [vmem:[#allocation5 + $0x128] sm:$0xff]
    %v409 = vld [vmem:[#allocation5 + $0x130] sm:$0xff]
    %v410 = vld [vmem:[#allocation5 + $0x138] sm:$0xff]
    %v411 = vld [vmem:[#allocation5 + $0x140] sm:$0xff]
    %v412 = vld [vmem:[#allocation5 + $0x148] sm:$0xff]
    %v413 = vld [vmem:[#allocation5 + $0x150] sm:$0xff]
    %v414 = vld [vmem:[#allocation5 + $0x158] sm:$0xff]
    %v415 = vld [vmem:[#allocation5 + $0x160] sm:$0xff]
    %v416 = vld [vmem:[#allocation5 + $0x168] sm:$0xff]
    %v417 = vld [vmem:[#allocation5 + $0x170] sm:$0xff]
    %v418 = vld [vmem:[#allocation5 + $0x178] sm:$0xff]
    %v419 = vld [vmem:[#allocation5 + $0x180] sm:$0xff]
    %v420 = vld [vmem:[#allocation5 + $0x188] sm:$0xff]
    %v421 = vld [vmem:[#allocation5 + $0x190] sm:$0xff]
    %v422 = vld [vmem:[#allocation5 + $0x198] sm:$0xff]
    %v423 = vld [vmem:[#allocation5 + $0x1a0] sm:$0xff]
    %v424 = vld [vmem:[#allocation5 + $0x1a8] sm:$0xff]
    %v425 = vld [vmem:[#allocation5 + $0x1b0] sm:$0xff]
    %v426 = vld [vmem:[#allocation5 + $0x1b8] sm:$0xff]
    %v427 = vld [vmem:[#allocation5 + $0x1c0] sm:$0xff]
    %v428 = vld [vmem:[#allocation5 + $0x1c8] sm:$0xff]
    %v429 = vld [vmem:[#allocation5 + $0x1d0] sm:$0xff]
    %v430 = vld [vmem:[#allocation5 + $0x1d8] sm:$0xff]
    %v431 = vld [vmem:[#allocation5 + $0x1e0] sm:$0xff]
    %v432 = vld [vmem:[#allocation5 + $0x1e8] sm:$0xff]
    %v433 = vld [vmem:[#allocation5 + $0x1f0] sm:$0xff]
    %v434 = vld [vmem:[#allocation5 + $0x1f8] sm:$0xff]
    %435 = vmatprep.subr.mxu0 %v372
    %436 = vmatpush1.msra.mxu0 %v371
    %437 = vmatprep.subr.mxu0 %v376
    %438 = vmatpush1.msra.mxu0 %v375
    %439 = vmatprep.subr.mxu0 %v380
    %440 = vmatpush1.msra.mxu0 %v379
    %441 = vmatprep.subr.mxu0 %v384
    %442 = vmatpush1.msra.mxu0 %v383
    %443 = vmatprep.subr.mxu0 %v388
    %444 = vmatpush1.msra.mxu0 %v387
    %445 = vmatprep.subr.mxu0 %v392
    %446 = vmatpush1.msra.mxu0 %v391
    %447 = vmatprep.subr.mxu0 %v396
    %448 = vmatpush1.msra.mxu0 %v395
    %449 = vmatprep.subr.mxu0 %v400
    %450 = vmatpush1.msra.mxu0 %v399
    %451 = vmatprep.subr.mxu0 %v404
    %452 = vmatpush1.msra.mxu0 %v403
    %453 = vmatprep.subr.mxu0 %v408
    %454 = vmatpush1.msra.mxu0 %v407
    %455 = vmatprep.subr.mxu0 %v412
    %456 = vmatpush1.msra.mxu0 %v411
    %457 = vmatprep.subr.mxu0 %v416
    %458 = vmatpush1.msra.mxu0 %v415
    %459 = vmatprep.subr.mxu0 %v420
    %460 = vmatpush1.msra.mxu0 %v419
    %461 = vmatprep.subr.mxu0 %v424
    %462 = vmatpush1.msra.mxu0 %v423
    %463 = vmatprep.subr.mxu0 %v428
    %464 = vmatpush1.msra.mxu0 %v427
    %465 = vmatprep.subr.mxu0 %v432
    %466 = vmatpush1.msra.mxu0 %v431
    %467 = vmatprep.subr.mxu0 0.0
    %468 = vmatpush1.msra.mxu0 0.0
    %469 = vmatprep.subr.mxu0 0.0
    %470 = vmatpush1.msra.mxu0 0.0
    %471 = vmatprep.subr.mxu0 0.0
    %472 = vmatpush1.msra.mxu0 0.0
    %473 = vmatprep.subr.mxu0 0.0
    %474 = vmatpush1.msra.mxu0 0.0
    %475 = vmatprep.subr.mxu0 0.0
    %476 = vmatpush1.msra.mxu0 0.0
    %477 = vmatprep.subr.mxu0 0.0
    %478 = vmatpush1.msra.mxu0 0.0
    %479 = vmatprep.subr.mxu0 0.0
    %480 = vmatpush1.msra.mxu0 0.0
    %481 = vmatprep.subr.mxu0 0.0
    %482 = vmatpush1.msra.mxu0 0.0
    %483 = vmatprep.subr.mxu0 0.0
    %484 = vmatpush1.msra.mxu0 0.0
    %485 = vmatprep.subr.mxu0 0.0
    %486 = vmatpush1.msra.mxu0 0.0
    %487 = vmatprep.subr.mxu0 0.0
    %488 = vmatpush1.msra.mxu0 0.0
    %489 = vmatprep.subr.mxu0 0.0
    %490 = vmatpush1.msra.mxu0 0.0
    %491 = vmatprep.subr.mxu0 0.0
    %492 = vmatpush1.msra.mxu0 0.0
    %493 = vmatprep.subr.mxu0 0.0
    %494 = vmatpush1.msra.mxu0 0.0
    %495 = vmatprep.subr.mxu0 0.0
    %496 = vmatpush1.msra.mxu0 0.0
    %497 = vmatprep.subr.mxu0 0.0
    %498 = vmatpush1.msra.mxu0 0.0
    %499 = vmatprep.mubr.f32.mxu0 0.0
    %500 = vmatmul.mubr.f32.gmra.mrb[0].mxu0 %v370
    %v501 = vpop.f32.mrb[0].mxu0
    %v502 = vadd.f32 0.0, %v501
    %v503 = vpop.f32.mrb[0].mxu0
    %v504 = vadd.f32 0.0, %v503
    %505 = vdwg.mxu0
    %506 = vmatprep.subr.mxu0 %v374
    %507 = vmatpush1.msra.mxu0 %v373
    %508 = vmatprep.subr.mxu0 %v378
    %509 = vmatpush1.msra.mxu0 %v377
    %510 = vmatprep.subr.mxu0 %v382
    %511 = vmatpush1.msra.mxu0 %v381
    %512 = vmatprep.subr.mxu0 %v386
    %513 = vmatpush1.msra.mxu0 %v385
    %514 = vmatprep.subr.mxu0 %v390
    %515 = vmatpush1.msra.mxu0 %v389
    %516 = vmatprep.subr.mxu0 %v394
    %517 = vmatpush1.msra.mxu0 %v393
    %518 = vmatprep.subr.mxu0 %v398
    %519 = vmatpush1.msra.mxu0 %v397
    %520 = vmatprep.subr.mxu0 %v402
    %521 = vmatpush1.msra.mxu0 %v401
    %522 = vmatprep.subr.mxu0 %v406
    %523 = vmatpush1.msra.mxu0 %v405
    %524 = vmatprep.subr.mxu0 %v410
    %525 = vmatpush1.msra.mxu0 %v409
    %526 = vmatprep.subr.mxu0 %v414
    %527 = vmatpush1.msra.mxu0 %v413
    %528 = vmatprep.subr.mxu0 %v418
    %529 = vmatpush1.msra.mxu0 %v417
    %530 = vmatprep.subr.mxu0 %v422
    %531 = vmatpush1.msra.mxu0 %v421
    %532 = vmatprep.subr.mxu0 %v426
    %533 = vmatpush1.msra.mxu0 %v425
    %534 = vmatprep.subr.mxu0 %v430
    %535 = vmatpush1.msra.mxu0 %v429
    %536 = vmatprep.subr.mxu0 %v434
    %537 = vmatpush1.msra.mxu0 %v433
    %538 = vmatprep.subr.mxu0 0.0
    %539 = vmatpush1.msra.mxu0 0.0
    %540 = vmatprep.subr.mxu0 0.0
    %541 = vmatpush1.msra.mxu0 0.0
    %542 = vmatprep.subr.mxu0 0.0
    %543 = vmatpush1.msra.mxu0 0.0
    %544 = vmatprep.subr.mxu0 0.0
    %545 = vmatpush1.msra.mxu0 0.0
    %546 = vmatprep.subr.mxu0 0.0
    %547 = vmatpush1.msra.mxu0 0.0
    %548 = vmatprep.subr.mxu0 0.0
    %549 = vmatpush1.msra.mxu0 0.0
    %550 = vmatprep.subr.mxu0 0.0
    %551 = vmatpush1.msra.mxu0 0.0
    %552 = vmatprep.subr.mxu0 0.0
    %553 = vmatpush1.msra.mxu0 0.0
    %554 = vmatprep.subr.mxu0 0.0
    %555 = vmatpush1.msra.mxu0 0.0
    %556 = vmatprep.subr.mxu0 0.0
    %557 = vmatpush1.msra.mxu0 0.0
    %558 = vmatprep.subr.mxu0 0.0
    %559 = vmatpush1.msra.mxu0 0.0
    %560 = vmatprep.subr.mxu0 0.0
    %561 = vmatpush1.msra.mxu0 0.0
    %562 = vmatprep.subr.mxu0 0.0
    %563 = vmatpush1.msra.mxu0 0.0
    %564 = vmatprep.subr.mxu0 0.0
    %565 = vmatpush1.msra.mxu0 0.0
    %566 = vmatprep.subr.mxu0 0.0
    %567 = vmatpush1.msra.mxu0 0.0
    %568 = vmatprep.subr.mxu0 0.0
    %569 = vmatpush1.msra.mxu0 0.0
    %570 = vmatprep.mubr.f32.mxu0 0.0
    %571 = vmatmul.mubr.f32.gmra.mrb[0].mxu0 %v370
    %v572 = vpop.f32.mrb[0].mxu0
    %v573 = vadd.f32 0.0, %v572
    %v574 = vpop.f32.mrb[0].mxu0
    %v575 = vadd.f32 0.0, %v574
    %576 = vdwg.mxu0
    %v577 = vadd.f32 %v366, %v502
    %v578 = vadd.f32 %v367, %v504
    %v579 = vadd.f32 %v368, %v573
    %v580 = vadd.f32 %v369, %v575
    %v581 = vxor.u32 %v577, 2147483648
    %v582 = vmul.f32 %v581, 1.442695
    %v583 = vpow.pop %v582
    %v584 = vadd.f32 %v583, 1.0
    %v585 = vrcp.pop %v584
    %v586 = vmul.f32 1.0, %v585
    %v587 = vxor.u32 %v578, 2147483648
    %v588 = vmul.f32 %v587, 1.442695
    %v589 = vpow.pop %v588
    %v590 = vadd.f32 %v589, 1.0
    %v591 = vrcp.pop %v590
    %v592 = vmul.f32 1.0, %v591
    %v593 = vxor.u32 %v579, 2147483648
    %v594 = vmul.f32 %v593, 1.442695
    %v595 = vpow.pop %v594
    %v596 = vadd.f32 %v595, 1.0
    %v597 = vrcp.pop %v596
    %v598 = vmul.f32 1.0, %v597
    %v599 = vtanh.pop %v580
    %v600 = vld [vmem:[#allocation4] sm:$0xff]
    %v601 = vmul.f32 %v600, %v592
    %v602 = vmul.f32 %v586, %v599
    %v603 = vadd.f32 %v601, %v602
    %v604 = vtanh.pop %v603
    %v605 = vmul.f32 %v598, %v604
    %vm606 = vcmp.gt.s32.totalorder %v362, 0
    %v607 = vsel %vm606, 1, 0
    %608 = vset.pattern.permute.xlu0 0
    %609 = vperm.xlu0 %608, %v607
    %v610 = vpop.permute.xlu0 %609
    %vm611 = vcmp.eq.s32.totalorder %v610, 1
    %v612 = vsel %vm611, %v605, %v370
    %613 = vst [vmem:[#allocation3] sm:$0xff] %v612
    %v614 = vld [vmem:[#allocation4] sm:$0xff]
    %v615 = vsel %vm611, %v603, %v614
    %616 = vst [vmem:[#allocation4] sm:$0xff] %v615
    %v617 = vsel %vm611, %v605, 0.0
    %618 = vst [vmem:[#allocation8] sm:$0xff] %v617
    %s619 = smul.u32 1, 4
    %s620 = smul.addr %s619, 8
    %s621 = scalar_lea.vmem [#allocation2], %s620
    %v622 = vld [vmem:[%s621] sm:$0xff]
    %v623 = vld [vmem:[%s621 + $0x8] sm:$0xff]
    %v624 = vld [vmem:[%s621 + $0x10] sm:$0xff]
    %v625 = vld [vmem:[%s621 + $0x18] sm:$0xff]
    %v626 = vld [vmem:[#allocation3] sm:$0xff]
    %v627 = vld [vmem:[#allocation5] sm:$0xff]
    %v628 = vld [vmem:[#allocation5 + $0x8] sm:$0xff]
    %v629 = vld [vmem:[#allocation5 + $0x10] sm:$0xff]
    %v630 = vld [vmem:[#allocation5 + $0x18] sm:$0xff]
    %v631 = vld [vmem:[#allocation5 + $0x20] sm:$0xff]
    %v632 = vld [vmem:[#allocation5 + $0x28] sm:$0xff]
    %v633 = vld [vmem:[#allocation5 + $0x30] sm:$0xff]
    %v634 = vld [vmem:[#allocation5 + $0x38] sm:$0xff]
    %v635 = vld [vmem:[#allocation5 + $0x40] sm:$0xff]
    %v636 = vld [vmem:[#allocation5 + $0x48] sm:$0xff]
    %v637 = vld [vmem:[#allocation5 + $0x50] sm:$0xff]
    %v638 = vld [vmem:[#allocation5 + $0x58] sm:$0xff]
    %v639 = vld [vmem:[#allocation5 + $0x60] sm:$0xff]
    %v640 = vld [vmem:[#allocation5 + $0x68] sm:$0xff]
    %v641 = vld [vmem:[#allocation5 + $0x70] sm:$0xff]
    %v642 = vld [vmem:[#allocation5 + $0x78] sm:$0xff]
    %v643 = vld [vmem:[#allocation5 + $0x80] sm:$0xff]
    %v644 = vld [vmem:[#allocation5 + $0x88] sm:$0xff]
    %v645 = vld [vmem:[#allocation5 + $0x90] sm:$0xff]
    %v646 = vld [vmem:[#allocation5 + $0x98] sm:$0xff]
    %v647 = vld [vmem:[#allocation5 + $0xa0] sm:$0xff]
    %v648 = vld [vmem:[#allocation5 + $0xa8] sm:$0xff]
    %v649 = vld [vmem:[#allocation5 + $0xb0] sm:$0xff]
    %v650 = vld [vmem:[#allocation5 + $0xb8] sm:$0xff]
    %v651 = vld [vmem:[#allocation5 + $0xc0] sm:$0xff]
    %v652 = vld [vmem:[#allocation5 + $0xc8] sm:$0xff]
    %v653 = vld [vmem:[#allocation5 + $0xd0] sm:$0xff]
    %v654 = vld [vmem:[#allocation5 + $0xd8] sm:$0xff]
    %v655 = vld [vmem:[#allocation5 + $0xe0] sm:$0xff]
    %v656 = vld [vmem:[#allocation5 + $0xe8] sm:$0xff]
    %v657 = vld [vmem:[#allocation5 + $0xf0] sm:$0xff]
    %v658 = vld [vmem:[#allocation5 + $0xf8] sm:$0xff]
    %v659 = vld [vmem:[#allocation5 + $0x100] sm:$0xff]
    %v660 = vld [vmem:[#allocation5 + $0x108] sm:$0xff]
    %v661 = vld [vmem:[#allocation5 + $0x110] sm:$0xff]
    %v662 = vld [vmem:[#allocation5 + $0x118] sm:$0xff]
    %v663 = vld [vmem:[#allocation5 + $0x120] sm:$0xff]
    %v664 = vld [vmem:[#allocation5 + $0x128] sm:$0xff]
    %v665 = vld [vmem:[#allocation5 + $0x130] sm:$0xff]
    %v666 = vld [vmem:[#allocation5 + $0x138] sm:$0xff]
    %v667 = vld [vmem:[#allocation5 + $0x140] sm:$0xff]
    %v668 = vld [vmem:[#allocation5 + $0x148] sm:$0xff]
    %v669 = vld [vmem:[#allocation5 + $0x150] sm:$0xff]
    %v670 = vld [vmem:[#allocation5 + $0x158] sm:$0xff]
    %v671 = vld [vmem:[#allocation5 + $0x160] sm:$0xff]
    %v672 = vld [vmem:[#allocation5 + $0x168] sm:$0xff]
    %v673 = vld [vmem:[#allocation5 + $0x170] sm:$0xff]
    %v674 = vld [vmem:[#allocation5 + $0x178] sm:$0xff]
    %v675 = vld [vmem:[#allocation5 + $0x180] sm:$0xff]
    %v676 = vld [vmem:[#allocation5 + $0x188] sm:$0xff]
    %v677 = vld [vmem:[#allocation5 + $0x190] sm:$0xff]
    %v678 = vld [vmem:[#allocation5 + $0x198] sm:$0xff]
    %v679 = vld [vmem:[#allocation5 + $0x1a0] sm:$0xff]
    %v680 = vld [vmem:[#allocation5 + $0x1a8] sm:$0xff]
    %v681 = vld [vmem:[#allocation5 + $0x1b0] sm:$0xff]
    %v682 = vld [vmem:[#allocation5 + $0x1b8] sm:$0xff]
    %v683 = vld [vmem:[#allocation5 + $0x1c0] sm:$0xff]
    %v684 = vld [vmem:[#allocation5 + $0x1c8] sm:$0xff]
    %v685 = vld [vmem:[#allocation5 + $0x1d0] sm:$0xff]
    %v686 = vld [vmem:[#allocation5 + $0x1d8] sm:$0xff]
    %v687 = vld [vmem:[#allocation5 + $0x1e0] sm:$0xff]
    %v688 = vld [vmem:[#allocation5 + $0x1e8] sm:$0xff]
    %v689 = vld [vmem:[#allocation5 + $0x1f0] sm:$0xff]
    %v690 = vld [vmem:[#allocation5 + $0x1f8] sm:$0xff]
    %691 = vmatprep.subr.mxu0 %v628
    %692 = vmatpush1.msra.mxu0 %v627
    %693 = vmatprep.subr.mxu0 %v632
    %694 = vmatpush1.msra.mxu0 %v631
    %695 = vmatprep.subr.mxu0 %v636
    %696 = vmatpush1.msra.mxu0 %v635
    %697 = vmatprep.subr.mxu0 %v640
    %698 = vmatpush1.msra.mxu0 %v639
    %699 = vmatprep.subr.mxu0 %v644
    %700 = vmatpush1.msra.mxu0 %v643
    %701 = vmatprep.subr.mxu0 %v648
    %702 = vmatpush1.msra.mxu0 %v647
    %703 = vmatprep.subr.mxu0 %v652
    %704 = vmatpush1.msra.mxu0 %v651
    %705 = vmatprep.subr.mxu0 %v656
    %706 = vmatpush1.msra.mxu0 %v655
    %707 = vmatprep.subr.mxu0 %v660
    %708 = vmatpush1.msra.mxu0 %v659
    %709 = vmatprep.subr.mxu0 %v664
    %710 = vmatpush1.msra.mxu0 %v663
    %711 = vmatprep.subr.mxu0 %v668
    %712 = vmatpush1.msra.mxu0 %v667
    %713 = vmatprep.subr.mxu0 %v672
    %714 = vmatpush1.msra.mxu0 %v671
    %715 = vmatprep.subr.mxu0 %v676
    %716 = vmatpush1.msra.mxu0 %v675
    %717 = vmatprep.subr.mxu0 %v680
    %718 = vmatpush1.msra.mxu0 %v679
    %719 = vmatprep.subr.mxu0 %v684
    %720 = vmatpush1.msra.mxu0 %v683
    %721 = vmatprep.subr.mxu0 %v688
    %722 = vmatpush1.msra.mxu0 %v687
    %723 = vmatprep.subr.mxu0 0.0
    %724 = vmatpush1.msra.mxu0 0.0
    %725 = vmatprep.subr.mxu0 0.0
    %726 = vmatpush1.msra.mxu0 0.0
    %727 = vmatprep.subr.mxu0 0.0
    %728 = vmatpush1.msra.mxu0 0.0
    %729 = vmatprep.subr.mxu0 0.0
    %730 = vmatpush1.msra.mxu0 0.0
    %731 = vmatprep.subr.mxu0 0.0
    %732 = vmatpush1.msra.mxu0 0.0
    %733 = vmatprep.subr.mxu0 0.0
    %734 = vmatpush1.msra.mxu0 0.0
    %735 = vmatprep.subr.mxu0 0.0
    %736 = vmatpush1.msra.mxu0 0.0
    %737 = vmatprep.subr.mxu0 0.0
    %738 = vmatpush1.msra.mxu0 0.0
    %739 = vmatprep.subr.mxu0 0.0
    %740 = vmatpush1.msra.mxu0 0.0
    %741 = vmatprep.subr.mxu0 0.0
    %742 = vmatpush1.msra.mxu0 0.0
    %743 = vmatprep.subr.mxu0 0.0
    %744 = vmatpush1.msra.mxu0 0.0
    %745 = vmatprep.subr.mxu0 0.0
    %746 = vmatpush1.msra.mxu0 0.0
    %747 = vmatprep.subr.mxu0 0.0
    %748 = vmatpush1.msra.mxu0 0.0
    %749 = vmatprep.subr.mxu0 0.0
    %750 = vmatpush1.msra.mxu0 0.0
    %751 = vmatprep.subr.mxu0 0.0
    %752 = vmatpush1.msra.mxu0 0.0
    %753 = vmatprep.subr.mxu0 0.0
    %754 = vmatpush1.msra.mxu0 0.0
    %755 = vmatprep.mubr.f32.mxu0 0.0
    %756 = vmatmul.mubr.f32.gmra.mrb[0].mxu0 %v626
    %v757 = vpop.f32.mrb[0].mxu0
    %v758 = vadd.f32 0.0, %v757
    %v759 = vpop.f32.mrb[0].mxu0
    %v760 = vadd.f32 0.0, %v759
    %761 = vdwg.mxu0
    %762 = vmatprep.subr.mxu0 %v630
    %763 = vmatpush1.msra.mxu0 %v629
    %764 = vmatprep.subr.mxu0 %v634
    %765 = vmatpush1.msra.mxu0 %v633
    %766 = vmatprep.subr.mxu0 %v638
    %767 = vmatpush1.msra.mxu0 %v637
    %768 = vmatprep.subr.mxu0 %v642
    %769 = vmatpush1.msra.mxu0 %v641
    %770 = vmatprep.subr.mxu0 %v646
    %771 = vmatpush1.msra.mxu0 %v645
    %772 = vmatprep.subr.mxu0 %v650
    %773 = vmatpush1.msra.mxu0 %v649
    %774 = vmatprep.subr.mxu0 %v654
    %775 = vmatpush1.msra.mxu0 %v653
    %776 = vmatprep.subr.mxu0 %v658
    %777 = vmatpush1.msra.mxu0 %v657
    %778 = vmatprep.subr.mxu0 %v662
    %779 = vmatpush1.msra.mxu0 %v661
    %780 = vmatprep.subr.mxu0 %v666
    %781 = vmatpush1.msra.mxu0 %v665
    %782 = vmatprep.subr.mxu0 %v670
    %783 = vmatpush1.msra.mxu0 %v669
    %784 = vmatprep.subr.mxu0 %v674
    %785 = vmatpush1.msra.mxu0 %v673
    %786 = vmatprep.subr.mxu0 %v678
    %787 = vmatpush1.msra.mxu0 %v677
    %788 = vmatprep.subr.mxu0 %v682
    %789 = vmatpush1.msra.mxu0 %v681
    %790 = vmatprep.subr.mxu0 %v686
    %791 = vmatpush1.msra.mxu0 %v685
    %792 = vmatprep.subr.mxu0 %v690
    %793 = vmatpush1.msra.mxu0 %v689
    %794 = vmatprep.subr.mxu0 0.0
    %795 = vmatpush1.msra.mxu0 0.0
    %796 = vmatprep.subr.mxu0 0.0
    %797 = vmatpush1.msra.mxu0 0.0
    %798 = vmatprep.subr.mxu0 0.0
    %799 = vmatpush1.msra.mxu0 0.0
    %800 = vmatprep.subr.mxu0 0.0
    %801 = vmatpush1.msra.mxu0 0.0
    %802 = vmatprep.subr.mxu0 0.0
    %803 = vmatpush1.msra.mxu0 0.0
    %804 = vmatprep.subr.mxu0 0.0
    %805 = vmatpush1.msra.mxu0 0.0
    %806 = vmatprep.subr.mxu0 0.0
    %807 = vmatpush1.msra.mxu0 0.0
    %808 = vmatprep.subr.mxu0 0.0
    %809 = vmatpush1.msra.mxu0 0.0
    %810 = vmatprep.subr.mxu0 0.0
    %811 = vmatpush1.msra.mxu0 0.0
    %812 = vmatprep.subr.mxu0 0.0
    %813 = vmatpush1.msra.mxu0 0.0
    %814 = vmatprep.subr.mxu0 0.0
    %815 = vmatpush1.msra.mxu0 0.0
    %816 = vmatprep.subr.mxu0 0.0
    %817 = vmatpush1.msra.mxu0 0.0
    %818 = vmatprep.subr.mxu0 0.0
    %819 = vmatpush1.msra.mxu0 0.0
    %820 = vmatprep.subr.mxu0 0.0
    %821 = vmatpush1.msra.mxu0 0.0
    %822 = vmatprep.subr.mxu0 0.0
    %823 = vmatpush1.msra.mxu0 0.0
    %824 = vmatprep.subr.mxu0 0.0
    %825 = vmatpush1.msra.mxu0 0.0
    %826 = vmatprep.mubr.f32.mxu0 0.0
    %827 = vmatmul.mubr.f32.gmra.mrb[0].mxu0 %v626
    %v828 = vpop.f32.mrb[0].mxu0
    %v829 = vadd.f32 0.0, %v828
    %v830 = vpop.f32.mrb[0].mxu0
    %v831 = vadd.f32 0.0, %v830
    %832 = vdwg.mxu0
    %v833 = vadd.f32 %v622, %v758
    %v834 = vadd.f32 %v623, %v760
    %v835 = vadd.f32 %v624, %v829
    %v836 = vadd.f32 %v625, %v831
    %v837 = vxor.u32 %v833, 2147483648
    %v838 = vmul.f32 %v837, 1.442695
    %v839 = vpow.pop %v838
    %v840 = vadd.f32 %v839, 1.0
    %v841 = vrcp.pop %v840
    %v842 = vmul.f32 1.0, %v841
    %v843 = vxor.u32 %v834, 2147483648
    %v844 = vmul.f32 %v843, 1.442695
    %v845 = vpow.pop %v844
    %v846 = vadd.f32 %v845, 1.0
    %v847 = vrcp.pop %v846
    %v848 = vmul.f32 1.0, %v847
    %v849 = vxor.u32 %v835, 2147483648
    %v850 = vmul.f32 %v849, 1.442695
    %v851 = vpow.pop %v850
    %v852 = vadd.f32 %v851, 1.0
    %v853 = vrcp.pop %v852
    %v854 = vmul.f32 1.0, %v853
    %v855 = vtanh.pop %v836
    %v856 = vld [vmem:[#allocation4] sm:$0xff]
    %v857 = vmul.f32 %v856, %v848
    %v858 = vmul.f32 %v842, %v855
    %v859 = vadd.f32 %v857, %v858
    %v860 = vtanh.pop %v859
    %v861 = vmul.f32 %v854, %v860
    %vm862 = vcmp.gt.s32.totalorder %v362, 1
    %v863 = vsel %vm862, 1, 0
    %864 = vset.pattern.permute.xlu0 0
    %865 = vperm.xlu0 %864, %v863
    %v866 = vpop.permute.xlu0 %865
    %vm867 = vcmp.eq.s32.totalorder %v866, 1
    %v868 = vsel %vm867, %v861, %v626
    %869 = vst [vmem:[#allocation3] sm:$0xff] %v868
    %v870 = vld [vmem:[#allocation4] sm:$0xff]
    %v871 = vsel %vm867, %v859, %v870
    %872 = vst [vmem:[#allocation4] sm:$0xff] %v871
    %v873 = vsel %vm867, %v861, 0.0
    %s874 = scalar_lea.vmem [#allocation8], 8
    %875 = vst [vmem:[%s874] sm:$0xff] %v873
    %s876 = smul.u32 2, 4
    %s877 = smul.addr %s876, 8
    %s878 = scalar_lea.vmem [#allocation2], %s877
    %v879 = vld [vmem:[%s878] sm:$0xff]
    %v880 = vld [vmem:[%s878 + $0x8] sm:$0xff]
    %v881 = vld [vmem:[%s878 + $0x10] sm:$0xff]
    %v882 = vld [vmem:[%s878 + $0x18] sm:$0xff]
    %v883 = vld [vmem:[#allocation3] sm:$0xff]
    %v884 = vld [vmem:[#allocation5] sm:$0xff]
    %v885 = vld [vmem:[#allocation5 + $0x8] sm:$0xff]
    %v886 = vld [vmem:[#allocation5 + $0x10] sm:$0xff]
    %v887 = vld [vmem:[#allocation5 + $0x18] sm:$0xff]
    %v888 = vld [vmem:[#allocation5 + $0x20] sm:$0xff]
    %v889 = vld [vmem:[#allocation5 + $0x28] sm:$0xff]
    %v890 = vld [vmem:[#allocation5 + $0x30] sm:$0xff]
    %v891 = vld [vmem:[#allocation5 + $0x38] sm:$0xff]
    %v892 = vld [vmem:[#allocation5 + $0x40] sm:$0xff]
    %v893 = vld [vmem:[#allocation5 + $0x48] sm:$0xff]
    %v894 = vld [vmem:[#allocation5 + $0x50] sm:$0xff]
    %v895 = vld [vmem:[#allocation5 + $0x58] sm:$0xff]
    %v896 = vld [vmem:[#allocation5 + $0x60] sm:$0xff]
    %v897 = vld [vmem:[#allocation5 + $0x68] sm:$0xff]
    %v898 = vld [vmem:[#allocation5 + $0x70] sm:$0xff]
    %v899 = vld [vmem:[#allocation5 + $0x78] sm:$0xff]
    %v900 = vld [vmem:[#allocation5 + $0x80] sm:$0xff]
    %v901 = vld [vmem:[#allocation5 + $0x88] sm:$0xff]
    %v902 = vld [vmem:[#allocation5 + $0x90] sm:$0xff]
    %v903 = vld [vmem:[#allocation5 + $0x98] sm:$0xff]
    %v904 = vld [vmem:[#allocation5 + $0xa0] sm:$0xff]
    %v905 = vld [vmem:[#allocation5 + $0xa8] sm:$0xff]
    %v906 = vld [vmem:[#allocation5 + $0xb0] sm:$0xff]
    %v907 = vld [vmem:[#allocation5 + $0xb8] sm:$0xff]
    %v908 = vld [vmem:[#allocation5 + $0xc0] sm:$0xff]
    %v909 = vld [vmem:[#allocation5 + $0xc8] sm:$0xff]
    %v910 = vld [vmem:[#allocation5 + $0xd0] sm:$0xff]
    %v911 = vld [vmem:[#allocation5 + $0xd8] sm:$0xff]
    %v912 = vld [vmem:[#allocation5 + $0xe0] sm:$0xff]
    %v913 = vld [vmem:[#allocation5 + $0xe8] sm:$0xff]
    %v914 = vld [vmem:[#allocation5 + $0xf0] sm:$0xff]
    %v915 = vld [vmem:[#allocation5 + $0xf8] sm:$0xff]
    %v916 = vld [vmem:[#allocation5 + $0x100] sm:$0xff]
    %v917 = vld [vmem:[#allocation5 + $0x108] sm:$0xff]
    %v918 = vld [vmem:[#allocation5 + $0x110] sm:$0xff]
    %v919 = vld [vmem:[#allocation5 + $0x118] sm:$0xff]
    %v920 = vld [vmem:[#allocation5 + $0x120] sm:$0xff]
    %v921 = vld [vmem:[#allocation5 + $0x128] sm:$0xff]
    %v922 = vld [vmem:[#allocation5 + $0x130] sm:$0xff]
    %v923 = vld [vmem:[#allocation5 + $0x138] sm:$0xff]
    %v924 = vld [vmem:[#allocation5 + $0x140] sm:$0xff]
    %v925 = vld [vmem:[#allocation5 + $0x148] sm:$0xff]
    %v926 = vld [vmem:[#allocation5 + $0x150] sm:$0xff]
    %v927 = vld [vmem:[#allocation5 + $0x158] sm:$0xff]
    %v928 = vld [vmem:[#allocation5 + $0x160] sm:$0xff]
    %v929 = vld [vmem:[#allocation5 + $0x168] sm:$0xff]
    %v930 = vld [vmem:[#allocation5 + $0x170] sm:$0xff]
    %v931 = vld [vmem:[#allocation5 + $0x178] sm:$0xff]
    %v932 = vld [vmem:[#allocation5 + $0x180] sm:$0xff]
    %v933 = vld [vmem:[#allocation5 + $0x188] sm:$0xff]
    %v934 = vld [vmem:[#allocation5 + $0x190] sm:$0xff]
    %v935 = vld [vmem:[#allocation5 + $0x198] sm:$0xff]
    %v936 = vld [vmem:[#allocation5 + $0x1a0] sm:$0xff]
    %v937 = vld [vmem:[#allocation5 + $0x1a8] sm:$0xff]
    %v938 = vld [vmem:[#allocation5 + $0x1b0] sm:$0xff]
    %v939 = vld [vmem:[#allocation5 + $0x1b8] sm:$0xff]
    %v940 = vld [vmem:[#allocation5 + $0x1c0] sm:$0xff]
    %v941 = vld [vmem:[#allocation5 + $0x1c8] sm:$0xff]
    %v942 = vld [vmem:[#allocation5 + $0x1d0] sm:$0xff]
    %v943 = vld [vmem:[#allocation5 + $0x1d8] sm:$0xff]
    %v944 = vld [vmem:[#allocation5 + $0x1e0] sm:$0xff]
    %v945 = vld [vmem:[#allocation5 + $0x1e8] sm:$0xff]
    %v946 = vld [vmem:[#allocation5 + $0x1f0] sm:$0xff]
    %v947 = vld [vmem:[#allocation5 + $0x1f8] sm:$0xff]
    %948 = vmatprep.subr.mxu0 %v885
    %949 = vmatpush1.msra.mxu0 %v884
    %950 = vmatprep.subr.mxu0 %v889
    %951 = vmatpush1.msra.mxu0 %v888
    %952 = vmatprep.subr.mxu0 %v893
    %953 = vmatpush1.msra.mxu0 %v892
    %954 = vmatprep.subr.mxu0 %v897
    %955 = vmatpush1.msra.mxu0 %v896
    %956 = vmatprep.subr.mxu0 %v901
    %957 = vmatpush1.msra.mxu0 %v900
    %958 = vmatprep.subr.mxu0 %v905
    %959 = vmatpush1.msra.mxu0 %v904
    %960 = vmatprep.subr.mxu0 %v909
    %961 = vmatpush1.msra.mxu0 %v908
    %962 = vmatprep.subr.mxu0 %v913
    %963 = vmatpush1.msra.mxu0 %v912
    %964 = vmatprep.subr.mxu0 %v917
    %965 = vmatpush1.msra.mxu0 %v916
    %966 = vmatprep.subr.mxu0 %v921
    %967 = vmatpush1.msra.mxu0 %v920
    %968 = vmatprep.subr.mxu0 %v925
    %969 = vmatpush1.msra.mxu0 %v924
    %970 = vmatprep.subr.mxu0 %v929
    %971 = vmatpush1.msra.mxu0 %v928
    %972 = vmatprep.subr.mxu0 %v933
    %973 = vmatpush1.msra.mxu0 %v932
    %974 = vmatprep.subr.mxu0 %v937
    %975 = vmatpush1.msra.mxu0 %v936
    %976 = vmatprep.subr.mxu0 %v941
    %977 = vmatpush1.msra.mxu0 %v940
    %978 = vmatprep.subr.mxu0 %v945
    %979 = vmatpush1.msra.mxu0 %v944
    %980 = vmatprep.subr.mxu0 0.0
    %981 = vmatpush1.msra.mxu0 0.0
    %982 = vmatprep.subr.mxu0 0.0
    %983 = vmatpush1.msra.mxu0 0.0
    %984 = vmatprep.subr.mxu0 0.0
    %985 = vmatpush1.msra.mxu0 0.0
    %986 = vmatprep.subr.mxu0 0.0
    %987 = vmatpush1.msra.mxu0 0.0
    %988 = vmatprep.subr.mxu0 0.0
    %989 = vmatpush1.msra.mxu0 0.0
    %990 = vmatprep.subr.mxu0 0.0
    %991 = vmatpush1.msra.mxu0 0.0
    %992 = vmatprep.subr.mxu0 0.0
    %993 = vmatpush1.msra.mxu0 0.0
    %994 = vmatprep.subr.mxu0 0.0
    %995 = vmatpush1.msra.mxu0 0.0
    %996 = vmatprep.subr.mxu0 0.0
    %997 = vmatpush1.msra.mxu0 0.0
    %998 = vmatprep.subr.mxu0 0.0
    %999 = vmatpush1.msra.mxu0 0.0
    %1000 = vmatprep.subr.mxu0 0.0
    %1001 = vmatpush1.msra.mxu0 0.0
    %1002 = vmatprep.subr.mxu0 0.0
    %1003 = vmatpush1.msra.mxu0 0.0
    %1004 = vmatprep.subr.mxu0 0.0
    %1005 = vmatpush1.msra.mxu0 0.0
    %1006 = vmatprep.subr.mxu0 0.0
    %1007 = vmatpush1.msra.mxu0 0.0
    %1008 = vmatprep.subr.mxu0 0.0
    %1009 = vmatpush1.msra.mxu0 0.0
    %1010 = vmatprep.subr.mxu0 0.0
    %1011 = vmatpush1.msra.mxu0 0.0
    %1012 = vmatprep.mubr.f32.mxu0 0.0
    %1013 = vmatmul.mubr.f32.gmra.mrb[0].mxu0 %v883
    %v1014 = vpop.f32.mrb[0].mxu0
    %v1015 = vadd.f32 0.0, %v1014
    %v1016 = vpop.f32.mrb[0].mxu0
    %v1017 = vadd.f32 0.0, %v1016
    %1018 = vdwg.mxu0
    %1019 = vmatprep.subr.mxu0 %v887
    %1020 = vmatpush1.msra.mxu0 %v886
    %1021 = vmatprep.subr.mxu0 %v891
    %1022 = vmatpush1.msra.mxu0 %v890
    %1023 = vmatprep.subr.mxu0 %v895
    %1024 = vmatpush1.msra.mxu0 %v894
    %1025 = vmatprep.subr.mxu0 %v899
    %1026 = vmatpush1.msra.mxu0 %v898
    %1027 = vmatprep.subr.mxu0 %v903
    %1028 = vmatpush1.msra.mxu0 %v902
    %1029 = vmatprep.subr.mxu0 %v907
    %1030 = vmatpush1.msra.mxu0 %v906
    %1031 = vmatprep.subr.mxu0 %v911
    %1032 = vmatpush1.msra.mxu0 %v910
    %1033 = vmatprep.subr.mxu0 %v915
    %1034 = vmatpush1.msra.mxu0 %v914
    %1035 = vmatprep.subr.mxu0 %v919
    %1036 = vmatpush1.msra.mxu0 %v918
    %1037 = vmatprep.subr.mxu0 %v923
    %1038 = vmatpush1.msra.mxu0 %v922
    %1039 = vmatprep.subr.mxu0 %v927
    %1040 = vmatpush1.msra.mxu0 %v926
    %1041 = vmatprep.subr.mxu0 %v931
    %1042 = vmatpush1.msra.mxu0 %v930
    %1043 = vmatprep.subr.mxu0 %v935
    %1044 = vmatpush1.msra.mxu0 %v934
    %1045 = vmatprep.subr.mxu0 %v939
    %1046 = vmatpush1.msra.mxu0 %v938
    %1047 = vmatprep.subr.mxu0 %v943
    %1048 = vmatpush1.msra.mxu0 %v942
    %1049 = vmatprep.subr.mxu0 %v947
    %1050 = vmatpush1.msra.mxu0 %v946
    %1051 = vmatprep.subr.mxu0 0.0
    %1052 = vmatpush1.msra.mxu0 0.0
    %1053 = vmatprep.subr.mxu0 0.0
    %1054 = vmatpush1.msra.mxu0 0.0
    %1055 = vmatprep.subr.mxu0 0.0
    %1056 = vmatpush1.msra.mxu0 0.0
    %1057 = vmatprep.subr.mxu0 0.0
    %1058 = vmatpush1.msra.mxu0 0.0
    %1059 = vmatprep.subr.mxu0 0.0
    %1060 = vmatpush1.msra.mxu0 0.0
    %1061 = vmatprep.subr.mxu0 0.0
    %1062 = vmatpush1.msra.mxu0 0.0
    %1063 = vmatprep.subr.mxu0 0.0
    %1064 = vmatpush1.msra.mxu0 0.0
    %1065 = vmatprep.subr.mxu0 0.0
    %1066 = vmatpush1.msra.mxu0 0.0
    %1067 = vmatprep.subr.mxu0 0.0
    %1068 = vmatpush1.msra.mxu0 0.0
    %1069 = vmatprep.subr.mxu0 0.0
    %1070 = vmatpush1.msra.mxu0 0.0
    %1071 = vmatprep.subr.mxu0 0.0
    %1072 = vmatpush1.msra.mxu0 0.0
    %1073 = vmatprep.subr.mxu0 0.0
    %1074 = vmatpush1.msra.mxu0 0.0
    %1075 = vmatprep.subr.mxu0 0.0
    %1076 = vmatpush1.msra.mxu0 0.0
    %1077 = vmatprep.subr.mxu0 0.0
    %1078 = vmatpush1.msra.mxu0 0.0
    %1079 = vmatprep.subr.mxu0 0.0
    %1080 = vmatpush1.msra.mxu0 0.0
    %1081 = vmatprep.subr.mxu0 0.0
    %1082 = vmatpush1.msra.mxu0 0.0
    %1083 = vmatprep.mubr.f32.mxu0 0.0
    %1084 = vmatmul.mubr.f32.gmra.mrb[0].mxu0 %v883
    %v1085 = vpop.f32.mrb[0].mxu0
    %v1086 = vadd.f32 0.0, %v1085
    %v1087 = vpop.f32.mrb[0].mxu0
    %v1088 = vadd.f32 0.0, %v1087
    %1089 = vdwg.mxu0
    %v1090 = vadd.f32 %v879, %v1015
    %v1091 = vadd.f32 %v880, %v1017
    %v1092 = vadd.f32 %v881, %v1086
    %v1093 = vadd.f32 %v882, %v1088
    %v1094 = vxor.u32 %v1090, 2147483648
    %v1095 = vmul.f32 %v1094, 1.442695
    %v1096 = vpow.pop %v1095
    %v1097 = vadd.f32 %v1096, 1.0
    %v1098 = vrcp.pop %v1097
    %v1099 = vmul.f32 1.0, %v1098
    %v1100 = vxor.u32 %v1091, 2147483648
    %v1101 = vmul.f32 %v1100, 1.442695
    %v1102 = vpow.pop %v1101
    %v1103 = vadd.f32 %v1102, 1.0
    %v1104 = vrcp.pop %v1103
    %v1105 = vmul.f32 1.0, %v1104
    %v1106 = vxor.u32 %v1092, 2147483648
    %v1107 = vmul.f32 %v1106, 1.442695
    %v1108 = vpow.pop %v1107
    %v1109 = vadd.f32 %v1108, 1.0
    %v1110 = vrcp.pop %v1109
    %v1111 = vmul.f32 1.0, %v1110
    %v1112 = vtanh.pop %v1093
    %v1113 = vld [vmem:[#allocation4] sm:$0xff]
    %v1114 = vmul.f32 %v1113, %v1105
    %v1115 = vmul.f32 %v1099, %v1112
    %v1116 = vadd.f32 %v1114, %v1115
    %v1117 = vtanh.pop %v1116
    %v1118 = vmul.f32 %v1111, %v1117
    %vm1119 = vcmp.gt.s32.totalorder %v362, 2
    %v1120 = vsel %vm1119, 1, 0
    %1121 = vset.pattern.permute.xlu0 0
    %1122 = vperm.xlu0 %1121, %v1120
    %v1123 = vpop.permute.xlu0 %1122
    %vm1124 = vcmp.eq.s32.totalorder %v1123, 1
    %v1125 = vsel %vm1124, %v1118, %v883
    %1126 = vst [vmem:[#allocation3] sm:$0xff] %v1125
    %v1127 = vld [vmem:[#allocation4] sm:$0xff]
    %v1128 = vsel %vm1124, %v1116, %v1127
    %1129 = vst [vmem:[#allocation4] sm:$0xff] %v1128
    %v1130 = vsel %vm1124, %v1118, 0.0
    %s1131 = scalar_lea.vmem [#allocation8], 16
    %1132 = vst [vmem:[%s1131] sm:$0xff] %v1130
    %s1133 = smul.u32 3, 4
    %s1134 = smul.addr %s1133, 8
    %s1135 = scalar_lea.vmem [#allocation2], %s1134
    %v1136 = vld [vmem:[%s1135] sm:$0xff]
    %v1137 = vld [vmem:[%s1135 + $0x8] sm:$0xff]
    %v1138 = vld [vmem:[%s1135 + $0x10] sm:$0xff]
    %v1139 = vld [vmem:[%s1135 + $0x18] sm:$0xff]
    %v1140 = vld [vmem:[#allocation3] sm:$0xff]
    %v1141 = vld [vmem:[#allocation5] sm:$0xff]
    %v1142 = vld [vmem:[#allocation5 + $0x8] sm:$0xff]
    %v1143 = vld [vmem:[#allocation5 + $0x10] sm:$0xff]
    %v1144 = vld [vmem:[#allocation5 + $0x18] sm:$0xff]
    %v1145 = vld [vmem:[#allocation5 + $0x20] sm:$0xff]
    %v1146 = vld [vmem:[#allocation5 + $0x28] sm:$0xff]
    %v1147 = vld [vmem:[#allocation5 + $0x30] sm:$0xff]
    %v1148 = vld [vmem:[#allocation5 + $0x38] sm:$0xff]
    %v1149 = vld [vmem:[#allocation5 + $0x40] sm:$0xff]
    %v1150 = vld [vmem:[#allocation5 + $0x48] sm:$0xff]
    %v1151 = vld [vmem:[#allocation5 + $0x50] sm:$0xff]
    %v1152 = vld [vmem:[#allocation5 + $0x58] sm:$0xff]
    %v1153 = vld [vmem:[#allocation5 + $0x60] sm:$0xff]
    %v1154 = vld [vmem:[#allocation5 + $0x68] sm:$0xff]
    %v1155 = vld [vmem:[#allocation5 + $0x70] sm:$0xff]
    %v1156 = vld [vmem:[#allocation5 + $0x78] sm:$0xff]
    %v1157 = vld [vmem:[#allocation5 + $0x80] sm:$0xff]
    %v1158 = vld [vmem:[#allocation5 + $0x88] sm:$0xff]
    %v1159 = vld [vmem:[#allocation5 + $0x90] sm:$0xff]
    %v1160 = vld [vmem:[#allocation5 + $0x98] sm:$0xff]
    %v1161 = vld [vmem:[#allocation5 + $0xa0] sm:$0xff]
    %v1162 = vld [vmem:[#allocation5 + $0xa8] sm:$0xff]
    %v1163 = vld [vmem:[#allocation5 + $0xb0] sm:$0xff]
    %v1164 = vld [vmem:[#allocation5 + $0xb8] sm:$0xff]
    %v1165 = vld [vmem:[#allocation5 + $0xc0] sm:$0xff]
    %v1166 = vld [vmem:[#allocation5 + $0xc8] sm:$0xff]
    %v1167 = vld [vmem:[#allocation5 + $0xd0] sm:$0xff]
    %v1168 = vld [vmem:[#allocation5 + $0xd8] sm:$0xff]
    %v1169 = vld [vmem:[#allocation5 + $0xe0] sm:$0xff]
    %v1170 = vld [vmem:[#allocation5 + $0xe8] sm:$0xff]
    %v1171 = vld [vmem:[#allocation5 + $0xf0] sm:$0xff]
    %v1172 = vld [vmem:[#allocation5 + $0xf8] sm:$0xff]
    %v1173 = vld [vmem:[#allocation5 + $0x100] sm:$0xff]
    %v1174 = vld [vmem:[#allocation5 + $0x108] sm:$0xff]
    %v1175 = vld [vmem:[#allocation5 + $0x110] sm:$0xff]
    %v1176 = vld [vmem:[#allocation5 + $0x118] sm:$0xff]
    %v1177 = vld [vmem:[#allocation5 + $0x120] sm:$0xff]
    %v1178 = vld [vmem:[#allocation5 + $0x128] sm:$0xff]
    %v1179 = vld [vmem:[#allocation5 + $0x130] sm:$0xff]
    %v1180 = vld [vmem:[#allocation5 + $0x138] sm:$0xff]
    %v1181 = vld [vmem:[#allocation5 + $0x140] sm:$0xff]
    %v1182 = vld [vmem:[#allocation5 + $0x148] sm:$0xff]
    %v1183 = vld [vmem:[#allocation5 + $0x150] sm:$0xff]
    %v1184 = vld [vmem:[#allocation5 + $0x158] sm:$0xff]
    %v1185 = vld [vmem:[#allocation5 + $0x160] sm:$0xff]
    %v1186 = vld [vmem:[#allocation5 + $0x168] sm:$0xff]
    %v1187 = vld [vmem:[#allocation5 + $0x170] sm:$0xff]
    %v1188 = vld [vmem:[#allocation5 + $0x178] sm:$0xff]
    %v1189 = vld [vmem:[#allocation5 + $0x180] sm:$0xff]
    %v1190 = vld [vmem:[#allocation5 + $0x188] sm:$0xff]
    %v1191 = vld [vmem:[#allocation5 + $0x190] sm:$0xff]
    %v1192 = vld [vmem:[#allocation5 + $0x198] sm:$0xff]
    %v1193 = vld [vmem:[#allocation5 + $0x1a0] sm:$0xff]
    %v1194 = vld [vmem:[#allocation5 + $0x1a8] sm:$0xff]
    %v1195 = vld [vmem:[#allocation5 + $0x1b0] sm:$0xff]
    %v1196 = vld [vmem:[#allocation5 + $0x1b8] sm:$0xff]
    %v1197 = vld [vmem:[#allocation5 + $0x1c0] sm:$0xff]
    %v1198 = vld [vmem:[#allocation5 + $0x1c8] sm:$0xff]
    %v1199 = vld [vmem:[#allocation5 + $0x1d0] sm:$0xff]
    %v1200 = vld [vmem:[#allocation5 + $0x1d8] sm:$0xff]
    %v1201 = vld [vmem:[#allocation5 + $0x1e0] sm:$0xff]
    %v1202 = vld [vmem:[#allocation5 + $0x1e8] sm:$0xff]
    %v1203 = vld [vmem:[#allocation5 + $0x1f0] sm:$0xff]
    %v1204 = vld [vmem:[#allocation5 + $0x1f8] sm:$0xff]
    %1205 = vmatprep.subr.mxu0 %v1142
    %1206 = vmatpush1.msra.mxu0 %v1141
    %1207 = vmatprep.subr.mxu0 %v1146
    %1208 = vmatpush1.msra.mxu0 %v1145
    %1209 = vmatprep.subr.mxu0 %v1150
    %1210 = vmatpush1.msra.mxu0 %v1149
    %1211 = vmatprep.subr.mxu0 %v1154
    %1212 = vmatpush1.msra.mxu0 %v1153
    %1213 = vmatprep.subr.mxu0 %v1158
    %1214 = vmatpush1.msra.mxu0 %v1157
    %1215 = vmatprep.subr.mxu0 %v1162
    %1216 = vmatpush1.msra.mxu0 %v1161
    %1217 = vmatprep.subr.mxu0 %v1166
    %1218 = vmatpush1.msra.mxu0 %v1165
    %1219 = vmatprep.subr.mxu0 %v1170
    %1220 = vmatpush1.msra.mxu0 %v1169
    %1221 = vmatprep.subr.mxu0 %v1174
    %1222 = vmatpush1.msra.mxu0 %v1173
    %1223 = vmatprep.subr.mxu0 %v1178
    %1224 = vmatpush1.msra.mxu0 %v1177
    %1225 = vmatprep.subr.mxu0 %v1182
    %1226 = vmatpush1.msra.mxu0 %v1181
    %1227 = vmatprep.subr.mxu0 %v1186
    %1228 = vmatpush1.msra.mxu0 %v1185
    %1229 = vmatprep.subr.mxu0 %v1190
    %1230 = vmatpush1.msra.mxu0 %v1189
    %1231 = vmatprep.subr.mxu0 %v1194
    %1232 = vmatpush1.msra.mxu0 %v1193
    %1233 = vmatprep.subr.mxu0 %v1198
    %1234 = vmatpush1.msra.mxu0 %v1197
    %1235 = vmatprep.subr.mxu0 %v1202
    %1236 = vmatpush1.msra.mxu0 %v1201
    %1237 = vmatprep.subr.mxu0 0.0
    %1238 = vmatpush1.msra.mxu0 0.0
    %1239 = vmatprep.subr.mxu0 0.0
    %1240 = vmatpush1.msra.mxu0 0.0
    %1241 = vmatprep.subr.mxu0 0.0
    %1242 = vmatpush1.msra.mxu0 0.0
    %1243 = vmatprep.subr.mxu0 0.0
    %1244 = vmatpush1.msra.mxu0 0.0
    %1245 = vmatprep.subr.mxu0 0.0
    %1246 = vmatpush1.msra.mxu0 0.0
    %1247 = vmatprep.subr.mxu0 0.0
    %1248 = vmatpush1.msra.mxu0 0.0
    %1249 = vmatprep.subr.mxu0 0.0
    %1250 = vmatpush1.msra.mxu0 0.0
    %1251 = vmatprep.subr.mxu0 0.0
    %1252 = vmatpush1.msra.mxu0 0.0
    %1253 = vmatprep.subr.mxu0 0.0
    %1254 = vmatpush1.msra.mxu0 0.0
    %1255 = vmatprep.subr.mxu0 0.0
    %1256 = vmatpush1.msra.mxu0 0.0
    %1257 = vmatprep.subr.mxu0 0.0
    %1258 = vmatpush1.msra.mxu0 0.0
    %1259 = vmatprep.subr.mxu0 0.0
    %1260 = vmatpush1.msra.mxu0 0.0
    %1261 = vmatprep.subr.mxu0 0.0
    %1262 = vmatpush1.msra.mxu0 0.0
    %1263 = vmatprep.subr.mxu0 0.0
    %1264 = vmatpush1.msra.mxu0 0.0
    %1265 = vmatprep.subr.mxu0 0.0
    %1266 = vmatpush1.msra.mxu0 0.0
    %1267 = vmatprep.subr.mxu0 0.0
    %1268 = vmatpush1.msra.mxu0 0.0
    %1269 = vmatprep.mubr.f32.mxu0 0.0
    %1270 = vmatmul.mubr.f32.gmra.mrb[0].mxu0 %v1140
    %v1271 = vpop.f32.mrb[0].mxu0
    %v1272 = vadd.f32 0.0, %v1271
    %v1273 = vpop.f32.mrb[0].mxu0
    %v1274 = vadd.f32 0.0, %v1273
    %1275 = vdwg.mxu0
    %1276 = vmatprep.subr.mxu0 %v1144
    %1277 = vmatpush1.msra.mxu0 %v1143
    %1278 = vmatprep.subr.mxu0 %v1148
    %1279 = vmatpush1.msra.mxu0 %v1147
    %1280 = vmatprep.subr.mxu0 %v1152
    %1281 = vmatpush1.msra.mxu0 %v1151
    %1282 = vmatprep.subr.mxu0 %v1156
    %1283 = vmatpush1.msra.mxu0 %v1155
    %1284 = vmatprep.subr.mxu0 %v1160
    %1285 = vmatpush1.msra.mxu0 %v1159
    %1286 = vmatprep.subr.mxu0 %v1164
    %1287 = vmatpush1.msra.mxu0 %v1163
    %1288 = vmatprep.subr.mxu0 %v1168
    %1289 = vmatpush1.msra.mxu0 %v1167
    %1290 = vmatprep.subr.mxu0 %v1172
    %1291 = vmatpush1.msra.mxu0 %v1171
    %1292 = vmatprep.subr.mxu0 %v1176
    %1293 = vmatpush1.msra.mxu0 %v1175
    %1294 = vmatprep.subr.mxu0 %v1180
    %1295 = vmatpush1.msra.mxu0 %v1179
    %1296 = vmatprep.subr.mxu0 %v1184
    %1297 = vmatpush1.msra.mxu0 %v1183
    %1298 = vmatprep.subr.mxu0 %v1188
    %1299 = vmatpush1.msra.mxu0 %v1187
    %1300 = vmatprep.subr.mxu0 %v1192
    %1301 = vmatpush1.msra.mxu0 %v1191
    %1302 = vmatprep.subr.mxu0 %v1196
    %1303 = vmatpush1.msra.mxu0 %v1195
    %1304 = vmatprep.subr.mxu0 %v1200
    %1305 = vmatpush1.msra.mxu0 %v1199
    %1306 = vmatprep.subr.mxu0 %v1204
    %1307 = vmatpush1.msra.mxu0 %v1203
    %1308 = vmatprep.subr.mxu0 0.0
    %1309 = vmatpush1.msra.mxu0 0.0
    %1310 = vmatprep.subr.mxu0 0.0
    %1311 = vmatpush1.msra.mxu0 0.0
    %1312 = vmatprep.subr.mxu0 0.0
    %1313 = vmatpush1.msra.mxu0 0.0
    %1314 = vmatprep.subr.mxu0 0.0
    %1315 = vmatpush1.msra.mxu0 0.0
    %1316 = vmatprep.subr.mxu0 0.0
    %1317 = vmatpush1.msra.mxu0 0.0
    %1318 = vmatprep.subr.mxu0 0.0
    %1319 = vmatpush1.msra.mxu0 0.0
    %1320 = vmatprep.subr.mxu0 0.0
    %1321 = vmatpush1.msra.mxu0 0.0
    %1322 = vmatprep.subr.mxu0 0.0
    %1323 = vmatpush1.msra.mxu0 0.0
    %1324 = vmatprep.subr.mxu0 0.0
    %1325 = vmatpush1.msra.mxu0 0.0
    %1326 = vmatprep.subr.mxu0 0.0
    %1327 = vmatpush1.msra.mxu0 0.0
    %1328 = vmatprep.subr.mxu0 0.0
    %1329 = vmatpush1.msra.mxu0 0.0
    %1330 = vmatprep.subr.mxu0 0.0
    %1331 = vmatpush1.msra.mxu0 0.0
    %1332 = vmatprep.subr.mxu0 0.0
    %1333 = vmatpush1.msra.mxu0 0.0
    %1334 = vmatprep.subr.mxu0 0.0
    %1335 = vmatpush1.msra.mxu0 0.0
    %1336 = vmatprep.subr.mxu0 0.0
    %1337 = vmatpush1.msra.mxu0 0.0
    %1338 = vmatprep.subr.mxu0 0.0
    %1339 = vmatpush1.msra.mxu0 0.0
    %1340 = vmatprep.mubr.f32.mxu0 0.0
    %1341 = vmatmul.mubr.f32.gmra.mrb[0].mxu0 %v1140
    %v1342 = vpop.f32.mrb[0].mxu0
    %v1343 = vadd.f32 0.0, %v1342
    %v1344 = vpop.f32.mrb[0].mxu0
    %v1345 = vadd.f32 0.0, %v1344
    %1346 = vdwg.mxu0
    %v1347 = vadd.f32 %v1136, %v1272
    %v1348 = vadd.f32 %v1137, %v1274
    %v1349 = vadd.f32 %v1138, %v1343
    %v1350 = vadd.f32 %v1139, %v1345
    %v1351 = vxor.u32 %v1347, 2147483648
    %v1352 = vmul.f32 %v1351, 1.442695
    %v1353 = vpow.pop %v1352
    %v1354 = vadd.f32 %v1353, 1.0
    %v1355 = vrcp.pop %v1354
    %v1356 = vmul.f32 1.0, %v1355
    %v1357 = vxor.u32 %v1348, 2147483648
    %v1358 = vmul.f32 %v1357, 1.442695
    %v1359 = vpow.pop %v1358
    %v1360 = vadd.f32 %v1359, 1.0
    %v1361 = vrcp.pop %v1360
    %v1362 = vmul.f32 1.0, %v1361
    %v1363 = vxor.u32 %v1349, 2147483648
    %v1364 = vmul.f32 %v1363, 1.442695
    %v1365 = vpow.pop %v1364
    %v1366 = vadd.f32 %v1365, 1.0
    %v1367 = vrcp.pop %v1366
    %v1368 = vmul.f32 1.0, %v1367
    %v1369 = vtanh.pop %v1350
    %v1370 = vld [vmem:[#allocation4] sm:$0xff]
    %v1371 = vmul.f32 %v1370, %v1362
    %v1372 = vmul.f32 %v1356, %v1369
    %v1373 = vadd.f32 %v1371, %v1372
    %v1374 = vtanh.pop %v1373
    %v1375 = vmul.f32 %v1368, %v1374
    %vm1376 = vcmp.gt.s32.totalorder %v362, 3
    %v1377 = vsel %vm1376, 1, 0
    %1378 = vset.pattern.permute.xlu0 0
    %1379 = vperm.xlu0 %1378, %v1377
    %v1380 = vpop.permute.xlu0 %1379
    %vm1381 = vcmp.eq.s32.totalorder %v1380, 1
    %v1382 = vsel %vm1381, %v1375, %v1140
    %1383 = vst [vmem:[#allocation3] sm:$0xff] %v1382
    %v1384 = vld [vmem:[#allocation4] sm:$0xff]
    %v1385 = vsel %vm1381, %v1373, %v1384
    %1386 = vst [vmem:[#allocation4] sm:$0xff] %v1385
    %v1387 = vsel %vm1381, %v1375, 0.0
    %s1388 = scalar_lea.vmem [#allocation8], 24
    %1389 = vst [vmem:[%s1388] sm:$0xff] %v1387
    %s1390 = smul.u32 4, 4
    %s1391 = smul.addr %s1390, 8
    %s1392 = scalar_lea.vmem [#allocation2], %s1391
    %v1393 = vld [vmem:[%s1392] sm:$0xff]
    %v1394 = vld [vmem:[%s1392 + $0x8] sm:$0xff]
    %v1395 = vld [vmem:[%s1392 + $0x10] sm:$0xff]
    %v1396 = vld [vmem:[%s1392 + $0x18] sm:$0xff]
    %v1397 = vld [vmem:[#allocation3] sm:$0xff]
    %v1398 = vld [vmem:[#allocation5] sm:$0xff]
    %v1399 = vld [vmem:[#allocation5 + $0x8] sm:$0xff]
    %v1400 = vld [vmem:[#allocation5 + $0x10] sm:$0xff]
    %v1401 = vld [vmem:[#allocation5 + $0x18] sm:$0xff]
    %v1402 = vld [vmem:[#allocation5 + $0x20] sm:$0xff]
    %v1403 = vld [vmem:[#allocation5 + $0x28] sm:$0xff]
    %v1404 = vld [vmem:[#allocation5 + $0x30] sm:$0xff]
    %v1405 = vld [vmem:[#allocation5 + $0x38] sm:$0xff]
    %v1406 = vld [vmem:[#allocation5 + $0x40] sm:$0xff]
    %v1407 = vld [vmem:[#allocation5 + $0x48] sm:$0xff]
    %v1408 = vld [vmem:[#allocation5 + $0x50] sm:$0xff]
    %v1409 = vld [vmem:[#allocation5 + $0x58] sm:$0xff]
    %v1410 = vld [vmem:[#allocation5 + $0x60] sm:$0xff]
    %v1411 = vld [vmem:[#allocation5 + $0x68] sm:$0xff]
    %v1412 = vld [vmem:[#allocation5 + $0x70] sm:$0xff]
    %v1413 = vld [vmem:[#allocation5 + $0x78] sm:$0xff]
    %v1414 = vld [vmem:[#allocation5 + $0x80] sm:$0xff]
    %v1415 = vld [vmem:[#allocation5 + $0x88] sm:$0xff]
    %v1416 = vld [vmem:[#allocation5 + $0x90] sm:$0xff]
    %v1417 = vld [vmem:[#allocation5 + $0x98] sm:$0xff]
    %v1418 = vld [vmem:[#allocation5 + $0xa0] sm:$0xff]
    %v1419 = vld [vmem:[#allocation5 + $0xa8] sm:$0xff]
    %v1420 = vld [vmem:[#allocation5 + $0xb0] sm:$0xff]
    %v1421 = vld [vmem:[#allocation5 + $0xb8] sm:$0xff]
    %v1422 = vld [vmem:[#allocation5 + $0xc0] sm:$0xff]
    %v1423 = vld [vmem:[#allocation5 + $0xc8] sm:$0xff]
    %v1424 = vld [vmem:[#allocation5 + $0xd0] sm:$0xff]
    %v1425 = vld [vmem:[#allocation5 + $0xd8] sm:$0xff]
    %v1426 = vld [vmem:[#allocation5 + $0xe0] sm:$0xff]
    %v1427 = vld [vmem:[#allocation5 + $0xe8] sm:$0xff]
    %v1428 = vld [vmem:[#allocation5 + $0xf0] sm:$0xff]
    %v1429 = vld [vmem:[#allocation5 + $0xf8] sm:$0xff]
    %v1430 = vld [vmem:[#allocation5 + $0x100] sm:$0xff]
    %v1431 = vld [vmem:[#allocation5 + $0x108] sm:$0xff]
    %v1432 = vld [vmem:[#allocation5 + $0x110] sm:$0xff]
    %v1433 = vld [vmem:[#allocation5 + $0x118] sm:$0xff]
    %v1434 = vld [vmem:[#allocation5 + $0x120] sm:$0xff]
    %v1435 = vld [vmem:[#allocation5 + $0x128] sm:$0xff]
    %v1436 = vld [vmem:[#allocation5 + $0x130] sm:$0xff]
    %v1437 = vld [vmem:[#allocation5 + $0x138] sm:$0xff]
    %v1438 = vld [vmem:[#allocation5 + $0x140] sm:$0xff]
    %v1439 = vld [vmem:[#allocation5 + $0x148] sm:$0xff]
    %v1440 = vld [vmem:[#allocation5 + $0x150] sm:$0xff]
    %v1441 = vld [vmem:[#allocation5 + $0x158] sm:$0xff]
    %v1442 = vld [vmem:[#allocation5 + $0x160] sm:$0xff]
    %v1443 = vld [vmem:[#allocation5 + $0x168] sm:$0xff]
    %v1444 = vld [vmem:[#allocation5 + $0x170] sm:$0xff]
    %v1445 = vld [vmem:[#allocation5 + $0x178] sm:$0xff]
    %v1446 = vld [vmem:[#allocation5 + $0x180] sm:$0xff]
    %v1447 = vld [vmem:[#allocation5 + $0x188] sm:$0xff]
    %v1448 = vld [vmem:[#allocation5 + $0x190] sm:$0xff]
    %v1449 = vld [vmem:[#allocation5 + $0x198] sm:$0xff]
    %v1450 = vld [vmem:[#allocation5 + $0x1a0] sm:$0xff]
    %v1451 = vld [vmem:[#allocation5 + $0x1a8] sm:$0xff]
    %v1452 = vld [vmem:[#allocation5 + $0x1b0] sm:$0xff]
    %v1453 = vld [vmem:[#allocation5 + $0x1b8] sm:$0xff]
    %v1454 = vld [vmem:[#allocation5 + $0x1c0] sm:$0xff]
    %v1455 = vld [vmem:[#allocation5 + $0x1c8] sm:$0xff]
    %v1456 = vld [vmem:[#allocation5 + $0x1d0] sm:$0xff]
    %v1457 = vld [vmem:[#allocation5 + $0x1d8] sm:$0xff]
    %v1458 = vld [vmem:[#allocation5 + $0x1e0] sm:$0xff]
    %v1459 = vld [vmem:[#allocation5 + $0x1e8] sm:$0xff]
    %v1460 = vld [vmem:[#allocation5 + $0x1f0] sm:$0xff]
    %v1461 = vld [vmem:[#allocation5 + $0x1f8] sm:$0xff]
    %1462 = vmatprep.subr.mxu0 %v1399
    %1463 = vmatpush1.msra.mxu0 %v1398
    %1464 = vmatprep.subr.mxu0 %v1403
    %1465 = vmatpush1.msra.mxu0 %v1402
    %1466 = vmatprep.subr.mxu0 %v1407
    %1467 = vmatpush1.msra.mxu0 %v1406
    %1468 = vmatprep.subr.mxu0 %v1411
    %1469 = vmatpush1.msra.mxu0 %v1410
    %1470 = vmatprep.subr.mxu0 %v1415
    %1471 = vmatpush1.msra.mxu0 %v1414
    %1472 = vmatprep.subr.mxu0 %v1419
    %1473 = vmatpush1.msra.mxu0 %v1418
    %1474 = vmatprep.subr.mxu0 %v1423
    %1475 = vmatpush1.msra.mxu0 %v1422
    %1476 = vmatprep.subr.mxu0 %v1427
    %1477 = vmatpush1.msra.mxu0 %v1426
    %1478 = vmatprep.subr.mxu0 %v1431
    %1479 = vmatpush1.msra.mxu0 %v1430
    %1480 = vmatprep.subr.mxu0 %v1435
    %1481 = vmatpush1.msra.mxu0 %v1434
    %1482 = vmatprep.subr.mxu0 %v1439
    %1483 = vmatpush1.msra.mxu0 %v1438
    %1484 = vmatprep.subr.mxu0 %v1443
    %1485 = vmatpush1.msra.mxu0 %v1442
    %1486 = vmatprep.subr.mxu0 %v1447
    %1487 = vmatpush1.msra.mxu0 %v1446
    %1488 = vmatprep.subr.mxu0 %v1451
    %1489 = vmatpush1.msra.mxu0 %v1450
    %1490 = vmatprep.subr.mxu0 %v1455
    %1491 = vmatpush1.msra.mxu0 %v1454
    %1492 = vmatprep.subr.mxu0 %v1459
    %1493 = vmatpush1.msra.mxu0 %v1458
    %1494 = vmatprep.subr.mxu0 0.0
    %1495 = vmatpush1.msra.mxu0 0.0
    %1496 = vmatprep.subr.mxu0 0.0
    %1497 = vmatpush1.msra.mxu0 0.0
    %1498 = vmatprep.subr.mxu0 0.0
    %1499 = vmatpush1.msra.mxu0 0.0
    %1500 = vmatprep.subr.mxu0 0.0
    %1501 = vmatpush1.msra.mxu0 0.0
    %1502 = vmatprep.subr.mxu0 0.0
    %1503 = vmatpush1.msra.mxu0 0.0
    %1504 = vmatprep.subr.mxu0 0.0
    %1505 = vmatpush1.msra.mxu0 0.0
    %1506 = vmatprep.subr.mxu0 0.0
    %1507 = vmatpush1.msra.mxu0 0.0
    %1508 = vmatprep.subr.mxu0 0.0
    %1509 = vmatpush1.msra.mxu0 0.0
    %1510 = vmatprep.subr.mxu0 0.0
    %1511 = vmatpush1.msra.mxu0 0.0
    %1512 = vmatprep.subr.mxu0 0.0
    %1513 = vmatpush1.msra.mxu0 0.0
    %1514 = vmatprep.subr.mxu0 0.0
    %1515 = vmatpush1.msra.mxu0 0.0
    %1516 = vmatprep.subr.mxu0 0.0
    %1517 = vmatpush1.msra.mxu0 0.0
    %1518 = vmatprep.subr.mxu0 0.0
    %1519 = vmatpush1.msra.mxu0 0.0
    %1520 = vmatprep.subr.mxu0 0.0
    %1521 = vmatpush1.msra.mxu0 0.0
    %1522 = vmatprep.subr.mxu0 0.0
    %1523 = vmatpush1.msra.mxu0 0.0
    %1524 = vmatprep.subr.mxu0 0.0
    %1525 = vmatpush1.msra.mxu0 0.0
    %1526 = vmatprep.mubr.f32.mxu0 0.0
    %1527 = vmatmul.mubr.f32.gmra.mrb[0].mxu0 %v1397
    %v1528 = vpop.f32.mrb[0].mxu0
    %v1529 = vadd.f32 0.0, %v1528
    %v1530 = vpop.f32.mrb[0].mxu0
    %v1531 = vadd.f32 0.0, %v1530
    %1532 = vdwg.mxu0
    %1533 = vmatprep.subr.mxu0 %v1401
    %1534 = vmatpush1.msra.mxu0 %v1400
    %1535 = vmatprep.subr.mxu0 %v1405
    %1536 = vmatpush1.msra.mxu0 %v1404
    %1537 = vmatprep.subr.mxu0 %v1409
    %1538 = vmatpush1.msra.mxu0 %v1408
    %1539 = vmatprep.subr.mxu0 %v1413
    %1540 = vmatpush1.msra.mxu0 %v1412
    %1541 = vmatprep.subr.mxu0 %v1417
    %1542 = vmatpush1.msra.mxu0 %v1416
    %1543 = vmatprep.subr.mxu0 %v1421
    %1544 = vmatpush1.msra.mxu0 %v1420
    %1545 = vmatprep.subr.mxu0 %v1425
    %1546 = vmatpush1.msra.mxu0 %v1424
    %1547 = vmatprep.subr.mxu0 %v1429
    %1548 = vmatpush1.msra.mxu0 %v1428
    %1549 = vmatprep.subr.mxu0 %v1433
    %1550 = vmatpush1.msra.mxu0 %v1432
    %1551 = vmatprep.subr.mxu0 %v1437
    %1552 = vmatpush1.msra.mxu0 %v1436
    %1553 = vmatprep.subr.mxu0 %v1441
    %1554 = vmatpush1.msra.mxu0 %v1440
    %1555 = vmatprep.subr.mxu0 %v1445
    %1556 = vmatpush1.msra.mxu0 %v1444
    %1557 = vmatprep.subr.mxu0 %v1449
    %1558 = vmatpush1.msra.mxu0 %v1448
    %1559 = vmatprep.subr.mxu0 %v1453
    %1560 = vmatpush1.msra.mxu0 %v1452
    %1561 = vmatprep.subr.mxu0 %v1457
    %1562 = vmatpush1.msra.mxu0 %v1456
    %1563 = vmatprep.subr.mxu0 %v1461
    %1564 = vmatpush1.msra.mxu0 %v1460
    %1565 = vmatprep.subr.mxu0 0.0
    %1566 = vmatpush1.msra.mxu0 0.0
    %1567 = vmatprep.subr.mxu0 0.0
    %1568 = vmatpush1.msra.mxu0 0.0
    %1569 = vmatprep.subr.mxu0 0.0
    %1570 = vmatpush1.msra.mxu0 0.0
    %1571 = vmatprep.subr.mxu0 0.0
    %1572 = vmatpush1.msra.mxu0 0.0
    %1573 = vmatprep.subr.mxu0 0.0
    %1574 = vmatpush1.msra.mxu0 0.0
    %1575 = vmatprep.subr.mxu0 0.0
    %1576 = vmatpush1.msra.mxu0 0.0
    %1577 = vmatprep.subr.mxu0 0.0
    %1578 = vmatpush1.msra.mxu0 0.0
    %1579 = vmatprep.subr.mxu0 0.0
    %1580 = vmatpush1.msra.mxu0 0.0
    %1581 = vmatprep.subr.mxu0 0.0
    %1582 = vmatpush1.msra.mxu0 0.0
    %1583 = vmatprep.subr.mxu0 0.0
    %1584 = vmatpush1.msra.mxu0 0.0
    %1585 = vmatprep.subr.mxu0 0.0
    %1586 = vmatpush1.msra.mxu0 0.0
    %1587 = vmatprep.subr.mxu0 0.0
    %1588 = vmatpush1.msra.mxu0 0.0
    %1589 = vmatprep.subr.mxu0 0.0
    %1590 = vmatpush1.msra.mxu0 0.0
    %1591 = vmatprep.subr.mxu0 0.0
    %1592 = vmatpush1.msra.mxu0 0.0
    %1593 = vmatprep.subr.mxu0 0.0
    %1594 = vmatpush1.msra.mxu0 0.0
    %1595 = vmatprep.subr.mxu0 0.0
    %1596 = vmatpush1.msra.mxu0 0.0
    %1597 = vmatprep.mubr.f32.mxu0 0.0
    %1598 = vmatmul.mubr.f32.gmra.mrb[0].mxu0 %v1397
    %v1599 = vpop.f32.mrb[0].mxu0
    %v1600 = vadd.f32 0.0, %v1599
    %v1601 = vpop.f32.mrb[0].mxu0
    %v1602 = vadd.f32 0.0, %v1601
    %1603 = vdwg.mxu0
    %v1604 = vadd.f32 %v1393, %v1529
    %v1605 = vadd.f32 %v1394, %v1531
    %v1606 = vadd.f32 %v1395, %v1600
    %v1607 = vadd.f32 %v1396, %v1602
    %v1608 = vxor.u32 %v1604, 2147483648
    %v1609 = vmul.f32 %v1608, 1.442695
    %v1610 = vpow.pop %v1609
    %v1611 = vadd.f32 %v1610, 1.0
    %v1612 = vrcp.pop %v1611
    %v1613 = vmul.f32 1.0, %v1612
    %v1614 = vxor.u32 %v1605, 2147483648
    %v1615 = vmul.f32 %v1614, 1.442695
    %v1616 = vpow.pop %v1615
    %v1617 = vadd.f32 %v1616, 1.0
    %v1618 = vrcp.pop %v1617
    %v1619 = vmul.f32 1.0, %v1618
    %v1620 = vxor.u32 %v1606, 2147483648
    %v1621 = vmul.f32 %v1620, 1.442695
    %v1622 = vpow.pop %v1621
    %v1623 = vadd.f32 %v1622, 1.0
    %v1624 = vrcp.pop %v1623
    %v1625 = vmul.f32 1.0, %v1624
    %v1626 = vtanh.pop %v1607
    %v1627 = vld [vmem:[#allocation4] sm:$0xff]
    %v1628 = vmul.f32 %v1627, %v1619
    %v1629 = vmul.f32 %v1613, %v1626
    %v1630 = vadd.f32 %v1628, %v1629
    %v1631 = vtanh.pop %v1630
    %v1632 = vmul.f32 %v1625, %v1631
    %vm1633 = vcmp.gt.s32.totalorder %v362, 4
    %v1634 = vsel %vm1633, 1, 0
    %1635 = vset.pattern.permute.xlu0 0
    %1636 = vperm.xlu0 %1635, %v1634
    %v1637 = vpop.permute.xlu0 %1636
    %vm1638 = vcmp.eq.s32.totalorder %v1637, 1
    %v1639 = vsel %vm1638, %v1632, %v1397
    %1640 = vst [vmem:[#allocation3] sm:$0xff] %v1639
    %v1641 = vld [vmem:[#allocation4] sm:$0xff]
    %v1642 = vsel %vm1638, %v1630, %v1641
    %1643 = vst [vmem:[#allocation4] sm:$0xff] %v1642
    %v1644 = vsel %vm1638, %v1632, 0.0
    %s1645 = scalar_lea.vmem [#allocation8], 32
    %1646 = vst [vmem:[%s1645] sm:$0xff] %v1644
    %s1647 = smul.u32 5, 4
    %s1648 = smul.addr %s1647, 8
    %s1649 = scalar_lea.vmem [#allocation2], %s1648
    %v1650 = vld [vmem:[%s1649] sm:$0xff]
    %v1651 = vld [vmem:[%s1649 + $0x8] sm:$0xff]
    %v1652 = vld [vmem:[%s1649 + $0x10] sm:$0xff]
    %v1653 = vld [vmem:[%s1649 + $0x18] sm:$0xff]
    %v1654 = vld [vmem:[#allocation3] sm:$0xff]
    %v1655 = vld [vmem:[#allocation5] sm:$0xff]
    %v1656 = vld [vmem:[#allocation5 + $0x8] sm:$0xff]
    %v1657 = vld [vmem:[#allocation5 + $0x10] sm:$0xff]
    %v1658 = vld [vmem:[#allocation5 + $0x18] sm:$0xff]
    %v1659 = vld [vmem:[#allocation5 + $0x20] sm:$0xff]
    %v1660 = vld [vmem:[#allocation5 + $0x28] sm:$0xff]
    %v1661 = vld [vmem:[#allocation5 + $0x30] sm:$0xff]
    %v1662 = vld [vmem:[#allocation5 + $0x38] sm:$0xff]
    %v1663 = vld [vmem:[#allocation5 + $0x40] sm:$0xff]
    %v1664 = vld [vmem:[#allocation5 + $0x48] sm:$0xff]
    %v1665 = vld [vmem:[#allocation5 + $0x50] sm:$0xff]
    %v1666 = vld [vmem:[#allocation5 + $0x58] sm:$0xff]
    %v1667 = vld [vmem:[#allocation5 + $0x60] sm:$0xff]
    %v1668 = vld [vmem:[#allocation5 + $0x68] sm:$0xff]
    %v1669 = vld [vmem:[#allocation5 + $0x70] sm:$0xff]
    %v1670 = vld [vmem:[#allocation5 + $0x78] sm:$0xff]
    %v1671 = vld [vmem:[#allocation5 + $0x80] sm:$0xff]
    %v1672 = vld [vmem:[#allocation5 + $0x88] sm:$0xff]
    %v1673 = vld [vmem:[#allocation5 + $0x90] sm:$0xff]
    %v1674 = vld [vmem:[#allocation5 + $0x98] sm:$0xff]
    %v1675 = vld [vmem:[#allocation5 + $0xa0] sm:$0xff]
    %v1676 = vld [vmem:[#allocation5 + $0xa8] sm:$0xff]
    %v1677 = vld [vmem:[#allocation5 + $0xb0] sm:$0xff]
    %v1678 = vld [vmem:[#allocation5 + $0xb8] sm:$0xff]
    %v1679 = vld [vmem:[#allocation5 + $0xc0] sm:$0xff]
    %v1680 = vld [vmem:[#allocation5 + $0xc8] sm:$0xff]
    %v1681 = vld [vmem:[#allocation5 + $0xd0] sm:$0xff]
    %v1682 = vld [vmem:[#allocation5 + $0xd8] sm:$0xff]
    %v1683 = vld [vmem:[#allocation5 + $0xe0] sm:$0xff]
    %v1684 = vld [vmem:[#allocation5 + $0xe8] sm:$0xff]
    %v1685 = vld [vmem:[#allocation5 + $0xf0] sm:$0xff]
    %v1686 = vld [vmem:[#allocation5 + $0xf8] sm:$0xff]
    %v1687 = vld [vmem:[#allocation5 + $0x100] sm:$0xff]
    %v1688 = vld [vmem:[#allocation5 + $0x108] sm:$0xff]
    %v1689 = vld [vmem:[#allocation5 + $0x110] sm:$0xff]
    %v1690 = vld [vmem:[#allocation5 + $0x118] sm:$0xff]
    %v1691 = vld [vmem:[#allocation5 + $0x120] sm:$0xff]
    %v1692 = vld [vmem:[#allocation5 + $0x128] sm:$0xff]
    %v1693 = vld [vmem:[#allocation5 + $0x130] sm:$0xff]
    %v1694 = vld [vmem:[#allocation5 + $0x138] sm:$0xff]
    %v1695 = vld [vmem:[#allocation5 + $0x140] sm:$0xff]
    %v1696 = vld [vmem:[#allocation5 + $0x148] sm:$0xff]
    %v1697 = vld [vmem:[#allocation5 + $0x150] sm:$0xff]
    %v1698 = vld [vmem:[#allocation5 + $0x158] sm:$0xff]
    %v1699 = vld [vmem:[#allocation5 + $0x160] sm:$0xff]
    %v1700 = vld [vmem:[#allocation5 + $0x168] sm:$0xff]
    %v1701 = vld [vmem:[#allocation5 + $0x170] sm:$0xff]
    %v1702 = vld [vmem:[#allocation5 + $0x178] sm:$0xff]
    %v1703 = vld [vmem:[#allocation5 + $0x180] sm:$0xff]
    %v1704 = vld [vmem:[#allocation5 + $0x188] sm:$0xff]
    %v1705 = vld [vmem:[#allocation5 + $0x190] sm:$0xff]
    %v1706 = vld [vmem:[#allocation5 + $0x198] sm:$0xff]
    %v1707 = vld [vmem:[#allocation5 + $0x1a0] sm:$0xff]
    %v1708 = vld [vmem:[#allocation5 + $0x1a8] sm:$0xff]
    %v1709 = vld [vmem:[#allocation5 + $0x1b0] sm:$0xff]
    %v1710 = vld [vmem:[#allocation5 + $0x1b8] sm:$0xff]
    %v1711 = vld [vmem:[#allocation5 + $0x1c0] sm:$0xff]
    %v1712 = vld [vmem:[#allocation5 + $0x1c8] sm:$0xff]
    %v1713 = vld [vmem:[#allocation5 + $0x1d0] sm:$0xff]
    %v1714 = vld [vmem:[#allocation5 + $0x1d8] sm:$0xff]
    %v1715 = vld [vmem:[#allocation5 + $0x1e0] sm:$0xff]
    %v1716 = vld [vmem:[#allocation5 + $0x1e8] sm:$0xff]
    %v1717 = vld [vmem:[#allocation5 + $0x1f0] sm:$0xff]
    %v1718 = vld [vmem:[#allocation5 + $0x1f8] sm:$0xff]
    %1719 = vmatprep.subr.mxu0 %v1656
    %1720 = vmatpush1.msra.mxu0 %v1655
    %1721 = vmatprep.subr.mxu0 %v1660
    %1722 = vmatpush1.msra.mxu0 %v1659
    %1723 = vmatprep.subr.mxu0 %v1664
    %1724 = vmatpush1.msra.mxu0 %v1663
    %1725 = vmatprep.subr.mxu0 %v1668
    %1726 = vmatpush1.msra.mxu0 %v1667
    %1727 = vmatprep.subr.mxu0 %v1672
    %1728 = vmatpush1.msra.mxu0 %v1671
    %1729 = vmatprep.subr.mxu0 %v1676
    %1730 = vmatpush1.msra.mxu0 %v1675
    %1731 = vmatprep.subr.mxu0 %v1680
    %1732 = vmatpush1.msra.mxu0 %v1679
    %1733 = vmatprep.subr.mxu0 %v1684
    %1734 = vmatpush1.msra.mxu0 %v1683
    %1735 = vmatprep.subr.mxu0 %v1688
    %1736 = vmatpush1.msra.mxu0 %v1687
    %1737 = vmatprep.subr.mxu0 %v1692
    %1738 = vmatpush1.msra.mxu0 %v1691
    %1739 = vmatprep.subr.mxu0 %v1696
    %1740 = vmatpush1.msra.mxu0 %v1695
    %1741 = vmatprep.subr.mxu0 %v1700
    %1742 = vmatpush1.msra.mxu0 %v1699
    %1743 = vmatprep.subr.mxu0 %v1704
    %1744 = vmatpush1.msra.mxu0 %v1703
    %1745 = vmatprep.subr.mxu0 %v1708
    %1746 = vmatpush1.msra.mxu0 %v1707
    %1747 = vmatprep.subr.mxu0 %v1712
    %1748 = vmatpush1.msra.mxu0 %v1711
    %1749 = vmatprep.subr.mxu0 %v1716
    %1750 = vmatpush1.msra.mxu0 %v1715
    %1751 = vmatprep.subr.mxu0 0.0
    %1752 = vmatpush1.msra.mxu0 0.0
    %1753 = vmatprep.subr.mxu0 0.0
    %1754 = vmatpush1.msra.mxu0 0.0
    %1755 = vmatprep.subr.mxu0 0.0
    %1756 = vmatpush1.msra.mxu0 0.0
    %1757 = vmatprep.subr.mxu0 0.0
    %1758 = vmatpush1.msra.mxu0 0.0
    %1759 = vmatprep.subr.mxu0 0.0
    %1760 = vmatpush1.msra.mxu0 0.0
    %1761 = vmatprep.subr.mxu0 0.0
    %1762 = vmatpush1.msra.mxu0 0.0
    %1763 = vmatprep.subr.mxu0 0.0
    %1764 = vmatpush1.msra.mxu0 0.0
    %1765 = vmatprep.subr.mxu0 0.0
    %1766 = vmatpush1.msra.mxu0 0.0
    %1767 = vmatprep.subr.mxu0 0.0
    %1768 = vmatpush1.msra.mxu0 0.0
    %1769 = vmatprep.subr.mxu0 0.0
    %1770 = vmatpush1.msra.mxu0 0.0
    %1771 = vmatprep.subr.mxu0 0.0
    %1772 = vmatpush1.msra.mxu0 0.0
    %1773 = vmatprep.subr.mxu0 0.0
    %1774 = vmatpush1.msra.mxu0 0.0
    %1775 = vmatprep.subr.mxu0 0.0
    %1776 = vmatpush1.msra.mxu0 0.0
    %1777 = vmatprep.subr.mxu0 0.0
    %1778 = vmatpush1.msra.mxu0 0.0
    %1779 = vmatprep.subr.mxu0 0.0
    %1780 = vmatpush1.msra.mxu0 0.0
    %1781 = vmatprep.subr.mxu0 0.0
    %1782 = vmatpush1.msra.mxu0 0.0
    %1783 = vmatprep.mubr.f32.mxu0 0.0
    %1784 = vmatmul.mubr.f32.gmra.mrb[0].mxu0 %v1654
    %v1785 = vpop.f32.mrb[0].mxu0
    %v1786 = vadd.f32 0.0, %v1785
    %v1787 = vpop.f32.mrb[0].mxu0
    %v1788 = vadd.f32 0.0, %v1787
    %1789 = vdwg.mxu0
    %1790 = vmatprep.subr.mxu0 %v1658
    %1791 = vmatpush1.msra.mxu0 %v1657
    %1792 = vmatprep.subr.mxu0 %v1662
    %1793 = vmatpush1.msra.mxu0 %v1661
    %1794 = vmatprep.subr.mxu0 %v1666
    %1795 = vmatpush1.msra.mxu0 %v1665
    %1796 = vmatprep.subr.mxu0 %v1670
    %1797 = vmatpush1.msra.mxu0 %v1669
    %1798 = vmatprep.subr.mxu0 %v1674
    %1799 = vmatpush1.msra.mxu0 %v1673
    %1800 = vmatprep.subr.mxu0 %v1678
    %1801 = vmatpush1.msra.mxu0 %v1677
    %1802 = vmatprep.subr.mxu0 %v1682
    %1803 = vmatpush1.msra.mxu0 %v1681
    %1804 = vmatprep.subr.mxu0 %v1686
    %1805 = vmatpush1.msra.mxu0 %v1685
    %1806 = vmatprep.subr.mxu0 %v1690
    %1807 = vmatpush1.msra.mxu0 %v1689
    %1808 = vmatprep.subr.mxu0 %v1694
    %1809 = vmatpush1.msra.mxu0 %v1693
    %1810 = vmatprep.subr.mxu0 %v1698
    %1811 = vmatpush1.msra.mxu0 %v1697
    %1812 = vmatprep.subr.mxu0 %v1702
    %1813 = vmatpush1.msra.mxu0 %v1701
    %1814 = vmatprep.subr.mxu0 %v1706
    %1815 = vmatpush1.msra.mxu0 %v1705
    %1816 = vmatprep.subr.mxu0 %v1710
    %1817 = vmatpush1.msra.mxu0 %v1709
    %1818 = vmatprep.subr.mxu0 %v1714
    %1819 = vmatpush1.msra.mxu0 %v1713
    %1820 = vmatprep.subr.mxu0 %v1718
    %1821 = vmatpush1.msra.mxu0 %v1717
    %1822 = vmatprep.subr.mxu0 0.0
    %1823 = vmatpush1.msra.mxu0 0.0
    %1824 = vmatprep.subr.mxu0 0.0
    %1825 = vmatpush1.msra.mxu0 0.0
    %1826 = vmatprep.subr.mxu0 0.0
    %1827 = vmatpush1.msra.mxu0 0.0
    %1828 = vmatprep.subr.mxu0 0.0
    %1829 = vmatpush1.msra.mxu0 0.0
    %1830 = vmatprep.subr.mxu0 0.0
    %1831 = vmatpush1.msra.mxu0 0.0
    %1832 = vmatprep.subr.mxu0 0.0
    %1833 = vmatpush1.msra.mxu0 0.0
    %1834 = vmatprep.subr.mxu0 0.0
    %1835 = vmatpush1.msra.mxu0 0.0
    %1836 = vmatprep.subr.mxu0 0.0
    %1837 = vmatpush1.msra.mxu0 0.0
    %1838 = vmatprep.subr.mxu0 0.0
    %1839 = vmatpush1.msra.mxu0 0.0
    %1840 = vmatprep.subr.mxu0 0.0
    %1841 = vmatpush1.msra.mxu0 0.0
    %1842 = vmatprep.subr.mxu0 0.0
    %1843 = vmatpush1.msra.mxu0 0.0
    %1844 = vmatprep.subr.mxu0 0.0
    %1845 = vmatpush1.msra.mxu0 0.0
    %1846 = vmatprep.subr.mxu0 0.0
    %1847 = vmatpush1.msra.mxu0 0.0
    %1848 = vmatprep.subr.mxu0 0.0
    %1849 = vmatpush1.msra.mxu0 0.0
    %1850 = vmatprep.subr.mxu0 0.0
    %1851 = vmatpush1.msra.mxu0 0.0
    %1852 = vmatprep.subr.mxu0 0.0
    %1853 = vmatpush1.msra.mxu0 0.0
    %1854 = vmatprep.mubr.f32.mxu0 0.0
    %1855 = vmatmul.mubr.f32.gmra.mrb[0].mxu0 %v1654
    %v1856 = vpop.f32.mrb[0].mxu0
    %v1857 = vadd.f32 0.0, %v1856
    %v1858 = vpop.f32.mrb[0].mxu0
    %v1859 = vadd.f32 0.0, %v1858
    %1860 = vdwg.mxu0
    %v1861 = vadd.f32 %v1650, %v1786
    %v1862 = vadd.f32 %v1651, %v1788
    %v1863 = vadd.f32 %v1652, %v1857
    %v1864 = vadd.f32 %v1653, %v1859
    %v1865 = vxor.u32 %v1861, 2147483648
    %v1866 = vmul.f32 %v1865, 1.442695
    %v1867 = vpow.pop %v1866
    %v1868 = vadd.f32 %v1867, 1.0
    %v1869 = vrcp.pop %v1868
    %v1870 = vmul.f32 1.0, %v1869
    %v1871 = vxor.u32 %v1862, 2147483648
    %v1872 = vmul.f32 %v1871, 1.442695
    %v1873 = vpow.pop %v1872
    %v1874 = vadd.f32 %v1873, 1.0
    %v1875 = vrcp.pop %v1874
    %v1876 = vmul.f32 1.0, %v1875
    %v1877 = vxor.u32 %v1863, 2147483648
    %v1878 = vmul.f32 %v1877, 1.442695
    %v1879 = vpow.pop %v1878
    %v1880 = vadd.f32 %v1879, 1.0
    %v1881 = vrcp.pop %v1880
    %v1882 = vmul.f32 1.0, %v1881
    %v1883 = vtanh.pop %v1864
    %v1884 = vld [vmem:[#allocation4] sm:$0xff]
    %v1885 = vmul.f32 %v1884, %v1876
    %v1886 = vmul.f32 %v1870, %v1883
    %v1887 = vadd.f32 %v1885, %v1886
    %v1888 = vtanh.pop %v1887
    %v1889 = vmul.f32 %v1882, %v1888
    %vm1890 = vcmp.gt.s32.totalorder %v362, 5
    %v1891 = vsel %vm1890, 1, 0
    %1892 = vset.pattern.permute.xlu0 0
    %1893 = vperm.xlu0 %1892, %v1891
    %v1894 = vpop.permute.xlu0 %1893
    %vm1895 = vcmp.eq.s32.totalorder %v1894, 1
    %v1896 = vsel %vm1895, %v1889, %v1654
    %1897 = vst [vmem:[#allocation3] sm:$0xff] %v1896
    %v1898 = vld [vmem:[#allocation4] sm:$0xff]
    %v1899 = vsel %vm1895, %v1887, %v1898
    %1900 = vst [vmem:[#allocation4] sm:$0xff] %v1899
    %v1901 = vsel %vm1895, %v1889, 0.0
    %s1902 = scalar_lea.vmem [#allocation8], 40
    %1903 = vst [vmem:[%s1902] sm:$0xff] %v1901
    %s1904 = smul.u32 6, 4
    %s1905 = smul.addr %s1904, 8
    %s1906 = scalar_lea.vmem [#allocation2], %s1905
    %v1907 = vld [vmem:[%s1906] sm:$0xff]
    %v1908 = vld [vmem:[%s1906 + $0x8] sm:$0xff]
    %v1909 = vld [vmem:[%s1906 + $0x10] sm:$0xff]
    %v1910 = vld [vmem:[%s1906 + $0x18] sm:$0xff]
    %v1911 = vld [vmem:[#allocation3] sm:$0xff]
    %v1912 = vld [vmem:[#allocation5] sm:$0xff]
    %v1913 = vld [vmem:[#allocation5 + $0x8] sm:$0xff]
    %v1914 = vld [vmem:[#allocation5 + $0x10] sm:$0xff]
    %v1915 = vld [vmem:[#allocation5 + $0x18] sm:$0xff]
    %v1916 = vld [vmem:[#allocation5 + $0x20] sm:$0xff]
    %v1917 = vld [vmem:[#allocation5 + $0x28] sm:$0xff]
    %v1918 = vld [vmem:[#allocation5 + $0x30] sm:$0xff]
    %v1919 = vld [vmem:[#allocation5 + $0x38] sm:$0xff]
    %v1920 = vld [vmem:[#allocation5 + $0x40] sm:$0xff]
    %v1921 = vld [vmem:[#allocation5 + $0x48] sm:$0xff]
    %v1922 = vld [vmem:[#allocation5 + $0x50] sm:$0xff]
    %v1923 = vld [vmem:[#allocation5 + $0x58] sm:$0xff]
    %v1924 = vld [vmem:[#allocation5 + $0x60] sm:$0xff]
    %v1925 = vld [vmem:[#allocation5 + $0x68] sm:$0xff]
    %v1926 = vld [vmem:[#allocation5 + $0x70] sm:$0xff]
    %v1927 = vld [vmem:[#allocation5 + $0x78] sm:$0xff]
    %v1928 = vld [vmem:[#allocation5 + $0x80] sm:$0xff]
    %v1929 = vld [vmem:[#allocation5 + $0x88] sm:$0xff]
    %v1930 = vld [vmem:[#allocation5 + $0x90] sm:$0xff]
    %v1931 = vld [vmem:[#allocation5 + $0x98] sm:$0xff]
    %v1932 = vld [vmem:[#allocation5 + $0xa0] sm:$0xff]
    %v1933 = vld [vmem:[#allocation5 + $0xa8] sm:$0xff]
    %v1934 = vld [vmem:[#allocation5 + $0xb0] sm:$0xff]
    %v1935 = vld [vmem:[#allocation5 + $0xb8] sm:$0xff]
    %v1936 = vld [vmem:[#allocation5 + $0xc0] sm:$0xff]
    %v1937 = vld [vmem:[#allocation5 + $0xc8] sm:$0xff]
    %v1938 = vld [vmem:[#allocation5 + $0xd0] sm:$0xff]
    %v1939 = vld [vmem:[#allocation5 + $0xd8] sm:$0xff]
    %v1940 = vld [vmem:[#allocation5 + $0xe0] sm:$0xff]
    %v1941 = vld [vmem:[#allocation5 + $0xe8] sm:$0xff]
    %v1942 = vld [vmem:[#allocation5 + $0xf0] sm:$0xff]
    %v1943 = vld [vmem:[#allocation5 + $0xf8] sm:$0xff]
    %v1944 = vld [vmem:[#allocation5 + $0x100] sm:$0xff]
    %v1945 = vld [vmem:[#allocation5 + $0x108] sm:$0xff]
    %v1946 = vld [vmem:[#allocation5 + $0x110] sm:$0xff]
    %v1947 = vld [vmem:[#allocation5 + $0x118] sm:$0xff]
    %v1948 = vld [vmem:[#allocation5 + $0x120] sm:$0xff]
    %v1949 = vld [vmem:[#allocation5 + $0x128] sm:$0xff]
    %v1950 = vld [vmem:[#allocation5 + $0x130] sm:$0xff]
    %v1951 = vld [vmem:[#allocation5 + $0x138] sm:$0xff]
    %v1952 = vld [vmem:[#allocation5 + $0x140] sm:$0xff]
    %v1953 = vld [vmem:[#allocation5 + $0x148] sm:$0xff]
    %v1954 = vld [vmem:[#allocation5 + $0x150] sm:$0xff]
    %v1955 = vld [vmem:[#allocation5 + $0x158] sm:$0xff]
    %v1956 = vld [vmem:[#allocation5 + $0x160] sm:$0xff]
    %v1957 = vld [vmem:[#allocation5 + $0x168] sm:$0xff]
    %v1958 = vld [vmem:[#allocation5 + $0x170] sm:$0xff]
    %v1959 = vld [vmem:[#allocation5 + $0x178] sm:$0xff]
    %v1960 = vld [vmem:[#allocation5 + $0x180] sm:$0xff]
    %v1961 = vld [vmem:[#allocation5 + $0x188] sm:$0xff]
    %v1962 = vld [vmem:[#allocation5 + $0x190] sm:$0xff]
    %v1963 = vld [vmem:[#allocation5 + $0x198] sm:$0xff]
    %v1964 = vld [vmem:[#allocation5 + $0x1a0] sm:$0xff]
    %v1965 = vld [vmem:[#allocation5 + $0x1a8] sm:$0xff]
    %v1966 = vld [vmem:[#allocation5 + $0x1b0] sm:$0xff]
    %v1967 = vld [vmem:[#allocation5 + $0x1b8] sm:$0xff]
    %v1968 = vld [vmem:[#allocation5 + $0x1c0] sm:$0xff]
    %v1969 = vld [vmem:[#allocation5 + $0x1c8] sm:$0xff]
    %v1970 = vld [vmem:[#allocation5 + $0x1d0] sm:$0xff]
    %v1971 = vld [vmem:[#allocation5 + $0x1d8] sm:$0xff]
    %v1972 = vld [vmem:[#allocation5 + $0x1e0] sm:$0xff]
    %v1973 = vld [vmem:[#allocation5 + $0x1e8] sm:$0xff]
    %v1974 = vld [vmem:[#allocation5 + $0x1f0] sm:$0xff]
    %v1975 = vld [vmem:[#allocation5 + $0x1f8] sm:$0xff]
    %1976 = vmatprep.subr.mxu0 %v1913
    %1977 = vmatpush1.msra.mxu0 %v1912
    %1978 = vmatprep.subr.mxu0 %v1917
    %1979 = vmatpush1.msra.mxu0 %v1916
    %1980 = vmatprep.subr.mxu0 %v1921
    %1981 = vmatpush1.msra.mxu0 %v1920
    %1982 = vmatprep.subr.mxu0 %v1925
    %1983 = vmatpush1.msra.mxu0 %v1924
    %1984 = vmatprep.subr.mxu0 %v1929
    %1985 = vmatpush1.msra.mxu0 %v1928
    %1986 = vmatprep.subr.mxu0 %v1933
    %1987 = vmatpush1.msra.mxu0 %v1932
    %1988 = vmatprep.subr.mxu0 %v1937
    %1989 = vmatpush1.msra.mxu0 %v1936
    %1990 = vmatprep.subr.mxu0 %v1941
    %1991 = vmatpush1.msra.mxu0 %v1940
    %1992 = vmatprep.subr.mxu0 %v1945
    %1993 = vmatpush1.msra.mxu0 %v1944
    %1994 = vmatprep.subr.mxu0 %v1949
    %1995 = vmatpush1.msra.mxu0 %v1948
    %1996 = vmatprep.subr.mxu0 %v1953
    %1997 = vmatpush1.msra.mxu0 %v1952
    %1998 = vmatprep.subr.mxu0 %v1957
    %1999 = vmatpush1.msra.mxu0 %v1956
    %2000 = vmatprep.subr.mxu0 %v1961
    %2001 = vmatpush1.msra.mxu0 %v1960
    %2002 = vmatprep.subr.mxu0 %v1965
    %2003 = vmatpush1.msra.mxu0 %v1964
    %2004 = vmatprep.subr.mxu0 %v1969
    %2005 = vmatpush1.msra.mxu0 %v1968
    %2006 = vmatprep.subr.mxu0 %v1973
    %2007 = vmatpush1.msra.mxu0 %v1972
    %2008 = vmatprep.subr.mxu0 0.0
    %2009 = vmatpush1.msra.mxu0 0.0
    %2010 = vmatprep.subr.mxu0 0.0
    %2011 = vmatpush1.msra.mxu0 0.0
    %2012 = vmatprep.subr.mxu0 0.0
    %2013 = vmatpush1.msra.mxu0 0.0
    %2014 = vmatprep.subr.mxu0 0.0
    %2015 = vmatpush1.msra.mxu0 0.0
    %2016 = vmatprep.subr.mxu0 0.0
    %2017 = vmatpush1.msra.mxu0 0.0
    %2018 = vmatprep.subr.mxu0 0.0
    %2019 = vmatpush1.msra.mxu0 0.0
    %2020 = vmatprep.subr.mxu0 0.0
    %2021 = vmatpush1.msra.mxu0 0.0
    %2022 = vmatprep.subr.mxu0 0.0
    %2023 = vmatpush1.msra.mxu0 0.0
    %2024 = vmatprep.subr.mxu0 0.0
    %2025 = vmatpush1.msra.mxu0 0.0
    %2026 = vmatprep.subr.mxu0 0.0
    %2027 = vmatpush1.msra.mxu0 0.0
    %2028 = vmatprep.subr.mxu0 0.0
    %2029 = vmatpush1.msra.mxu0 0.0
    %2030 = vmatprep.subr.mxu0 0.0
    %2031 = vmatpush1.msra.mxu0 0.0
    %2032 = vmatprep.subr.mxu0 0.0
    %2033 = vmatpush1.msra.mxu0 0.0
    %2034 = vmatprep.subr.mxu0 0.0
    %2035 = vmatpush1.msra.mxu0 0.0
    %2036 = vmatprep.subr.mxu0 0.0
    %2037 = vmatpush1.msra.mxu0 0.0
    %2038 = vmatprep.subr.mxu0 0.0
    %2039 = vmatpush1.msra.mxu0 0.0
    %2040 = vmatprep.mubr.f32.mxu0 0.0
    %2041 = vmatmul.mubr.f32.gmra.mrb[0].mxu0 %v1911
    %v2042 = vpop.f32.mrb[0].mxu0
    %v2043 = vadd.f32 0.0, %v2042
    %v2044 = vpop.f32.mrb[0].mxu0
    %v2045 = vadd.f32 0.0, %v2044
    %2046 = vdwg.mxu0
    %2047 = vmatprep.subr.mxu0 %v1915
    %2048 = vmatpush1.msra.mxu0 %v1914
    %2049 = vmatprep.subr.mxu0 %v1919
    %2050 = vmatpush1.msra.mxu0 %v1918
    %2051 = vmatprep.subr.mxu0 %v1923
    %2052 = vmatpush1.msra.mxu0 %v1922
    %2053 = vmatprep.subr.mxu0 %v1927
    %2054 = vmatpush1.msra.mxu0 %v1926
    %2055 = vmatprep.subr.mxu0 %v1931
    %2056 = vmatpush1.msra.mxu0 %v1930
    %2057 = vmatprep.subr.mxu0 %v1935
    %2058 = vmatpush1.msra.mxu0 %v1934
    %2059 = vmatprep.subr.mxu0 %v1939
    %2060 = vmatpush1.msra.mxu0 %v1938
    %2061 = vmatprep.subr.mxu0 %v1943
    %2062 = vmatpush1.msra.mxu0 %v1942
    %2063 = vmatprep.subr.mxu0 %v1947
    %2064 = vmatpush1.msra.mxu0 %v1946
    %2065 = vmatprep.subr.mxu0 %v1951
    %2066 = vmatpush1.msra.mxu0 %v1950
    %2067 = vmatprep.subr.mxu0 %v1955
    %2068 = vmatpush1.msra.mxu0 %v1954
    %2069 = vmatprep.subr.mxu0 %v1959
    %2070 = vmatpush1.msra.mxu0 %v1958
    %2071 = vmatprep.subr.mxu0 %v1963
    %2072 = vmatpush1.msra.mxu0 %v1962
    %2073 = vmatprep.subr.mxu0 %v1967
    %2074 = vmatpush1.msra.mxu0 %v1966
    %2075 = vmatprep.subr.mxu0 %v1971
    %2076 = vmatpush1.msra.mxu0 %v1970
    %2077 = vmatprep.subr.mxu0 %v1975
    %2078 = vmatpush1.msra.mxu0 %v1974
    %2079 = vmatprep.subr.mxu0 0.0
    %2080 = vmatpush1.msra.mxu0 0.0
    %2081 = vmatprep.subr.mxu0 0.0
    %2082 = vmatpush1.msra.mxu0 0.0
    %2083 = vmatprep.subr.mxu0 0.0
    %2084 = vmatpush1.msra.mxu0 0.0
    %2085 = vmatprep.subr.mxu0 0.0
    %2086 = vmatpush1.msra.mxu0 0.0
    %2087 = vmatprep.subr.mxu0 0.0
    %2088 = vmatpush1.msra.mxu0 0.0
    %2089 = vmatprep.subr.mxu0 0.0
    %2090 = vmatpush1.msra.mxu0 0.0
    %2091 = vmatprep.subr.mxu0 0.0
    %2092 = vmatpush1.msra.mxu0 0.0
    %2093 = vmatprep.subr.mxu0 0.0
    %2094 = vmatpush1.msra.mxu0 0.0
    %2095 = vmatprep.subr.mxu0 0.0
    %2096 = vmatpush1.msra.mxu0 0.0
    %2097 = vmatprep.subr.mxu0 0.0
    %2098 = vmatpush1.msra.mxu0 0.0
    %2099 = vmatprep.subr.mxu0 0.0
    %2100 = vmatpush1.msra.mxu0 0.0
    %2101 = vmatprep.subr.mxu0 0.0
    %2102 = vmatpush1.msra.mxu0 0.0
    %2103 = vmatprep.subr.mxu0 0.0
    %2104 = vmatpush1.msra.mxu0 0.0
    %2105 = vmatprep.subr.mxu0 0.0
    %2106 = vmatpush1.msra.mxu0 0.0
    %2107 = vmatprep.subr.mxu0 0.0
    %2108 = vmatpush1.msra.mxu0 0.0
    %2109 = vmatprep.subr.mxu0 0.0
    %2110 = vmatpush1.msra.mxu0 0.0
    %2111 = vmatprep.mubr.f32.mxu0 0.0
    %2112 = vmatmul.mubr.f32.gmra.mrb[0].mxu0 %v1911
    %v2113 = vpop.f32.mrb[0].mxu0
    %v2114 = vadd.f32 0.0, %v2113
    %v2115 = vpop.f32.mrb[0].mxu0
    %v2116 = vadd.f32 0.0, %v2115
    %2117 = vdwg.mxu0
    %v2118 = vadd.f32 %v1907, %v2043
    %v2119 = vadd.f32 %v1908, %v2045
    %v2120 = vadd.f32 %v1909, %v2114
    %v2121 = vadd.f32 %v1910, %v2116
    %v2122 = vxor.u32 %v2118, 2147483648
    %v2123 = vmul.f32 %v2122, 1.442695
    %v2124 = vpow.pop %v2123
    %v2125 = vadd.f32 %v2124, 1.0
    %v2126 = vrcp.pop %v2125
    %v2127 = vmul.f32 1.0, %v2126
    %v2128 = vxor.u32 %v2119, 2147483648
    %v2129 = vmul.f32 %v2128, 1.442695
    %v2130 = vpow.pop %v2129
    %v2131 = vadd.f32 %v2130, 1.0
    %v2132 = vrcp.pop %v2131
    %v2133 = vmul.f32 1.0, %v2132
    %v2134 = vxor.u32 %v2120, 2147483648
    %v2135 = vmul.f32 %v2134, 1.442695
    %v2136 = vpow.pop %v2135
    %v2137 = vadd.f32 %v2136, 1.0
    %v2138 = vrcp.pop %v2137
    %v2139 = vmul.f32 1.0, %v2138
    %v2140 = vtanh.pop %v2121
    %v2141 = vld [vmem:[#allocation4] sm:$0xff]
    %v2142 = vmul.f32 %v2141, %v2133
    %v2143 = vmul.f32 %v2127, %v2140
    %v2144 = vadd.f32 %v2142, %v2143
    %v2145 = vtanh.pop %v2144
    %v2146 = vmul.f32 %v2139, %v2145
    %vm2147 = vcmp.gt.s32.totalorder %v362, 6
    %v2148 = vsel %vm2147, 1, 0
    %2149 = vset.pattern.permute.xlu0 0
    %2150 = vperm.xlu0 %2149, %v2148
    %v2151 = vpop.permute.xlu0 %2150
    %vm2152 = vcmp.eq.s32.totalorder %v2151, 1
    %v2153 = vsel %vm2152, %v2146, %v1911
    %2154 = vst [vmem:[#allocation3] sm:$0xff] %v2153
    %v2155 = vld [vmem:[#allocation4] sm:$0xff]
    %v2156 = vsel %vm2152, %v2144, %v2155
    %2157 = vst [vmem:[#allocation4] sm:$0xff] %v2156
    %v2158 = vsel %vm2152, %v2146, 0.0
    %s2159 = scalar_lea.vmem [#allocation8], 48
    %2160 = vst [vmem:[%s2159] sm:$0xff] %v2158
    %s2161 = smul.u32 7, 4
    %s2162 = smul.addr %s2161, 8
    %s2163 = scalar_lea.vmem [#allocation2], %s2162
    %v2164 = vld [vmem:[%s2163] sm:$0xff]
    %v2165 = vld [vmem:[%s2163 + $0x8] sm:$0xff]
    %v2166 = vld [vmem:[%s2163 + $0x10] sm:$0xff]
    %v2167 = vld [vmem:[%s2163 + $0x18] sm:$0xff]
    %v2168 = vld [vmem:[#allocation3] sm:$0xff]
    %v2169 = vld [vmem:[#allocation5] sm:$0xff]
    %v2170 = vld [vmem:[#allocation5 + $0x8] sm:$0xff]
    %v2171 = vld [vmem:[#allocation5 + $0x10] sm:$0xff]
    %v2172 = vld [vmem:[#allocation5 + $0x18] sm:$0xff]
    %v2173 = vld [vmem:[#allocation5 + $0x20] sm:$0xff]
    %v2174 = vld [vmem:[#allocation5 + $0x28] sm:$0xff]
    %v2175 = vld [vmem:[#allocation5 + $0x30] sm:$0xff]
    %v2176 = vld [vmem:[#allocation5 + $0x38] sm:$0xff]
    %v2177 = vld [vmem:[#allocation5 + $0x40] sm:$0xff]
    %v2178 = vld [vmem:[#allocation5 + $0x48] sm:$0xff]
    %v2179 = vld [vmem:[#allocation5 + $0x50] sm:$0xff]
    %v2180 = vld [vmem:[#allocation5 + $0x58] sm:$0xff]
    %v2181 = vld [vmem:[#allocation5 + $0x60] sm:$0xff]
    %v2182 = vld [vmem:[#allocation5 + $0x68] sm:$0xff]
    %v2183 = vld [vmem:[#allocation5 + $0x70] sm:$0xff]
    %v2184 = vld [vmem:[#allocation5 + $0x78] sm:$0xff]
    %v2185 = vld [vmem:[#allocation5 + $0x80] sm:$0xff]
    %v2186 = vld [vmem:[#allocation5 + $0x88] sm:$0xff]
    %v2187 = vld [vmem:[#allocation5 + $0x90] sm:$0xff]
    %v2188 = vld [vmem:[#allocation5 + $0x98] sm:$0xff]
    %v2189 = vld [vmem:[#allocation5 + $0xa0] sm:$0xff]
    %v2190 = vld [vmem:[#allocation5 + $0xa8] sm:$0xff]
    %v2191 = vld [vmem:[#allocation5 + $0xb0] sm:$0xff]
    %v2192 = vld [vmem:[#allocation5 + $0xb8] sm:$0xff]
    %v2193 = vld [vmem:[#allocation5 + $0xc0] sm:$0xff]
    %v2194 = vld [vmem:[#allocation5 + $0xc8] sm:$0xff]
    %v2195 = vld [vmem:[#allocation5 + $0xd0] sm:$0xff]
    %v2196 = vld [vmem:[#allocation5 + $0xd8] sm:$0xff]
    %v2197 = vld [vmem:[#allocation5 + $0xe0] sm:$0xff]
    %v2198 = vld [vmem:[#allocation5 + $0xe8] sm:$0xff]
    %v2199 = vld [vmem:[#allocation5 + $0xf0] sm:$0xff]
    %v2200 = vld [vmem:[#allocation5 + $0xf8] sm:$0xff]
    %v2201 = vld [vmem:[#allocation5 + $0x100] sm:$0xff]
    %v2202 = vld [vmem:[#allocation5 + $0x108] sm:$0xff]
    %v2203 = vld [vmem:[#allocation5 + $0x110] sm:$0xff]
    %v2204 = vld [vmem:[#allocation5 + $0x118] sm:$0xff]
    %v2205 = vld [vmem:[#allocation5 + $0x120] sm:$0xff]
    %v2206 = vld [vmem:[#allocation5 + $0x128] sm:$0xff]
    %v2207 = vld [vmem:[#allocation5 + $0x130] sm:$0xff]
    %v2208 = vld [vmem:[#allocation5 + $0x138] sm:$0xff]
    %v2209 = vld [vmem:[#allocation5 + $0x140] sm:$0xff]
    %v2210 = vld [vmem:[#allocation5 + $0x148] sm:$0xff]
    %v2211 = vld [vmem:[#allocation5 + $0x150] sm:$0xff]
    %v2212 = vld [vmem:[#allocation5 + $0x158] sm:$0xff]
    %v2213 = vld [vmem:[#allocation5 + $0x160] sm:$0xff]
    %v2214 = vld [vmem:[#allocation5 + $0x168] sm:$0xff]
    %v2215 = vld [vmem:[#allocation5 + $0x170] sm:$0xff]
    %v2216 = vld [vmem:[#allocation5 + $0x178] sm:$0xff]
    %v2217 = vld [vmem:[#allocation5 + $0x180] sm:$0xff]
    %v2218 = vld [vmem:[#allocation5 + $0x188] sm:$0xff]
    %v2219 = vld [vmem:[#allocation5 + $0x190] sm:$0xff]
    %v2220 = vld [vmem:[#allocation5 + $0x198] sm:$0xff]
    %v2221 = vld [vmem:[#allocation5 + $0x1a0] sm:$0xff]
    %v2222 = vld [vmem:[#allocation5 + $0x1a8] sm:$0xff]
    %v2223 = vld [vmem:[#allocation5 + $0x1b0] sm:$0xff]
    %v2224 = vld [vmem:[#allocation5 + $0x1b8] sm:$0xff]
    %v2225 = vld [vmem:[#allocation5 + $0x1c0] sm:$0xff]
    %v2226 = vld [vmem:[#allocation5 + $0x1c8] sm:$0xff]
    %v2227 = vld [vmem:[#allocation5 + $0x1d0] sm:$0xff]
    %v2228 = vld [vmem:[#allocation5 + $0x1d8] sm:$0xff]
    %v2229 = vld [vmem:[#allocation5 + $0x1e0] sm:$0xff]
    %v2230 = vld [vmem:[#allocation5 + $0x1e8] sm:$0xff]
    %v2231 = vld [vmem:[#allocation5 + $0x1f0] sm:$0xff]
    %v2232 = vld [vmem:[#allocation5 + $0x1f8] sm:$0xff]
    %2233 = vmatprep.subr.mxu0 %v2170
    %2234 = vmatpush1.msra.mxu0 %v2169
    %2235 = vmatprep.subr.mxu0 %v2174
    %2236 = vmatpush1.msra.mxu0 %v2173
    %2237 = vmatprep.subr.mxu0 %v2178
    %2238 = vmatpush1.msra.mxu0 %v2177
    %2239 = vmatprep.subr.mxu0 %v2182
    %2240 = vmatpush1.msra.mxu0 %v2181
    %2241 = vmatprep.subr.mxu0 %v2186
    %2242 = vmatpush1.msra.mxu0 %v2185
    %2243 = vmatprep.subr.mxu0 %v2190
    %2244 = vmatpush1.msra.mxu0 %v2189
    %2245 = vmatprep.subr.mxu0 %v2194
    %2246 = vmatpush1.msra.mxu0 %v2193
    %2247 = vmatprep.subr.mxu0 %v2198
    %2248 = vmatpush1.msra.mxu0 %v2197
    %2249 = vmatprep.subr.mxu0 %v2202
    %2250 = vmatpush1.msra.mxu0 %v2201
    %2251 = vmatprep.subr.mxu0 %v2206
    %2252 = vmatpush1.msra.mxu0 %v2205
    %2253 = vmatprep.subr.mxu0 %v2210
    %2254 = vmatpush1.msra.mxu0 %v2209
    %2255 = vmatprep.subr.mxu0 %v2214
    %2256 = vmatpush1.msra.mxu0 %v2213
    %2257 = vmatprep.subr.mxu0 %v2218
    %2258 = vmatpush1.msra.mxu0 %v2217
    %2259 = vmatprep.subr.mxu0 %v2222
    %2260 = vmatpush1.msra.mxu0 %v2221
    %2261 = vmatprep.subr.mxu0 %v2226
    %2262 = vmatpush1.msra.mxu0 %v2225
    %2263 = vmatprep.subr.mxu0 %v2230
    %2264 = vmatpush1.msra.mxu0 %v2229
    %2265 = vmatprep.subr.mxu0 0.0
    %2266 = vmatpush1.msra.mxu0 0.0
    %2267 = vmatprep.subr.mxu0 0.0
    %2268 = vmatpush1.msra.mxu0 0.0
    %2269 = vmatprep.subr.mxu0 0.0
    %2270 = vmatpush1.msra.mxu0 0.0
    %2271 = vmatprep.subr.mxu0 0.0
    %2272 = vmatpush1.msra.mxu0 0.0
    %2273 = vmatprep.subr.mxu0 0.0
    %2274 = vmatpush1.msra.mxu0 0.0
    %2275 = vmatprep.subr.mxu0 0.0
    %2276 = vmatpush1.msra.mxu0 0.0
    %2277 = vmatprep.subr.mxu0 0.0
    %2278 = vmatpush1.msra.mxu0 0.0
    %2279 = vmatprep.subr.mxu0 0.0
    %2280 = vmatpush1.msra.mxu0 0.0
    %2281 = vmatprep.subr.mxu0 0.0
    %2282 = vmatpush1.msra.mxu0 0.0
    %2283 = vmatprep.subr.mxu0 0.0
    %2284 = vmatpush1.msra.mxu0 0.0
    %2285 = vmatprep.subr.mxu0 0.0
    %2286 = vmatpush1.msra.mxu0 0.0
    %2287 = vmatprep.subr.mxu0 0.0
    %2288 = vmatpush1.msra.mxu0 0.0
    %2289 = vmatprep.subr.mxu0 0.0
    %2290 = vmatpush1.msra.mxu0 0.0
    %2291 = vmatprep.subr.mxu0 0.0
    %2292 = vmatpush1.msra.mxu0 0.0
    %2293 = vmatprep.subr.mxu0 0.0
    %2294 = vmatpush1.msra.mxu0 0.0
    %2295 = vmatprep.subr.mxu0 0.0
    %2296 = vmatpush1.msra.mxu0 0.0
    %2297 = vmatprep.mubr.f32.mxu0 0.0
    %2298 = vmatmul.mubr.f32.gmra.mrb[0].mxu0 %v2168
    %v2299 = vpop.f32.mrb[0].mxu0
    %v2300 = vadd.f32 0.0, %v2299
    %v2301 = vpop.f32.mrb[0].mxu0
    %v2302 = vadd.f32 0.0, %v2301
    %2303 = vdwg.mxu0
    %2304 = vmatprep.subr.mxu0 %v2172
    %2305 = vmatpush1.msra.mxu0 %v2171
    %2306 = vmatprep.subr.mxu0 %v2176
    %2307 = vmatpush1.msra.mxu0 %v2175
    %2308 = vmatprep.subr.mxu0 %v2180
    %2309 = vmatpush1.msra.mxu0 %v2179
    %2310 = vmatprep.subr.mxu0 %v2184
    %2311 = vmatpush1.msra.mxu0 %v2183
    %2312 = vmatprep.subr.mxu0 %v2188
    %2313 = vmatpush1.msra.mxu0 %v2187
    %2314 = vmatprep.subr.mxu0 %v2192
    %2315 = vmatpush1.msra.mxu0 %v2191
    %2316 = vmatprep.subr.mxu0 %v2196
    %2317 = vmatpush1.msra.mxu0 %v2195
    %2318 = vmatprep.subr.mxu0 %v2200
    %2319 = vmatpush1.msra.mxu0 %v2199
    %2320 = vmatprep.subr.mxu0 %v2204
    %2321 = vmatpush1.msra.mxu0 %v2203
    %2322 = vmatprep.subr.mxu0 %v2208
    %2323 = vmatpush1.msra.mxu0 %v2207
    %2324 = vmatprep.subr.mxu0 %v2212
    %2325 = vmatpush1.msra.mxu0 %v2211
    %2326 = vmatprep.subr.mxu0 %v2216
    %2327 = vmatpush1.msra.mxu0 %v2215
    %2328 = vmatprep.subr.mxu0 %v2220
    %2329 = vmatpush1.msra.mxu0 %v2219
    %2330 = vmatprep.subr.mxu0 %v2224
    %2331 = vmatpush1.msra.mxu0 %v2223
    %2332 = vmatprep.subr.mxu0 %v2228
    %2333 = vmatpush1.msra.mxu0 %v2227
    %2334 = vmatprep.subr.mxu0 %v2232
    %2335 = vmatpush1.msra.mxu0 %v2231
    %2336 = vmatprep.subr.mxu0 0.0
    %2337 = vmatpush1.msra.mxu0 0.0
    %2338 = vmatprep.subr.mxu0 0.0
    %2339 = vmatpush1.msra.mxu0 0.0
    %2340 = vmatprep.subr.mxu0 0.0
    %2341 = vmatpush1.msra.mxu0 0.0
    %2342 = vmatprep.subr.mxu0 0.0
    %2343 = vmatpush1.msra.mxu0 0.0
    %2344 = vmatprep.subr.mxu0 0.0
    %2345 = vmatpush1.msra.mxu0 0.0
    %2346 = vmatprep.subr.mxu0 0.0
    %2347 = vmatpush1.msra.mxu0 0.0
    %2348 = vmatprep.subr.mxu0 0.0
    %2349 = vmatpush1.msra.mxu0 0.0
    %2350 = vmatprep.subr.mxu0 0.0
    %2351 = vmatpush1.msra.mxu0 0.0
    %2352 = vmatprep.subr.mxu0 0.0
    %2353 = vmatpush1.msra.mxu0 0.0
    %2354 = vmatprep.subr.mxu0 0.0
    %2355 = vmatpush1.msra.mxu0 0.0
    %2356 = vmatprep.subr.mxu0 0.0
    %2357 = vmatpush1.msra.mxu0 0.0
    %2358 = vmatprep.subr.mxu0 0.0
    %2359 = vmatpush1.msra.mxu0 0.0
    %2360 = vmatprep.subr.mxu0 0.0
    %2361 = vmatpush1.msra.mxu0 0.0
    %2362 = vmatprep.subr.mxu0 0.0
    %2363 = vmatpush1.msra.mxu0 0.0
    %2364 = vmatprep.subr.mxu0 0.0
    %2365 = vmatpush1.msra.mxu0 0.0
    %2366 = vmatprep.subr.mxu0 0.0
    %2367 = vmatpush1.msra.mxu0 0.0
    %2368 = vmatprep.mubr.f32.mxu0 0.0
    %2369 = vmatmul.mubr.f32.gmra.mrb[0].mxu0 %v2168
    %v2370 = vpop.f32.mrb[0].mxu0
    %v2371 = vadd.f32 0.0, %v2370
    %v2372 = vpop.f32.mrb[0].mxu0
    %v2373 = vadd.f32 0.0, %v2372
    %2374 = vdwg.mxu0
    %v2375 = vadd.f32 %v2164, %v2300
    %v2376 = vadd.f32 %v2165, %v2302
    %v2377 = vadd.f32 %v2166, %v2371
    %v2378 = vadd.f32 %v2167, %v2373
    %v2379 = vxor.u32 %v2375, 2147483648
    %v2380 = vmul.f32 %v2379, 1.442695
    %v2381 = vpow.pop %v2380
    %v2382 = vadd.f32 %v2381, 1.0
    %v2383 = vrcp.pop %v2382
    %v2384 = vmul.f32 1.0, %v2383
    %v2385 = vxor.u32 %v2376, 2147483648
    %v2386 = vmul.f32 %v2385, 1.442695
    %v2387 = vpow.pop %v2386
    %v2388 = vadd.f32 %v2387, 1.0
    %v2389 = vrcp.pop %v2388
    %v2390 = vmul.f32 1.0, %v2389
    %v2391 = vxor.u32 %v2377, 2147483648
    %v2392 = vmul.f32 %v2391, 1.442695
    %v2393 = vpow.pop %v2392
    %v2394 = vadd.f32 %v2393, 1.0
    %v2395 = vrcp.pop %v2394
    %v2396 = vmul.f32 1.0, %v2395
    %v2397 = vtanh.pop %v2378
    %v2398 = vld [vmem:[#allocation4] sm:$0xff]
    %v2399 = vmul.f32 %v2398, %v2390
    %v2400 = vmul.f32 %v2384, %v2397
    %v2401 = vadd.f32 %v2399, %v2400
    %v2402 = vtanh.pop %v2401
    %v2403 = vmul.f32 %v2396, %v2402
    %vm2404 = vcmp.gt.s32.totalorder %v362, 7
    %v2405 = vsel %vm2404, 1, 0
    %2406 = vset.pattern.permute.xlu0 0
    %2407 = vperm.xlu0 %2406, %v2405
    %v2408 = vpop.permute.xlu0 %2407
    %vm2409 = vcmp.eq.s32.totalorder %v2408, 1
    %v2410 = vsel %vm2409, %v2403, %v2168
    %2411 = vst [vmem:[#allocation3] sm:$0xff] %v2410
    %v2412 = vld [vmem:[#allocation4] sm:$0xff]
    %v2413 = vsel %vm2409, %v2401, %v2412
    %2414 = vst [vmem:[#allocation4] sm:$0xff] %v2413
    %v2415 = vsel %vm2409, %v2403, 0.0
    %s2416 = scalar_lea.vmem [#allocation8], 56
    %2417 = vst [vmem:[%s2416] sm:$0xff] %v2415
    %v2418 = vld [vmem:[#allocation3] sm:$0xff]
    %2419 = vst [vmem:[#allocation9] sm:$0xff] %v2418
    %v2420 = vld [vmem:[#allocation4] sm:$0xff]
    %2421 = vst [vmem:[#allocation11] sm:$0xff] %v2420
    // Predicated region
    $region26: #{tpu_custom_call.1} parent=1 // pred_check
      _
    $region27: #{tpu_custom_call.1} parent=1 // pred_check_branch
      %2423 = sbr.rel (0) target = $region29
    $region28: #{tpu_custom_call.1} parent=1 // pred_region
      %s2425 = ssub.s32 1024, 1024
      %2426 = vsyncadd [#allocation7], %s2425
      %s2427 = sshll.u32 [#allocation8], 4
      %s2428 = int_to_ptr.vmem [resolvable:$true] %s2427
      %2433 = dma.vmem_to_hbm [thread:$0]  %s2428, 1024, %s5, [#allocation7], 128, 128, 8
    $region29: #{tpu_custom_call.1} parent=1 // pred_fallthru
      _
    // Predicated region
    $region30: #{tpu_custom_call.1} parent=1 // pred_check
      _
    $region31: #{tpu_custom_call.1} parent=1 // pred_check_branch
      %2435 = sbr.rel (0) target = $region33
    $region32: #{tpu_custom_call.1} parent=1 // pred_region
      %s2437 = ssub.s32 128, 128
      %2438 = vsyncadd [#allocation10], %s2437
      %s2440 = sshll.u32 [#allocation9], 4
      %s2441 = int_to_ptr.vmem [resolvable:$true] %s2440
      %2443 = dma.vmem_to_hbm [thread:$0]  %s2441, 128, %s6, [#allocation10]
    $region33: #{tpu_custom_call.1} parent=1 // pred_fallthru
      _
    // Predicated region
    $region34: #{tpu_custom_call.1} parent=1 // pred_check
      _
    $region35: #{tpu_custom_call.1} parent=1 // pred_check_branch
      %2445 = sbr.rel (0) target = $region37
    $region36: #{tpu_custom_call.1} parent=1 // pred_region
      %s2447 = ssub.s32 128, 128
      %2448 = vsyncadd [#allocation10], %s2447
      %s2450 = sshll.u32 [#allocation11], 4
      %s2451 = int_to_ptr.vmem [resolvable:$true] %s2450
      %2453 = dma.vmem_to_hbm [thread:$0]  %s2451, 128, %s7, [#allocation10]
    $region37: #{tpu_custom_call.1} parent=1 // pred_fallthru
      _
    // Predicated region
    $region38: #{tpu_custom_call.1} parent=1 // pred_check
      _
    $region39: #{tpu_custom_call.1} parent=1 // pred_check_branch
      %2455 = sbr.rel (0) target = $region41
    $region40: #{tpu_custom_call.1} parent=1 // pred_region
      %2456 = dma.done [#allocation7], 1024
    $region41: #{tpu_custom_call.1} parent=1 // pred_fallthru
      _
    // Predicated region
    $region42: #{tpu_custom_call.1} parent=1 // pred_check
      _
    $region43: #{tpu_custom_call.1} parent=1 // pred_check_branch
      %2458 = sbr.rel (0) target = $region45
    $region44: #{tpu_custom_call.1} parent=1 // pred_region
      %2459 = dma.done [#allocation10], 128
    $region45: #{tpu_custom_call.1} parent=1 // pred_fallthru
      _
    // Predicated region
    $region46: #{tpu_custom_call.1} parent=1 // pred_check
      _
    $region47: #{tpu_custom_call.1} parent=1 // pred_check_branch
      %2461 = sbr.rel (0) target = $region49
    $region48: #{tpu_custom_call.1} parent=1 // pred_region
      %2462 = dma.done [#allocation10], 128
    $region49: #{tpu_custom_call.1} parent=1 // pred_fallthru
      _
    %2463 = vsyncpa [#allocation6], 1
    %2464 = vsyncpa [#allocation7], 1
    %2465 = vsyncpa [#allocation10], 1

</llo_original>
